<compile_context>
chip_gen: v7x
topology: tpu7x:2x2x1
jax: 0.10.0
libtpu: 0.0.40
codegen_flags: <defaults>
</compile_context>

<pallas_src>
import functools

import jax
import jax.numpy as jnp
from jax import lax
from jax.experimental import pallas as pl
from jax.experimental.pallas import tpu as pltpu


CFG = dict(
    img_size=28,
    patch_size=14,
    in_chans=3,
    hidden=32,
    depth=2,
    heads=4,
    mlp_hidden=128,   # 4 * hidden
    num_classes=1,
)

_LN_EPS = 1e-6  # DINOv2 uses LayerNorm(eps=1e-6)


# ----------------------------------------------------------------------------
# Single fused forward kernel (everything fits trivially in VMEM)
# ----------------------------------------------------------------------------

def _fused_dino_forward_kernel(
    # inputs ------------------------------------------------------------------
    patches_ref,            # (B*nP, K_pad)    flattened patches (K zero-padded)
    patch_w_ref,            # (K_pad, D)
    patch_b_ref,            # (1, D)
    cls_ref,                # (1, D)
    pos_ref,                # (N, D)
    attn_bias_ref,          # (B*N, B*N)  block-diagonal additive mask
    ln1_g_ref, ln1_b_ref,   # (depth, 1, D)
    qkv_w_ref,              # (depth, D, 3D)
    qkv_b_ref,              # (depth, 1, 3D)
    proj_w_ref,             # (depth, D, D)
    proj_b_ref,             # (depth, 1, D)
    ln2_g_ref, ln2_b_ref,   # (depth, 1, D)
    mlp_w1_ref,             # (depth, D, Dm)
    mlp_b1_ref,             # (depth, 1, Dm)
    mlp_w2_ref,             # (depth, Dm, D)
    mlp_b2_ref,             # (depth, 1, D)
    fin_g_ref, fin_b_ref,   # (1, D)
    fc_wt_ref,              # (num_classes, D)  fc weight, pre-transposed
    fc_b_ref,               # (1, num_classes)
    # outputs -----------------------------------------------------------------
    feat_ref,               # (B, D)
    logit_ref,              # (B, num_classes)
    # scratch -----------------------------------------------------------------
    tok_ref,                # VMEM (B*N, D) f32 -- token assembly buffer
    *, B, N, D, H, depth, eps):
  nP = N - 1
  hd = D // H
  scale = 1.0 / float(hd) ** 0.5

  def _ln(v, g, b):
    mu = jnp.mean(v, axis=-1, keepdims=True)
    var = jnp.mean(jnp.square(v - mu), axis=-1, keepdims=True)
    return (v - mu) * lax.rsqrt(var + eps) * g + b

  def _gelu(v):   # exact (erf) GELU == torch.nn.GELU default
    return 0.5 * v * (1.0 + lax.erf(v * (2.0 ** -0.5)))

  def _dot(a, b):
    return jnp.dot(a, b, preferred_element_type=jnp.float32)

  # ---- patch embedding for every image in one MXU pass ----------------------
  emb = _dot(patches_ref[...], patch_w_ref[...]) + patch_b_ref[...]  # (B*nP, D)
  cls_row = cls_ref[...] + pos_ref[0:1, :]                           # (1, D)
  pos_patch = pos_ref[1:N, :]                                        # (nP, D)

  # ---- token assembly: [CLS] + patch embeddings (+ pos) for all images ------
  for b in range(B):
    tok_ref[b * N:b * N + 1, :] = cls_row
    tok_ref[b * N + 1:(b + 1) * N, :] = emb[b * nP:(b + 1) * nP, :] + pos_patch
  x = tok_ref[...]                                                   # (B*N, D)

  attn_bias = attn_bias_ref[...]                                     # (BN, BN)

  # ---- transformer blocks (statically unrolled), all rows at once -----------
  for d in range(depth):
    h1 = _ln(x, ln1_g_ref[d], ln1_b_ref[d])
    qkv = _dot(h1, qkv_w_ref[d]) + qkv_b_ref[d]                      # (BN, 3D)
    pw = proj_w_ref[d]                                               # (D, D)

    # Multi-head self-attention across all images at once.  Cross-image score
    # entries are killed by the precomputed block-diagonal bias; each head's
    # output is folded straight through its slice of the projection matrix so
    # no head re-assembly / transpose / scatter is ever materialized.
    attn_proj = None
    for hh in range(H):
      c = hh * hd
      q = qkv[:, c:c + hd]                                           # (BN, hd)
      k = qkv[:, D + c:D + c + hd]
      v = qkv[:, 2 * D + c:2 * D + c + hd]
      s = lax.dot_general(q, k, (((1,), (1,)), ((), ())),
                          preferred_element_type=jnp.float32) * scale
      s = s + attn_bias                                              # (BN, BN)
      s = s - jnp.max(s, axis=-1, keepdims=True)
      p = jnp.exp(s)
      p = p * pl.reciprocal(jnp.sum(p, axis=-1, keepdims=True),
                            approx=False)
      o = _dot(p, v)                                                 # (BN, hd)
      contrib = _dot(o, pw[c:c + hd, :])                             # (BN, D)
      attn_proj = contrib if attn_proj is None else attn_proj + contrib

    x = x + attn_proj + proj_b_ref[d]                                # residual 1

    h2 = _ln(x, ln2_g_ref[d], ln2_b_ref[d])
    m = _gelu(_dot(h2, mlp_w1_ref[d]) + mlp_b1_ref[d])
    x = x + _dot(m, mlp_w2_ref[d]) + mlp_b2_ref[d]                   # residual 2

  # ---- final norm, CLS features, linear head ---------------------------------
  x = _ln(x, fin_g_ref[...], fin_b_ref[...])
  fc_wt = fc_wt_ref[...]
  fc_b = fc_b_ref[...]
  for b in range(B):
    cls_feat = x[b * N:b * N + 1, :]                                 # (1, D)
    feat_ref[b:b + 1, :] = cls_feat
    if fc_wt.shape[0] == 1:
      # num_classes == 1: lane reduction instead of a 1-wide matmul.
      logit_ref[b:b + 1, :] = (
          jnp.sum(cls_feat * fc_wt, axis=-1, keepdims=True) + fc_b)
    else:
      logit_ref[b:b + 1, :] = lax.dot_general(
          cls_feat, fc_wt, (((1,), (1,)), ((), ())),
          preferred_element_type=jnp.float32) + fc_b


# ----------------------------------------------------------------------------
# Wrapper: one pallas_call per forward
# ----------------------------------------------------------------------------

def _forward_pallas(x_nchw, params, cfg=CFG):
  B, C, Himg, Wimg = x_nchw.shape
  P, D, H = cfg["patch_size"], cfg["hidden"], cfg["heads"]
  depth, Cn = cfg["depth"], cfg["num_classes"]
  nH, nW = Himg // P, Wimg // P
  nP = nH * nW
  N = nP + 1
  BN = B * N
  K = P * P * C
  K_pad = ((K + 127) // 128) * 128   # align the patch-embed contraction dim

  # Patchify: pure layout glue on the input (the conv-as-matmul itself runs
  # inside the kernel).
  patches = x_nchw.reshape(B, C, nH, P, nW, P)
  patches = patches.transpose(0, 2, 4, 3, 5, 1).reshape(B * nP, K)
  patches = jnp.pad(patches, ((0, 0), (0, K_pad - K)))
  patch_w = jnp.pad(params["patch_w"], ((0, K_pad - K), (0, 0)))

  # Block-diagonal additive attention bias: 0 within an image, -1e30 across
  # images.  Built once, reused by every layer/head inside the kernel.
  row_img = jnp.arange(BN, dtype=jnp.int32) // N
  attn_bias = jnp.where(row_img[:, None] == row_img[None, :],
                        jnp.float32(0.0), jnp.float32(-1e30))

  inputs = (
      patches, patch_w, params["patch_b"],
      params["cls_token"], params["pos_embed"],
      attn_bias,
      params["ln1_g"], params["ln1_b"],
      params["qkv_w"], params["qkv_b"],
      params["proj_w"], params["proj_b"],
      params["ln2_g"], params["ln2_b"],
      params["mlp_w1"], params["mlp_b1"],
      params["mlp_w2"], params["mlp_b2"],
      params["final_ln_g"], params["final_ln_b"],
      params["fc_w"].T,                   # (num_classes, D): features on lanes
      params["fc_b"],
  )

  kernel = functools.partial(
      _fused_dino_forward_kernel,
      B=B, N=N, D=D, H=H, depth=depth, eps=_LN_EPS)

  feat, logits = pl.pallas_call(
      kernel,
      out_shape=(jax.ShapeDtypeStruct((B, D), jnp.float32),
                 jax.ShapeDtypeStruct((B, Cn), jnp.float32)),
      in_specs=[pl.BlockSpec(memory_space=pltpu.MemorySpace.VMEM)
                for _ in inputs],
      out_specs=(pl.BlockSpec(memory_space=pltpu.MemorySpace.VMEM),
                 pl.BlockSpec(memory_space=pltpu.MemorySpace.VMEM)),
      scratch_shapes=[pltpu.VMEM((BN, D), jnp.float32)],
      compiler_params=pltpu.CompilerParams(
          vmem_limit_bytes=32 * 1024 * 1024),
  )(*inputs)
  return feat, logits


@functools.partial(jax.jit, static_argnames=("return_feature",))
def dino_forward(x_nchw, params, return_feature=False):
  """Equivalent of DinoModel.forward(x, return_feature)."""
  feat, logits = _forward_pallas(x_nchw, params)
  return feat if return_feature else logits


# ----------------------------------------------------------------------------
# Deterministic synthetic parameters (scaled-down DINOv2-style ViT)
# ----------------------------------------------------------------------------

def init_params(key, cfg=CFG, dtype=jnp.float32):
  D = cfg["hidden"]
  P = cfg["patch_size"]
  C = cfg["in_chans"]
  depth = cfg["depth"]
  Dm = cfg["mlp_hidden"]
  Cn = cfg["num_classes"]
  nP = (cfg["img_size"] // P) ** 2
  N = nP + 1

  def nrm(k, shape, scale=0.02):
    return (scale * jax.random.normal(k, shape)).astype(dtype)

  ks = iter(jax.random.split(key, 16))
  return {
      "patch_w": nrm(next(ks), (P * P * C, D)),
      "patch_b": jnp.zeros((1, D), dtype),
      "cls_token": nrm(next(ks), (1, D)),
      "pos_embed": nrm(next(ks), (N, D)),
      "ln1_g": jnp.ones((depth, 1, D), dtype),
      "ln1_b": jnp.zeros((depth, 1, D), dtype),
      "qkv_w": nrm(next(ks), (depth, D, 3 * D)),
      "qkv_b": jnp.zeros((depth, 1, 3 * D), dtype),
      "proj_w": nrm(next(ks), (depth, D, D)),
      "proj_b": jnp.zeros((depth, 1, D), dtype),
      "ln2_g": jnp.ones((depth, 1, D), dtype),
      "ln2_b": jnp.zeros((depth, 1, D), dtype),
      "mlp_w1": nrm(next(ks), (depth, D, Dm)),
      "mlp_b1": jnp.zeros((depth, 1, Dm), dtype),
      "mlp_w2": nrm(next(ks), (depth, Dm, D)),
      "mlp_b2": jnp.zeros((depth, 1, D), dtype),
      "final_ln_g": jnp.ones((1, D), dtype),
      "final_ln_b": jnp.zeros((1, D), dtype),
      "fc_w": nrm(next(ks), (D, Cn)),
      "fc_b": jnp.zeros((1, Cn), dtype),
  }


# ----------------------------------------------------------------------------
# Pure-XLA reference (same math) used only for the in-script correctness check
# ----------------------------------------------------------------------------

def _reference_forward(x_nchw, params, cfg=CFG):
  B, C, Himg, Wimg = x_nchw.shape
  P, D, H = cfg["patch_size"], cfg["hidden"], cfg["heads"]
  hd = D // H
  nH, nW = Himg // P, Wimg // P
  nP = nH * nW
  N = nP + 1

  patches = x_nchw.reshape(B, C, nH, P, nW, P)
  patches = patches.transpose(0, 2, 4, 3, 5, 1).reshape(B, nP, P * P * C)
  tok = patches @ params["patch_w"] + params["patch_b"]            # (B, nP, D)
  cls = jnp.broadcast_to(params["cls_token"][None], (B, 1, D))
  tok = jnp.concatenate([cls, tok], axis=1) + params["pos_embed"][None]

  def ln(v, g, b):
    mu = v.mean(-1, keepdims=True)
    var = jnp.square(v - mu).mean(-1, keepdims=True)
    return (v - mu) * lax.rsqrt(var + _LN_EPS) * g + b

  for d in range(cfg["depth"]):
    h = ln(tok, params["ln1_g"][d], params["ln1_b"][d])
    qkv = h @ params["qkv_w"][d] + params["qkv_b"][d]              # (B, N, 3D)
    qkv = qkv.reshape(B, N, 3, H, hd).transpose(2, 0, 3, 1, 4)     # (3,B,H,N,hd)
    q, k, v = qkv[0], qkv[1], qkv[2]
    s = jnp.einsum("bhqd,bhkd->bhqk", q, k) / (hd ** 0.5)
    p = jax.nn.softmax(s, axis=-1)
    o = jnp.einsum("bhqk,bhkd->bhqd", p, v)
    o = o.transpose(0, 2, 1, 3).reshape(B, N, D)
    tok = tok + o @ params["proj_w"][d] + params["proj_b"][d]
    h2 = ln(tok, params["ln2_g"][d], params["ln2_b"][d])
    m = h2 @ params["mlp_w1"][d] + params["mlp_b1"][d]
    m = 0.5 * m * (1.0 + lax.erf(m * (2.0 ** -0.5)))
    tok = tok + m @ params["mlp_w2"][d] + params["mlp_b2"][d]

  tok = ln(tok, params["final_ln_g"], params["final_ln_b"])
  feat = tok[:, 0, :]
  logits = feat @ params["fc_w"] + params["fc_b"]
  return feat, logits


if __name__ == "__main__":
  key = jax.random.PRNGKey(0)
  k_param, k_x = jax.random.split(key)
  params = init_params(k_param)

  B = 2
  x = jax.random.normal(
      k_x, (B, CFG["in_chans"], CFG["img_size"], CFG["img_size"]), jnp.float32)

  logits = dino_forward(x, params)                          # (B, 1)
  feats = dino_forward(x, params, return_feature=True)      # (B, 32)
  jax.block_until_ready(logits)
  jax.block_until_ready(feats)

  assert logits.shape == (B, CFG["num_classes"])
  assert feats.shape == (B, CFG["hidden"])

  # Correctness check against a pure-XLA reference of the same math.
  feat_ref, logit_ref = _reference_forward(x, params)
  assert jnp.allclose(feats, feat_ref, rtol=1e-3, atol=1e-3), (
      float(jnp.max(jnp.abs(feats - feat_ref))))
  assert jnp.allclose(logits, logit_ref, rtol=1e-3, atol=1e-3), (
      float(jnp.max(jnp.abs(logits - logit_ref))))

  print("KERNEL_OK")
</pallas_src>

<mosaic_0001>
module attributes {stable_mosaic.version = 11 : i64} {
  func.func @_fused_dino_forward_kernel(%arg0: memref<8x640xf32, #tpu.memory_space<vmem>>, %arg1: memref<640x32xf32, #tpu.memory_space<vmem>>, %arg2: memref<1x32xf32, #tpu.memory_space<vmem>>, %arg3: memref<1x32xf32, #tpu.memory_space<vmem>>, %arg4: memref<5x32xf32, #tpu.memory_space<vmem>>, %arg5: memref<10x10xf32, #tpu.memory_space<vmem>>, %arg6: memref<2x1x32xf32, #tpu.memory_space<vmem>>, %arg7: memref<2x1x32xf32, #tpu.memory_space<vmem>>, %arg8: memref<2x32x96xf32, #tpu.memory_space<vmem>>, %arg9: memref<2x1x96xf32, #tpu.memory_space<vmem>>, %arg10: memref<2x32x32xf32, #tpu.memory_space<vmem>>, %arg11: memref<2x1x32xf32, #tpu.memory_space<vmem>>, %arg12: memref<2x1x32xf32, #tpu.memory_space<vmem>>, %arg13: memref<2x1x32xf32, #tpu.memory_space<vmem>>, %arg14: memref<2x32x128xf32, #tpu.memory_space<vmem>>, %arg15: memref<2x1x128xf32, #tpu.memory_space<vmem>>, %arg16: memref<2x128x32xf32, #tpu.memory_space<vmem>>, %arg17: memref<2x1x32xf32, #tpu.memory_space<vmem>>, %arg18: memref<1x32xf32, #tpu.memory_space<vmem>>, %arg19: memref<1x32xf32, #tpu.memory_space<vmem>>, %arg20: memref<1x32xf32, #tpu.memory_space<vmem>>, %arg21: memref<1x1xf32, #tpu.memory_space<vmem>>, %arg22: memref<2x32xf32, #tpu.memory_space<vmem>>, %arg23: memref<2x1xf32, #tpu.memory_space<vmem>>, %arg24: memref<10x32xf32, #tpu.memory_space<vmem>>) attributes {dimension_semantics = [], scalar_prefetch = 0 : i64, scratch_operands = 1 : i64, tpu.core_type = #tpu.core_type<tc>} {
    %c0 = arith.constant 0 : index
    %c0_0 = arith.constant 0 : index
    %0 = vector.load %arg0[%c0, %c0_0] : memref<8x640xf32, #tpu.memory_space<vmem>>, vector<8x640xf32>
    %c0_1 = arith.constant 0 : index
    %c0_2 = arith.constant 0 : index
    %1 = vector.load %arg1[%c0_1, %c0_2] : memref<640x32xf32, #tpu.memory_space<vmem>>, vector<640x32xf32>
    %cst = arith.constant dense<0.000000e+00> : vector<8x32xf32>
    %2 = tpu.matmul %0, %1, %cst {dimension_numbers = #tpu.dot_dimension_numbers<[1], [0], [0], [1], [0, 0, 1, 1], [], []>} : vector<8x640xf32>, vector<640x32xf32>, vector<8x32xf32> -> vector<8x32xf32>
    %c0_3 = arith.constant 0 : index
    %c0_4 = arith.constant 0 : index
    %3 = vector.load %arg2[%c0_3, %c0_4] : memref<1x32xf32, #tpu.memory_space<vmem>>, vector<1x32xf32>
    %4 = vector.broadcast %3 : vector<1x32xf32> to vector<8x32xf32>
    %5 = arith.addf %2, %4 : vector<8x32xf32>
    %c0_5 = arith.constant 0 : index
    %c0_6 = arith.constant 0 : index
    %6 = vector.load %arg3[%c0_5, %c0_6] : memref<1x32xf32, #tpu.memory_space<vmem>>, vector<1x32xf32>
    %c0_7 = arith.constant 0 : index
    %c0_8 = arith.constant 0 : index
    %7 = vector.load %arg4[%c0_7, %c0_8] : memref<5x32xf32, #tpu.memory_space<vmem>>, vector<1x32xf32>
    %8 = arith.addf %6, %7 : vector<1x32xf32>
    %c1 = arith.constant 1 : index
    %c0_9 = arith.constant 0 : index
    %9 = vector.load %arg4[%c1, %c0_9] : memref<5x32xf32, #tpu.memory_space<vmem>>, vector<4x32xf32>
    %c0_10 = arith.constant 0 : index
    %c0_11 = arith.constant 0 : index
    %10 = vector.load %arg24[%c0_10, %c0_11] : memref<10x32xf32, #tpu.memory_space<vmem>>, vector<1x32xf32>
    tpu.vector_store %arg24[%c0_10, %c0_11], %8 {strides = array<i32>} : memref<10x32xf32, #tpu.memory_space<vmem>>, vector<1x32xf32>,
    %11 = vector.extract_strided_slice %5 {offsets = [0, 0], sizes = [4, 32], strides = [1, 1]} : vector<8x32xf32> to vector<4x32xf32>
    %12 = arith.addf %11, %9 : vector<4x32xf32>
    %c1_12 = arith.constant 1 : index
    %c0_13 = arith.constant 0 : index
    %13 = vector.load %arg24[%c1_12, %c0_13] : memref<10x32xf32, #tpu.memory_space<vmem>>, vector<4x32xf32>
    tpu.vector_store %arg24[%c1_12, %c0_13], %12 {strides = array<i32>} : memref<10x32xf32, #tpu.memory_space<vmem>>, vector<4x32xf32>,
    %c5 = arith.constant 5 : index
    %c0_14 = arith.constant 0 : index
    %14 = vector.load %arg24[%c5, %c0_14] : memref<10x32xf32, #tpu.memory_space<vmem>>, vector<1x32xf32>
    tpu.vector_store %arg24[%c5, %c0_14], %8 {strides = array<i32>} : memref<10x32xf32, #tpu.memory_space<vmem>>, vector<1x32xf32>,
    %15 = vector.extract_strided_slice %5 {offsets = [4, 0], sizes = [4, 32], strides = [1, 1]} : vector<8x32xf32> to vector<4x32xf32>
    %16 = arith.addf %15, %9 : vector<4x32xf32>
    %c6 = arith.constant 6 : index
    %c0_15 = arith.constant 0 : index
    %17 = vector.load %arg24[%c6, %c0_15] : memref<10x32xf32, #tpu.memory_space<vmem>>, vector<4x32xf32>
    tpu.vector_store %arg24[%c6, %c0_15], %16 {strides = array<i32>} : memref<10x32xf32, #tpu.memory_space<vmem>>, vector<4x32xf32>,
    %c0_16 = arith.constant 0 : index
    %c0_17 = arith.constant 0 : index
    %18 = vector.load %arg24[%c0_16, %c0_17] : memref<10x32xf32, #tpu.memory_space<vmem>>, vector<10x32xf32>
    %c0_18 = arith.constant 0 : index
    %c0_19 = arith.constant 0 : index
    %19 = vector.load %arg5[%c0_18, %c0_19] : memref<10x10xf32, #tpu.memory_space<vmem>>, vector<10x10xf32>
    %c0_20 = arith.constant 0 : index
    %c0_21 = arith.constant 0 : index
    %c0_22 = arith.constant 0 : index
    %20 = vector.load %arg6[%c0_20, %c0_21, %c0_22] : memref<2x1x32xf32, #tpu.memory_space<vmem>>, vector<1x1x32xf32>
    %21 = vector.shape_cast %20 : vector<1x1x32xf32> to vector<1x32xf32>
    %c0_23 = arith.constant 0 : index
    %c0_24 = arith.constant 0 : index
    %c0_25 = arith.constant 0 : index
    %22 = vector.load %arg7[%c0_23, %c0_24, %c0_25] : memref<2x1x32xf32, #tpu.memory_space<vmem>>, vector<1x1x32xf32>
    %23 = vector.shape_cast %22 : vector<1x1x32xf32> to vector<1x32xf32>
    %cst_26 = arith.constant dense<0.000000e+00> : vector<10xf32>
    %24 = vector.multi_reduction <add>, %18, %cst_26 [1] : vector<10x32xf32> to vector<10xf32>
    %25 = vector.shape_cast %24 : vector<10xf32> to vector<10x1xf32>
    %cst_27 = arith.constant 3.200000e+01 : f32
    %26 = vector.broadcast %cst_27 : f32 to vector<10x1xf32>
    %27 = arith.divf %25, %26 : vector<10x1xf32>
    %28 = vector.broadcast %27 : vector<10x1xf32> to vector<10x32xf32>
    %29 = arith.subf %18, %28 : vector<10x32xf32>
    %30 = arith.mulf %29, %29 : vector<10x32xf32>
    %cst_28 = arith.constant dense<0.000000e+00> : vector<10xf32>
    %31 = vector.multi_reduction <add>, %30, %cst_28 [1] : vector<10x32xf32> to vector<10xf32>
    %32 = vector.shape_cast %31 : vector<10xf32> to vector<10x1xf32>
    %cst_29 = arith.constant 3.200000e+01 : f32
    %33 = vector.broadcast %cst_29 : f32 to vector<10x1xf32>
    %34 = arith.divf %32, %33 : vector<10x1xf32>
    %35 = vector.broadcast %27 : vector<10x1xf32> to vector<10x32xf32>
    %36 = arith.subf %18, %35 : vector<10x32xf32>
    %cst_30 = arith.constant 9.99999997E-7 : f32
    %37 = vector.broadcast %cst_30 : f32 to vector<10x1xf32>
    %38 = arith.addf %34, %37 : vector<10x1xf32>
    %39 = math.rsqrt %38 : vector<10x1xf32>
    %40 = vector.broadcast %39 : vector<10x1xf32> to vector<10x32xf32>
    %41 = arith.mulf %36, %40 : vector<10x32xf32>
    %42 = vector.broadcast %21 : vector<1x32xf32> to vector<10x32xf32>
    %43 = arith.mulf %41, %42 : vector<10x32xf32>
    %44 = vector.broadcast %23 : vector<1x32xf32> to vector<10x32xf32>
    %45 = arith.addf %43, %44 : vector<10x32xf32>
    %c0_31 = arith.constant 0 : index
    %c0_32 = arith.constant 0 : index
    %c0_33 = arith.constant 0 : index
    %46 = vector.load %arg8[%c0_31, %c0_32, %c0_33] : memref<2x32x96xf32, #tpu.memory_space<vmem>>, vector<1x32x96xf32>
    %47 = vector.shape_cast %46 : vector<1x32x96xf32> to vector<32x96xf32>
    %cst_34 = arith.constant dense<0.000000e+00> : vector<10x96xf32>
    %48 = tpu.matmul %45, %47, %cst_34 {dimension_numbers = #tpu.dot_dimension_numbers<[1], [0], [0], [1], [0, 0, 1, 1], [], []>} : vector<10x32xf32>, vector<32x96xf32>, vector<10x96xf32> -> vector<10x96xf32>
    %c0_35 = arith.constant 0 : index
    %c0_36 = arith.constant 0 : index
    %c0_37 = arith.constant 0 : index
    %49 = vector.load %arg9[%c0_35, %c0_36, %c0_37] : memref<2x1x96xf32, #tpu.memory_space<vmem>>, vector<1x1x96xf32>
    %50 = vector.shape_cast %49 : vector<1x1x96xf32> to vector<1x96xf32>
    %51 = vector.broadcast %50 : vector<1x96xf32> to vector<10x96xf32>
    %52 = arith.addf %48, %51 : vector<10x96xf32>
    %c0_38 = arith.constant 0 : index
    %c0_39 = arith.constant 0 : index
    %c0_40 = arith.constant 0 : index
    %53 = vector.load %arg10[%c0_38, %c0_39, %c0_40] : memref<2x32x32xf32, #tpu.memory_space<vmem>>, vector<1x32x32xf32>
    %54 = vector.shape_cast %53 : vector<1x32x32xf32> to vector<32x32xf32>
    %55 = vector.extract_strided_slice %52 {offsets = [0, 0], sizes = [10, 8], strides = [1, 1]} : vector<10x96xf32> to vector<10x8xf32>
    %56 = vector.extract_strided_slice %52 {offsets = [0, 32], sizes = [10, 8], strides = [1, 1]} : vector<10x96xf32> to vector<10x8xf32>
    %57 = vector.extract_strided_slice %52 {offsets = [0, 64], sizes = [10, 8], strides = [1, 1]} : vector<10x96xf32> to vector<10x8xf32>
    %cst_41 = arith.constant dense<0.000000e+00> : vector<10x10xf32>
    %58 = tpu.matmul %55, %56, %cst_41 {dimension_numbers = #tpu.dot_dimension_numbers<[1], [1], [0], [0], [0, 0, 1, 0], [], []>} : vector<10x8xf32>, vector<10x8xf32>, vector<10x10xf32> -> vector<10x10xf32>
    %cst_42 = arith.constant 0.353553385 : f32
    %59 = vector.broadcast %cst_42 : f32 to vector<10x10xf32>
    %60 = arith.mulf %58, %59 : vector<10x10xf32>
    %61 = arith.addf %60, %19 : vector<10x10xf32>
    %cst_43 = arith.constant dense<0xFF800000> : vector<10xf32>
    %62 = vector.multi_reduction <maximumf>, %61, %cst_43 [1] : vector<10x10xf32> to vector<10xf32>
    %63 = vector.shape_cast %62 : vector<10xf32> to vector<10x1xf32>
    %64 = vector.broadcast %63 : vector<10x1xf32> to vector<10x10xf32>
    %65 = arith.subf %61, %64 : vector<10x10xf32>
    %66 = math.exp %65 : vector<10x10xf32>
    %cst_44 = arith.constant dense<0.000000e+00> : vector<10xf32>
    %67 = vector.multi_reduction <add>, %66, %cst_44 [1] : vector<10x10xf32> to vector<10xf32>
    %68 = vector.shape_cast %67 : vector<10xf32> to vector<10x1xf32>
    %69 = tpu.reciprocal %68 : vector<10x1xf32> -> vector<10x1xf32>
    %70 = vector.broadcast %69 : vector<10x1xf32> to vector<10x10xf32>
    %71 = arith.mulf %66, %70 : vector<10x10xf32>
    %cst_45 = arith.constant dense<0.000000e+00> : vector<10x8xf32>
    %72 = tpu.matmul %71, %57, %cst_45 {dimension_numbers = #tpu.dot_dimension_numbers<[1], [0], [0], [1], [0, 0, 1, 1], [], []>} : vector<10x10xf32>, vector<10x8xf32>, vector<10x8xf32> -> vector<10x8xf32>
    %73 = vector.extract_strided_slice %54 {offsets = [0, 0], sizes = [8, 32], strides = [1, 1]} : vector<32x32xf32> to vector<8x32xf32>
    %cst_46 = arith.constant dense<0.000000e+00> : vector<10x32xf32>
    %74 = tpu.matmul %72, %73, %cst_46 {dimension_numbers = #tpu.dot_dimension_numbers<[1], [0], [0], [1], [0, 0, 1, 1], [], []>} : vector<10x8xf32>, vector<8x32xf32>, vector<10x32xf32> -> vector<10x32xf32>
    %75 = vector.extract_strided_slice %52 {offsets = [0, 8], sizes = [10, 8], strides = [1, 1]} : vector<10x96xf32> to vector<10x8xf32>
    %76 = vector.extract_strided_slice %52 {offsets = [0, 40], sizes = [10, 8], strides = [1, 1]} : vector<10x96xf32> to vector<10x8xf32>
    %77 = vector.extract_strided_slice %52 {offsets = [0, 72], sizes = [10, 8], strides = [1, 1]} : vector<10x96xf32> to vector<10x8xf32>
    %cst_47 = arith.constant dense<0.000000e+00> : vector<10x10xf32>
    %78 = tpu.matmul %75, %76, %cst_47 {dimension_numbers = #tpu.dot_dimension_numbers<[1], [1], [0], [0], [0, 0, 1, 0], [], []>} : vector<10x8xf32>, vector<10x8xf32>, vector<10x10xf32> -> vector<10x10xf32>
    %cst_48 = arith.constant 0.353553385 : f32
    %79 = vector.broadcast %cst_48 : f32 to vector<10x10xf32>
    %80 = arith.mulf %78, %79 : vector<10x10xf32>
    %81 = arith.addf %80, %19 : vector<10x10xf32>
    %cst_49 = arith.constant dense<0xFF800000> : vector<10xf32>
    %82 = vector.multi_reduction <maximumf>, %81, %cst_49 [1] : vector<10x10xf32> to vector<10xf32>
    %83 = vector.shape_cast %82 : vector<10xf32> to vector<10x1xf32>
    %84 = vector.broadcast %83 : vector<10x1xf32> to vector<10x10xf32>
    %85 = arith.subf %81, %84 : vector<10x10xf32>
    %86 = math.exp %85 : vector<10x10xf32>
    %cst_50 = arith.constant dense<0.000000e+00> : vector<10xf32>
    %87 = vector.multi_reduction <add>, %86, %cst_50 [1] : vector<10x10xf32> to vector<10xf32>
    %88 = vector.shape_cast %87 : vector<10xf32> to vector<10x1xf32>
    %89 = tpu.reciprocal %88 : vector<10x1xf32> -> vector<10x1xf32>
    %90 = vector.broadcast %89 : vector<10x1xf32> to vector<10x10xf32>
    %91 = arith.mulf %86, %90 : vector<10x10xf32>
    %cst_51 = arith.constant dense<0.000000e+00> : vector<10x8xf32>
    %92 = tpu.matmul %91, %77, %cst_51 {dimension_numbers = #tpu.dot_dimension_numbers<[1], [0], [0], [1], [0, 0, 1, 1], [], []>} : vector<10x10xf32>, vector<10x8xf32>, vector<10x8xf32> -> vector<10x8xf32>
    %93 = vector.extract_strided_slice %54 {offsets = [8, 0], sizes = [8, 32], strides = [1, 1]} : vector<32x32xf32> to vector<8x32xf32>
    %cst_52 = arith.constant dense<0.000000e+00> : vector<10x32xf32>
    %94 = tpu.matmul %92, %93, %cst_52 {dimension_numbers = #tpu.dot_dimension_numbers<[1], [0], [0], [1], [0, 0, 1, 1], [], []>} : vector<10x8xf32>, vector<8x32xf32>, vector<10x32xf32> -> vector<10x32xf32>
    %95 = arith.addf %74, %94 : vector<10x32xf32>
    %96 = vector.extract_strided_slice %52 {offsets = [0, 16], sizes = [10, 8], strides = [1, 1]} : vector<10x96xf32> to vector<10x8xf32>
    %97 = vector.extract_strided_slice %52 {offsets = [0, 48], sizes = [10, 8], strides = [1, 1]} : vector<10x96xf32> to vector<10x8xf32>
    %98 = vector.extract_strided_slice %52 {offsets = [0, 80], sizes = [10, 8], strides = [1, 1]} : vector<10x96xf32> to vector<10x8xf32>
    %cst_53 = arith.constant dense<0.000000e+00> : vector<10x10xf32>
    %99 = tpu.matmul %96, %97, %cst_53 {dimension_numbers = #tpu.dot_dimension_numbers<[1], [1], [0], [0], [0, 0, 1, 0], [], []>} : vector<10x8xf32>, vector<10x8xf32>, vector<10x10xf32> -> vector<10x10xf32>
    %cst_54 = arith.constant 0.353553385 : f32
    %100 = vector.broadcast %cst_54 : f32 to vector<10x10xf32>
    %101 = arith.mulf %99, %100 : vector<10x10xf32>
    %102 = arith.addf %101, %19 : vector<10x10xf32>
    %cst_55 = arith.constant dense<0xFF800000> : vector<10xf32>
    %103 = vector.multi_reduction <maximumf>, %102, %cst_55 [1] : vector<10x10xf32> to vector<10xf32>
    %104 = vector.shape_cast %103 : vector<10xf32> to vector<10x1xf32>
    %105 = vector.broadcast %104 : vector<10x1xf32> to vector<10x10xf32>
    %106 = arith.subf %102, %105 : vector<10x10xf32>
    %107 = math.exp %106 : vector<10x10xf32>
    %cst_56 = arith.constant dense<0.000000e+00> : vector<10xf32>
    %108 = vector.multi_reduction <add>, %107, %cst_56 [1] : vector<10x10xf32> to vector<10xf32>
    %109 = vector.shape_cast %108 : vector<10xf32> to vector<10x1xf32>
    %110 = tpu.reciprocal %109 : vector<10x1xf32> -> vector<10x1xf32>
    %111 = vector.broadcast %110 : vector<10x1xf32> to vector<10x10xf32>
    %112 = arith.mulf %107, %111 : vector<10x10xf32>
    %cst_57 = arith.constant dense<0.000000e+00> : vector<10x8xf32>
    %113 = tpu.matmul %112, %98, %cst_57 {dimension_numbers = #tpu.dot_dimension_numbers<[1], [0], [0], [1], [0, 0, 1, 1], [], []>} : vector<10x10xf32>, vector<10x8xf32>, vector<10x8xf32> -> vector<10x8xf32>
    %114 = vector.extract_strided_slice %54 {offsets = [16, 0], sizes = [8, 32], strides = [1, 1]} : vector<32x32xf32> to vector<8x32xf32>
    %cst_58 = arith.constant dense<0.000000e+00> : vector<10x32xf32>
    %115 = tpu.matmul %113, %114, %cst_58 {dimension_numbers = #tpu.dot_dimension_numbers<[1], [0], [0], [1], [0, 0, 1, 1], [], []>} : vector<10x8xf32>, vector<8x32xf32>, vector<10x32xf32> -> vector<10x32xf32>
    %116 = arith.addf %95, %115 : vector<10x32xf32>
    %117 = vector.extract_strided_slice %52 {offsets = [0, 24], sizes = [10, 8], strides = [1, 1]} : vector<10x96xf32> to vector<10x8xf32>
    %118 = vector.extract_strided_slice %52 {offsets = [0, 56], sizes = [10, 8], strides = [1, 1]} : vector<10x96xf32> to vector<10x8xf32>
    %119 = vector.extract_strided_slice %52 {offsets = [0, 88], sizes = [10, 8], strides = [1, 1]} : vector<10x96xf32> to vector<10x8xf32>
    %cst_59 = arith.constant dense<0.000000e+00> : vector<10x10xf32>
    %120 = tpu.matmul %117, %118, %cst_59 {dimension_numbers = #tpu.dot_dimension_numbers<[1], [1], [0], [0], [0, 0, 1, 0], [], []>} : vector<10x8xf32>, vector<10x8xf32>, vector<10x10xf32> -> vector<10x10xf32>
    %cst_60 = arith.constant 0.353553385 : f32
    %121 = vector.broadcast %cst_60 : f32 to vector<10x10xf32>
    %122 = arith.mulf %120, %121 : vector<10x10xf32>
    %123 = arith.addf %122, %19 : vector<10x10xf32>
    %cst_61 = arith.constant dense<0xFF800000> : vector<10xf32>
    %124 = vector.multi_reduction <maximumf>, %123, %cst_61 [1] : vector<10x10xf32> to vector<10xf32>
    %125 = vector.shape_cast %124 : vector<10xf32> to vector<10x1xf32>
    %126 = vector.broadcast %125 : vector<10x1xf32> to vector<10x10xf32>
    %127 = arith.subf %123, %126 : vector<10x10xf32>
    %128 = math.exp %127 : vector<10x10xf32>
    %cst_62 = arith.constant dense<0.000000e+00> : vector<10xf32>
    %129 = vector.multi_reduction <add>, %128, %cst_62 [1] : vector<10x10xf32> to vector<10xf32>
    %130 = vector.shape_cast %129 : vector<10xf32> to vector<10x1xf32>
    %131 = tpu.reciprocal %130 : vector<10x1xf32> -> vector<10x1xf32>
    %132 = vector.broadcast %131 : vector<10x1xf32> to vector<10x10xf32>
    %133 = arith.mulf %128, %132 : vector<10x10xf32>
    %cst_63 = arith.constant dense<0.000000e+00> : vector<10x8xf32>
    %134 = tpu.matmul %133, %119, %cst_63 {dimension_numbers = #tpu.dot_dimension_numbers<[1], [0], [0], [1], [0, 0, 1, 1], [], []>} : vector<10x10xf32>, vector<10x8xf32>, vector<10x8xf32> -> vector<10x8xf32>
    %135 = vector.extract_strided_slice %54 {offsets = [24, 0], sizes = [8, 32], strides = [1, 1]} : vector<32x32xf32> to vector<8x32xf32>
    %cst_64 = arith.constant dense<0.000000e+00> : vector<10x32xf32>
    %136 = tpu.matmul %134, %135, %cst_64 {dimension_numbers = #tpu.dot_dimension_numbers<[1], [0], [0], [1], [0, 0, 1, 1], [], []>} : vector<10x8xf32>, vector<8x32xf32>, vector<10x32xf32> -> vector<10x32xf32>
    %137 = arith.addf %116, %136 : vector<10x32xf32>
    %138 = arith.addf %18, %137 : vector<10x32xf32>
    %c0_65 = arith.constant 0 : index
    %c0_66 = arith.constant 0 : index
    %c0_67 = arith.constant 0 : index
    %139 = vector.load %arg11[%c0_65, %c0_66, %c0_67] : memref<2x1x32xf32, #tpu.memory_space<vmem>>, vector<1x1x32xf32>
    %140 = vector.shape_cast %139 : vector<1x1x32xf32> to vector<1x32xf32>
    %141 = vector.broadcast %140 : vector<1x32xf32> to vector<10x32xf32>
    %142 = arith.addf %138, %141 : vector<10x32xf32>
    %c0_68 = arith.constant 0 : index
    %c0_69 = arith.constant 0 : index
    %c0_70 = arith.constant 0 : index
    %143 = vector.load %arg12[%c0_68, %c0_69, %c0_70] : memref<2x1x32xf32, #tpu.memory_space<vmem>>, vector<1x1x32xf32>
    %144 = vector.shape_cast %143 : vector<1x1x32xf32> to vector<1x32xf32>
    %c0_71 = arith.constant 0 : index
    %c0_72 = arith.constant 0 : index
    %c0_73 = arith.constant 0 : index
    %145 = vector.load %arg13[%c0_71, %c0_72, %c0_73] : memref<2x1x32xf32, #tpu.memory_space<vmem>>, vector<1x1x32xf32>
    %146 = vector.shape_cast %145 : vector<1x1x32xf32> to vector<1x32xf32>
    %cst_74 = arith.constant dense<0.000000e+00> : vector<10xf32>
    %147 = vector.multi_reduction <add>, %142, %cst_74 [1] : vector<10x32xf32> to vector<10xf32>
    %148 = vector.shape_cast %147 : vector<10xf32> to vector<10x1xf32>
    %cst_75 = arith.constant 3.200000e+01 : f32
    %149 = vector.broadcast %cst_75 : f32 to vector<10x1xf32>
    %150 = arith.divf %148, %149 : vector<10x1xf32>
    %151 = vector.broadcast %150 : vector<10x1xf32> to vector<10x32xf32>
    %152 = arith.subf %142, %151 : vector<10x32xf32>
    %153 = arith.mulf %152, %152 : vector<10x32xf32>
    %cst_76 = arith.constant dense<0.000000e+00> : vector<10xf32>
    %154 = vector.multi_reduction <add>, %153, %cst_76 [1] : vector<10x32xf32> to vector<10xf32>
    %155 = vector.shape_cast %154 : vector<10xf32> to vector<10x1xf32>
    %cst_77 = arith.constant 3.200000e+01 : f32
    %156 = vector.broadcast %cst_77 : f32 to vector<10x1xf32>
    %157 = arith.divf %155, %156 : vector<10x1xf32>
    %158 = vector.broadcast %150 : vector<10x1xf32> to vector<10x32xf32>
    %159 = arith.subf %142, %158 : vector<10x32xf32>
    %cst_78 = arith.constant 9.99999997E-7 : f32
    %160 = vector.broadcast %cst_78 : f32 to vector<10x1xf32>
    %161 = arith.addf %157, %160 : vector<10x1xf32>
    %162 = math.rsqrt %161 : vector<10x1xf32>
    %163 = vector.broadcast %162 : vector<10x1xf32> to vector<10x32xf32>
    %164 = arith.mulf %159, %163 : vector<10x32xf32>
    %165 = vector.broadcast %144 : vector<1x32xf32> to vector<10x32xf32>
    %166 = arith.mulf %164, %165 : vector<10x32xf32>
    %167 = vector.broadcast %146 : vector<1x32xf32> to vector<10x32xf32>
    %168 = arith.addf %166, %167 : vector<10x32xf32>
    %c0_79 = arith.constant 0 : index
    %c0_80 = arith.constant 0 : index
    %c0_81 = arith.constant 0 : index
    %169 = vector.load %arg14[%c0_79, %c0_80, %c0_81] : memref<2x32x128xf32, #tpu.memory_space<vmem>>, vector<1x32x128xf32>
    %170 = vector.shape_cast %169 : vector<1x32x128xf32> to vector<32x128xf32>
    %cst_82 = arith.constant dense<0.000000e+00> : vector<10x128xf32>
    %171 = tpu.matmul %168, %170, %cst_82 {dimension_numbers = #tpu.dot_dimension_numbers<[1], [0], [0], [1], [0, 0, 1, 1], [], []>} : vector<10x32xf32>, vector<32x128xf32>, vector<10x128xf32> -> vector<10x128xf32>
    %c0_83 = arith.constant 0 : index
    %c0_84 = arith.constant 0 : index
    %c0_85 = arith.constant 0 : index
    %172 = vector.load %arg15[%c0_83, %c0_84, %c0_85] : memref<2x1x128xf32, #tpu.memory_space<vmem>>, vector<1x1x128xf32>
    %173 = vector.shape_cast %172 : vector<1x1x128xf32> to vector<1x128xf32>
    %174 = vector.broadcast %173 : vector<1x128xf32> to vector<10x128xf32>
    %175 = arith.addf %171, %174 : vector<10x128xf32>
    %cst_86 = arith.constant 5.000000e-01 : f32
    %176 = vector.broadcast %cst_86 : f32 to vector<10x128xf32>
    %177 = arith.mulf %176, %175 : vector<10x128xf32>
    %cst_87 = arith.constant 0.707106769 : f32
    %178 = vector.broadcast %cst_87 : f32 to vector<10x128xf32>
    %179 = arith.mulf %175, %178 : vector<10x128xf32>
    %180 = math.erf %179 : vector<10x128xf32>
    %cst_88 = arith.constant 1.000000e+00 : f32
    %181 = vector.broadcast %cst_88 : f32 to vector<10x128xf32>
    %182 = arith.addf %181, %180 : vector<10x128xf32>
    %183 = arith.mulf %177, %182 : vector<10x128xf32>
    %c0_89 = arith.constant 0 : index
    %c0_90 = arith.constant 0 : index
    %c0_91 = arith.constant 0 : index
    %184 = vector.load %arg16[%c0_89, %c0_90, %c0_91] : memref<2x128x32xf32, #tpu.memory_space<vmem>>, vector<1x128x32xf32>
    %185 = vector.shape_cast %184 : vector<1x128x32xf32> to vector<128x32xf32>
    %cst_92 = arith.constant dense<0.000000e+00> : vector<10x32xf32>
    %186 = tpu.matmul %183, %185, %cst_92 {dimension_numbers = #tpu.dot_dimension_numbers<[1], [0], [0], [1], [0, 0, 1, 1], [], []>} : vector<10x128xf32>, vector<128x32xf32>, vector<10x32xf32> -> vector<10x32xf32>
    %187 = arith.addf %142, %186 : vector<10x32xf32>
    %c0_93 = arith.constant 0 : index
    %c0_94 = arith.constant 0 : index
    %c0_95 = arith.constant 0 : index
    %188 = vector.load %arg17[%c0_93, %c0_94, %c0_95] : memref<2x1x32xf32, #tpu.memory_space<vmem>>, vector<1x1x32xf32>
    %189 = vector.shape_cast %188 : vector<1x1x32xf32> to vector<1x32xf32>
    %190 = vector.broadcast %189 : vector<1x32xf32> to vector<10x32xf32>
    %191 = arith.addf %187, %190 : vector<10x32xf32>
    %c1_96 = arith.constant 1 : index
    %c0_97 = arith.constant 0 : index
    %c0_98 = arith.constant 0 : index
    %192 = vector.load %arg6[%c1_96, %c0_97, %c0_98] : memref<2x1x32xf32, #tpu.memory_space<vmem>>, vector<1x1x32xf32>
    %193 = vector.shape_cast %192 : vector<1x1x32xf32> to vector<1x32xf32>
    %c1_99 = arith.constant 1 : index
    %c0_100 = arith.constant 0 : index
    %c0_101 = arith.constant 0 : index
    %194 = vector.load %arg7[%c1_99, %c0_100, %c0_101] : memref<2x1x32xf32, #tpu.memory_space<vmem>>, vector<1x1x32xf32>
    %195 = vector.shape_cast %194 : vector<1x1x32xf32> to vector<1x32xf32>
    %cst_102 = arith.constant dense<0.000000e+00> : vector<10xf32>
    %196 = vector.multi_reduction <add>, %191, %cst_102 [1] : vector<10x32xf32> to vector<10xf32>
    %197 = vector.shape_cast %196 : vector<10xf32> to vector<10x1xf32>
    %cst_103 = arith.constant 3.200000e+01 : f32
    %198 = vector.broadcast %cst_103 : f32 to vector<10x1xf32>
    %199 = arith.divf %197, %198 : vector<10x1xf32>
    %200 = vector.broadcast %199 : vector<10x1xf32> to vector<10x32xf32>
    %201 = arith.subf %191, %200 : vector<10x32xf32>
    %202 = arith.mulf %201, %201 : vector<10x32xf32>
    %cst_104 = arith.constant dense<0.000000e+00> : vector<10xf32>
    %203 = vector.multi_reduction <add>, %202, %cst_104 [1] : vector<10x32xf32> to vector<10xf32>
    %204 = vector.shape_cast %203 : vector<10xf32> to vector<10x1xf32>
    %cst_105 = arith.constant 3.200000e+01 : f32
    %205 = vector.broadcast %cst_105 : f32 to vector<10x1xf32>
    %206 = arith.divf %204, %205 : vector<10x1xf32>
    %207 = vector.broadcast %199 : vector<10x1xf32> to vector<10x32xf32>
    %208 = arith.subf %191, %207 : vector<10x32xf32>
    %cst_106 = arith.constant 9.99999997E-7 : f32
    %209 = vector.broadcast %cst_106 : f32 to vector<10x1xf32>
    %210 = arith.addf %206, %209 : vector<10x1xf32>
    %211 = math.rsqrt %210 : vector<10x1xf32>
    %212 = vector.broadcast %211 : vector<10x1xf32> to vector<10x32xf32>
    %213 = arith.mulf %208, %212 : vector<10x32xf32>
    %214 = vector.broadcast %193 : vector<1x32xf32> to vector<10x32xf32>
    %215 = arith.mulf %213, %214 : vector<10x32xf32>
    %216 = vector.broadcast %195 : vector<1x32xf32> to vector<10x32xf32>
    %217 = arith.addf %215, %216 : vector<10x32xf32>
    %c1_107 = arith.constant 1 : index
    %c0_108 = arith.constant 0 : index
    %c0_109 = arith.constant 0 : index
    %218 = vector.load %arg8[%c1_107, %c0_108, %c0_109] : memref<2x32x96xf32, #tpu.memory_space<vmem>>, vector<1x32x96xf32>
    %219 = vector.shape_cast %218 : vector<1x32x96xf32> to vector<32x96xf32>
    %cst_110 = arith.constant dense<0.000000e+00> : vector<10x96xf32>
    %220 = tpu.matmul %217, %219, %cst_110 {dimension_numbers = #tpu.dot_dimension_numbers<[1], [0], [0], [1], [0, 0, 1, 1], [], []>} : vector<10x32xf32>, vector<32x96xf32>, vector<10x96xf32> -> vector<10x96xf32>
    %c1_111 = arith.constant 1 : index
    %c0_112 = arith.constant 0 : index
    %c0_113 = arith.constant 0 : index
    %221 = vector.load %arg9[%c1_111, %c0_112, %c0_113] : memref<2x1x96xf32, #tpu.memory_space<vmem>>, vector<1x1x96xf32>
    %222 = vector.shape_cast %221 : vector<1x1x96xf32> to vector<1x96xf32>
    %223 = vector.broadcast %222 : vector<1x96xf32> to vector<10x96xf32>
    %224 = arith.addf %220, %223 : vector<10x96xf32>
    %c1_114 = arith.constant 1 : index
    %c0_115 = arith.constant 0 : index
    %c0_116 = arith.constant 0 : index
    %225 = vector.load %arg10[%c1_114, %c0_115, %c0_116] : memref<2x32x32xf32, #tpu.memory_space<vmem>>, vector<1x32x32xf32>
    %226 = vector.shape_cast %225 : vector<1x32x32xf32> to vector<32x32xf32>
    %227 = vector.extract_strided_slice %224 {offsets = [0, 0], sizes = [10, 8], strides = [1, 1]} : vector<10x96xf32> to vector<10x8xf32>
    %228 = vector.extract_strided_slice %224 {offsets = [0, 32], sizes = [10, 8], strides = [1, 1]} : vector<10x96xf32> to vector<10x8xf32>
    %229 = vector.extract_strided_slice %224 {offsets = [0, 64], sizes = [10, 8], strides = [1, 1]} : vector<10x96xf32> to vector<10x8xf32>
    %cst_117 = arith.constant dense<0.000000e+00> : vector<10x10xf32>
    %230 = tpu.matmul %227, %228, %cst_117 {dimension_numbers = #tpu.dot_dimension_numbers<[1], [1], [0], [0], [0, 0, 1, 0], [], []>} : vector<10x8xf32>, vector<10x8xf32>, vector<10x10xf32> -> vector<10x10xf32>
    %cst_118 = arith.constant 0.353553385 : f32
    %231 = vector.broadcast %cst_118 : f32 to vector<10x10xf32>
    %232 = arith.mulf %230, %231 : vector<10x10xf32>
    %233 = arith.addf %232, %19 : vector<10x10xf32>
    %cst_119 = arith.constant dense<0xFF800000> : vector<10xf32>
    %234 = vector.multi_reduction <maximumf>, %233, %cst_119 [1] : vector<10x10xf32> to vector<10xf32>
    %235 = vector.shape_cast %234 : vector<10xf32> to vector<10x1xf32>
    %236 = vector.broadcast %235 : vector<10x1xf32> to vector<10x10xf32>
    %237 = arith.subf %233, %236 : vector<10x10xf32>
    %238 = math.exp %237 : vector<10x10xf32>
    %cst_120 = arith.constant dense<0.000000e+00> : vector<10xf32>
    %239 = vector.multi_reduction <add>, %238, %cst_120 [1] : vector<10x10xf32> to vector<10xf32>
    %240 = vector.shape_cast %239 : vector<10xf32> to vector<10x1xf32>
    %241 = tpu.reciprocal %240 : vector<10x1xf32> -> vector<10x1xf32>
    %242 = vector.broadcast %241 : vector<10x1xf32> to vector<10x10xf32>
    %243 = arith.mulf %238, %242 : vector<10x10xf32>
    %cst_121 = arith.constant dense<0.000000e+00> : vector<10x8xf32>
    %244 = tpu.matmul %243, %229, %cst_121 {dimension_numbers = #tpu.dot_dimension_numbers<[1], [0], [0], [1], [0, 0, 1, 1], [], []>} : vector<10x10xf32>, vector<10x8xf32>, vector<10x8xf32> -> vector<10x8xf32>
    %245 = vector.extract_strided_slice %226 {offsets = [0, 0], sizes = [8, 32], strides = [1, 1]} : vector<32x32xf32> to vector<8x32xf32>
    %cst_122 = arith.constant dense<0.000000e+00> : vector<10x32xf32>
    %246 = tpu.matmul %244, %245, %cst_122 {dimension_numbers = #tpu.dot_dimension_numbers<[1], [0], [0], [1], [0, 0, 1, 1], [], []>} : vector<10x8xf32>, vector<8x32xf32>, vector<10x32xf32> -> vector<10x32xf32>
    %247 = vector.extract_strided_slice %224 {offsets = [0, 8], sizes = [10, 8], strides = [1, 1]} : vector<10x96xf32> to vector<10x8xf32>
    %248 = vector.extract_strided_slice %224 {offsets = [0, 40], sizes = [10, 8], strides = [1, 1]} : vector<10x96xf32> to vector<10x8xf32>
    %249 = vector.extract_strided_slice %224 {offsets = [0, 72], sizes = [10, 8], strides = [1, 1]} : vector<10x96xf32> to vector<10x8xf32>
    %cst_123 = arith.constant dense<0.000000e+00> : vector<10x10xf32>
    %250 = tpu.matmul %247, %248, %cst_123 {dimension_numbers = #tpu.dot_dimension_numbers<[1], [1], [0], [0], [0, 0, 1, 0], [], []>} : vector<10x8xf32>, vector<10x8xf32>, vector<10x10xf32> -> vector<10x10xf32>
    %cst_124 = arith.constant 0.353553385 : f32
    %251 = vector.broadcast %cst_124 : f32 to vector<10x10xf32>
    %252 = arith.mulf %250, %251 : vector<10x10xf32>
    %253 = arith.addf %252, %19 : vector<10x10xf32>
    %cst_125 = arith.constant dense<0xFF800000> : vector<10xf32>
    %254 = vector.multi_reduction <maximumf>, %253, %cst_125 [1] : vector<10x10xf32> to vector<10xf32>
    %255 = vector.shape_cast %254 : vector<10xf32> to vector<10x1xf32>
    %256 = vector.broadcast %255 : vector<10x1xf32> to vector<10x10xf32>
    %257 = arith.subf %253, %256 : vector<10x10xf32>
    %258 = math.exp %257 : vector<10x10xf32>
    %cst_126 = arith.constant dense<0.000000e+00> : vector<10xf32>
    %259 = vector.multi_reduction <add>, %258, %cst_126 [1] : vector<10x10xf32> to vector<10xf32>
    %260 = vector.shape_cast %259 : vector<10xf32> to vector<10x1xf32>
    %261 = tpu.reciprocal %260 : vector<10x1xf32> -> vector<10x1xf32>
    %262 = vector.broadcast %261 : vector<10x1xf32> to vector<10x10xf32>
    %263 = arith.mulf %258, %262 : vector<10x10xf32>
    %cst_127 = arith.constant dense<0.000000e+00> : vector<10x8xf32>
    %264 = tpu.matmul %263, %249, %cst_127 {dimension_numbers = #tpu.dot_dimension_numbers<[1], [0], [0], [1], [0, 0, 1, 1], [], []>} : vector<10x10xf32>, vector<10x8xf32>, vector<10x8xf32> -> vector<10x8xf32>
    %265 = vector.extract_strided_slice %226 {offsets = [8, 0], sizes = [8, 32], strides = [1, 1]} : vector<32x32xf32> to vector<8x32xf32>
    %cst_128 = arith.constant dense<0.000000e+00> : vector<10x32xf32>
    %266 = tpu.matmul %264, %265, %cst_128 {dimension_numbers = #tpu.dot_dimension_numbers<[1], [0], [0], [1], [0, 0, 1, 1], [], []>} : vector<10x8xf32>, vector<8x32xf32>, vector<10x32xf32> -> vector<10x32xf32>
    %267 = arith.addf %246, %266 : vector<10x32xf32>
    %268 = vector.extract_strided_slice %224 {offsets = [0, 16], sizes = [10, 8], strides = [1, 1]} : vector<10x96xf32> to vector<10x8xf32>
    %269 = vector.extract_strided_slice %224 {offsets = [0, 48], sizes = [10, 8], strides = [1, 1]} : vector<10x96xf32> to vector<10x8xf32>
    %270 = vector.extract_strided_slice %224 {offsets = [0, 80], sizes = [10, 8], strides = [1, 1]} : vector<10x96xf32> to vector<10x8xf32>
    %cst_129 = arith.constant dense<0.000000e+00> : vector<10x10xf32>
    %271 = tpu.matmul %268, %269, %cst_129 {dimension_numbers = #tpu.dot_dimension_numbers<[1], [1], [0], [0], [0, 0, 1, 0], [], []>} : vector<10x8xf32>, vector<10x8xf32>, vector<10x10xf32> -> vector<10x10xf32>
    %cst_130 = arith.constant 0.353553385 : f32
    %272 = vector.broadcast %cst_130 : f32 to vector<10x10xf32>
    %273 = arith.mulf %271, %272 : vector<10x10xf32>
    %274 = arith.addf %273, %19 : vector<10x10xf32>
    %cst_131 = arith.constant dense<0xFF800000> : vector<10xf32>
    %275 = vector.multi_reduction <maximumf>, %274, %cst_131 [1] : vector<10x10xf32> to vector<10xf32>
    %276 = vector.shape_cast %275 : vector<10xf32> to vector<10x1xf32>
    %277 = vector.broadcast %276 : vector<10x1xf32> to vector<10x10xf32>
    %278 = arith.subf %274, %277 : vector<10x10xf32>
    %279 = math.exp %278 : vector<10x10xf32>
    %cst_132 = arith.constant dense<0.000000e+00> : vector<10xf32>
    %280 = vector.multi_reduction <add>, %279, %cst_132 [1] : vector<10x10xf32> to vector<10xf32>
    %281 = vector.shape_cast %280 : vector<10xf32> to vector<10x1xf32>
    %282 = tpu.reciprocal %281 : vector<10x1xf32> -> vector<10x1xf32>
    %283 = vector.broadcast %282 : vector<10x1xf32> to vector<10x10xf32>
    %284 = arith.mulf %279, %283 : vector<10x10xf32>
    %cst_133 = arith.constant dense<0.000000e+00> : vector<10x8xf32>
    %285 = tpu.matmul %284, %270, %cst_133 {dimension_numbers = #tpu.dot_dimension_numbers<[1], [0], [0], [1], [0, 0, 1, 1], [], []>} : vector<10x10xf32>, vector<10x8xf32>, vector<10x8xf32> -> vector<10x8xf32>
    %286 = vector.extract_strided_slice %226 {offsets = [16, 0], sizes = [8, 32], strides = [1, 1]} : vector<32x32xf32> to vector<8x32xf32>
    %cst_134 = arith.constant dense<0.000000e+00> : vector<10x32xf32>
    %287 = tpu.matmul %285, %286, %cst_134 {dimension_numbers = #tpu.dot_dimension_numbers<[1], [0], [0], [1], [0, 0, 1, 1], [], []>} : vector<10x8xf32>, vector<8x32xf32>, vector<10x32xf32> -> vector<10x32xf32>
    %288 = arith.addf %267, %287 : vector<10x32xf32>
    %289 = vector.extract_strided_slice %224 {offsets = [0, 24], sizes = [10, 8], strides = [1, 1]} : vector<10x96xf32> to vector<10x8xf32>
    %290 = vector.extract_strided_slice %224 {offsets = [0, 56], sizes = [10, 8], strides = [1, 1]} : vector<10x96xf32> to vector<10x8xf32>
    %291 = vector.extract_strided_slice %224 {offsets = [0, 88], sizes = [10, 8], strides = [1, 1]} : vector<10x96xf32> to vector<10x8xf32>
    %cst_135 = arith.constant dense<0.000000e+00> : vector<10x10xf32>
    %292 = tpu.matmul %289, %290, %cst_135 {dimension_numbers = #tpu.dot_dimension_numbers<[1], [1], [0], [0], [0, 0, 1, 0], [], []>} : vector<10x8xf32>, vector<10x8xf32>, vector<10x10xf32> -> vector<10x10xf32>
    %cst_136 = arith.constant 0.353553385 : f32
    %293 = vector.broadcast %cst_136 : f32 to vector<10x10xf32>
    %294 = arith.mulf %292, %293 : vector<10x10xf32>
    %295 = arith.addf %294, %19 : vector<10x10xf32>
    %cst_137 = arith.constant dense<0xFF800000> : vector<10xf32>
    %296 = vector.multi_reduction <maximumf>, %295, %cst_137 [1] : vector<10x10xf32> to vector<10xf32>
    %297 = vector.shape_cast %296 : vector<10xf32> to vector<10x1xf32>
    %298 = vector.broadcast %297 : vector<10x1xf32> to vector<10x10xf32>
    %299 = arith.subf %295, %298 : vector<10x10xf32>
    %300 = math.exp %299 : vector<10x10xf32>
    %cst_138 = arith.constant dense<0.000000e+00> : vector<10xf32>
    %301 = vector.multi_reduction <add>, %300, %cst_138 [1] : vector<10x10xf32> to vector<10xf32>
    %302 = vector.shape_cast %301 : vector<10xf32> to vector<10x1xf32>
    %303 = tpu.reciprocal %302 : vector<10x1xf32> -> vector<10x1xf32>
    %304 = vector.broadcast %303 : vector<10x1xf32> to vector<10x10xf32>
    %305 = arith.mulf %300, %304 : vector<10x10xf32>
    %cst_139 = arith.constant dense<0.000000e+00> : vector<10x8xf32>
    %306 = tpu.matmul %305, %291, %cst_139 {dimension_numbers = #tpu.dot_dimension_numbers<[1], [0], [0], [1], [0, 0, 1, 1], [], []>} : vector<10x10xf32>, vector<10x8xf32>, vector<10x8xf32> -> vector<10x8xf32>
    %307 = vector.extract_strided_slice %226 {offsets = [24, 0], sizes = [8, 32], strides = [1, 1]} : vector<32x32xf32> to vector<8x32xf32>
    %cst_140 = arith.constant dense<0.000000e+00> : vector<10x32xf32>
    %308 = tpu.matmul %306, %307, %cst_140 {dimension_numbers = #tpu.dot_dimension_numbers<[1], [0], [0], [1], [0, 0, 1, 1], [], []>} : vector<10x8xf32>, vector<8x32xf32>, vector<10x32xf32> -> vector<10x32xf32>
    %309 = arith.addf %288, %308 : vector<10x32xf32>
    %310 = arith.addf %191, %309 : vector<10x32xf32>
    %c1_141 = arith.constant 1 : index
    %c0_142 = arith.constant 0 : index
    %c0_143 = arith.constant 0 : index
    %311 = vector.load %arg11[%c1_141, %c0_142, %c0_143] : memref<2x1x32xf32, #tpu.memory_space<vmem>>, vector<1x1x32xf32>
    %312 = vector.shape_cast %311 : vector<1x1x32xf32> to vector<1x32xf32>
    %313 = vector.broadcast %312 : vector<1x32xf32> to vector<10x32xf32>
    %314 = arith.addf %310, %313 : vector<10x32xf32>
    %c1_144 = arith.constant 1 : index
    %c0_145 = arith.constant 0 : index
    %c0_146 = arith.constant 0 : index
    %315 = vector.load %arg12[%c1_144, %c0_145, %c0_146] : memref<2x1x32xf32, #tpu.memory_space<vmem>>, vector<1x1x32xf32>
    %316 = vector.shape_cast %315 : vector<1x1x32xf32> to vector<1x32xf32>
    %c1_147 = arith.constant 1 : index
    %c0_148 = arith.constant 0 : index
    %c0_149 = arith.constant 0 : index
    %317 = vector.load %arg13[%c1_147, %c0_148, %c0_149] : memref<2x1x32xf32, #tpu.memory_space<vmem>>, vector<1x1x32xf32>
    %318 = vector.shape_cast %317 : vector<1x1x32xf32> to vector<1x32xf32>
    %cst_150 = arith.constant dense<0.000000e+00> : vector<10xf32>
    %319 = vector.multi_reduction <add>, %314, %cst_150 [1] : vector<10x32xf32> to vector<10xf32>
    %320 = vector.shape_cast %319 : vector<10xf32> to vector<10x1xf32>
    %cst_151 = arith.constant 3.200000e+01 : f32
    %321 = vector.broadcast %cst_151 : f32 to vector<10x1xf32>
    %322 = arith.divf %320, %321 : vector<10x1xf32>
    %323 = vector.broadcast %322 : vector<10x1xf32> to vector<10x32xf32>
    %324 = arith.subf %314, %323 : vector<10x32xf32>
    %325 = arith.mulf %324, %324 : vector<10x32xf32>
    %cst_152 = arith.constant dense<0.000000e+00> : vector<10xf32>
    %326 = vector.multi_reduction <add>, %325, %cst_152 [1] : vector<10x32xf32> to vector<10xf32>
    %327 = vector.shape_cast %326 : vector<10xf32> to vector<10x1xf32>
    %cst_153 = arith.constant 3.200000e+01 : f32
    %328 = vector.broadcast %cst_153 : f32 to vector<10x1xf32>
    %329 = arith.divf %327, %328 : vector<10x1xf32>
    %330 = vector.broadcast %322 : vector<10x1xf32> to vector<10x32xf32>
    %331 = arith.subf %314, %330 : vector<10x32xf32>
    %cst_154 = arith.constant 9.99999997E-7 : f32
    %332 = vector.broadcast %cst_154 : f32 to vector<10x1xf32>
    %333 = arith.addf %329, %332 : vector<10x1xf32>
    %334 = math.rsqrt %333 : vector<10x1xf32>
    %335 = vector.broadcast %334 : vector<10x1xf32> to vector<10x32xf32>
    %336 = arith.mulf %331, %335 : vector<10x32xf32>
    %337 = vector.broadcast %316 : vector<1x32xf32> to vector<10x32xf32>
    %338 = arith.mulf %336, %337 : vector<10x32xf32>
    %339 = vector.broadcast %318 : vector<1x32xf32> to vector<10x32xf32>
    %340 = arith.addf %338, %339 : vector<10x32xf32>
    %c1_155 = arith.constant 1 : index
    %c0_156 = arith.constant 0 : index
    %c0_157 = arith.constant 0 : index
    %341 = vector.load %arg14[%c1_155, %c0_156, %c0_157] : memref<2x32x128xf32, #tpu.memory_space<vmem>>, vector<1x32x128xf32>
    %342 = vector.shape_cast %341 : vector<1x32x128xf32> to vector<32x128xf32>
    %cst_158 = arith.constant dense<0.000000e+00> : vector<10x128xf32>
    %343 = tpu.matmul %340, %342, %cst_158 {dimension_numbers = #tpu.dot_dimension_numbers<[1], [0], [0], [1], [0, 0, 1, 1], [], []>} : vector<10x32xf32>, vector<32x128xf32>, vector<10x128xf32> -> vector<10x128xf32>
    %c1_159 = arith.constant 1 : index
    %c0_160 = arith.constant 0 : index
    %c0_161 = arith.constant 0 : index
    %344 = vector.load %arg15[%c1_159, %c0_160, %c0_161] : memref<2x1x128xf32, #tpu.memory_space<vmem>>, vector<1x1x128xf32>
    %345 = vector.shape_cast %344 : vector<1x1x128xf32> to vector<1x128xf32>
    %346 = vector.broadcast %345 : vector<1x128xf32> to vector<10x128xf32>
    %347 = arith.addf %343, %346 : vector<10x128xf32>
    %cst_162 = arith.constant 5.000000e-01 : f32
    %348 = vector.broadcast %cst_162 : f32 to vector<10x128xf32>
    %349 = arith.mulf %348, %347 : vector<10x128xf32>
    %cst_163 = arith.constant 0.707106769 : f32
    %350 = vector.broadcast %cst_163 : f32 to vector<10x128xf32>
    %351 = arith.mulf %347, %350 : vector<10x128xf32>
    %352 = math.erf %351 : vector<10x128xf32>
    %cst_164 = arith.constant 1.000000e+00 : f32
    %353 = vector.broadcast %cst_164 : f32 to vector<10x128xf32>
    %354 = arith.addf %353, %352 : vector<10x128xf32>
    %355 = arith.mulf %349, %354 : vector<10x128xf32>
    %c1_165 = arith.constant 1 : index
    %c0_166 = arith.constant 0 : index
    %c0_167 = arith.constant 0 : index
    %356 = vector.load %arg16[%c1_165, %c0_166, %c0_167] : memref<2x128x32xf32, #tpu.memory_space<vmem>>, vector<1x128x32xf32>
    %357 = vector.shape_cast %356 : vector<1x128x32xf32> to vector<128x32xf32>
    %cst_168 = arith.constant dense<0.000000e+00> : vector<10x32xf32>
    %358 = tpu.matmul %355, %357, %cst_168 {dimension_numbers = #tpu.dot_dimension_numbers<[1], [0], [0], [1], [0, 0, 1, 1], [], []>} : vector<10x128xf32>, vector<128x32xf32>, vector<10x32xf32> -> vector<10x32xf32>
    %359 = arith.addf %314, %358 : vector<10x32xf32>
    %c1_169 = arith.constant 1 : index
    %c0_170 = arith.constant 0 : index
    %c0_171 = arith.constant 0 : index
    %360 = vector.load %arg17[%c1_169, %c0_170, %c0_171] : memref<2x1x32xf32, #tpu.memory_space<vmem>>, vector<1x1x32xf32>
    %361 = vector.shape_cast %360 : vector<1x1x32xf32> to vector<1x32xf32>
    %362 = vector.broadcast %361 : vector<1x32xf32> to vector<10x32xf32>
    %363 = arith.addf %359, %362 : vector<10x32xf32>
    %c0_172 = arith.constant 0 : index
    %c0_173 = arith.constant 0 : index
    %364 = vector.load %arg18[%c0_172, %c0_173] : memref<1x32xf32, #tpu.memory_space<vmem>>, vector<1x32xf32>
    %c0_174 = arith.constant 0 : index
    %c0_175 = arith.constant 0 : index
    %365 = vector.load %arg19[%c0_174, %c0_175] : memref<1x32xf32, #tpu.memory_space<vmem>>, vector<1x32xf32>
    %cst_176 = arith.constant dense<0.000000e+00> : vector<10xf32>
    %366 = vector.multi_reduction <add>, %363, %cst_176 [1] : vector<10x32xf32> to vector<10xf32>
    %367 = vector.shape_cast %366 : vector<10xf32> to vector<10x1xf32>
    %cst_177 = arith.constant 3.200000e+01 : f32
    %368 = vector.broadcast %cst_177 : f32 to vector<10x1xf32>
    %369 = arith.divf %367, %368 : vector<10x1xf32>
    %370 = vector.broadcast %369 : vector<10x1xf32> to vector<10x32xf32>
    %371 = arith.subf %363, %370 : vector<10x32xf32>
    %372 = arith.mulf %371, %371 : vector<10x32xf32>
    %cst_178 = arith.constant dense<0.000000e+00> : vector<10xf32>
    %373 = vector.multi_reduction <add>, %372, %cst_178 [1] : vector<10x32xf32> to vector<10xf32>
    %374 = vector.shape_cast %373 : vector<10xf32> to vector<10x1xf32>
    %cst_179 = arith.constant 3.200000e+01 : f32
    %375 = vector.broadcast %cst_179 : f32 to vector<10x1xf32>
    %376 = arith.divf %374, %375 : vector<10x1xf32>
    %377 = vector.broadcast %369 : vector<10x1xf32> to vector<10x32xf32>
    %378 = arith.subf %363, %377 : vector<10x32xf32>
    %cst_180 = arith.constant 9.99999997E-7 : f32
    %379 = vector.broadcast %cst_180 : f32 to vector<10x1xf32>
    %380 = arith.addf %376, %379 : vector<10x1xf32>
    %381 = math.rsqrt %380 : vector<10x1xf32>
    %382 = vector.broadcast %381 : vector<10x1xf32> to vector<10x32xf32>
    %383 = arith.mulf %378, %382 : vector<10x32xf32>
    %384 = vector.broadcast %364 : vector<1x32xf32> to vector<10x32xf32>
    %385 = arith.mulf %383, %384 : vector<10x32xf32>
    %386 = vector.broadcast %365 : vector<1x32xf32> to vector<10x32xf32>
    %387 = arith.addf %385, %386 : vector<10x32xf32>
    %c0_181 = arith.constant 0 : index
    %c0_182 = arith.constant 0 : index
    %388 = vector.load %arg20[%c0_181, %c0_182] : memref<1x32xf32, #tpu.memory_space<vmem>>, vector<1x32xf32>
    %c0_183 = arith.constant 0 : index
    %c0_184 = arith.constant 0 : index
    %389 = vector.load %arg21[%c0_183, %c0_184] : memref<1x1xf32, #tpu.memory_space<vmem>>, vector<1x1xf32>
    %390 = vector.extract_strided_slice %387 {offsets = [0, 0], sizes = [1, 32], strides = [1, 1]} : vector<10x32xf32> to vector<1x32xf32>
    %c0_185 = arith.constant 0 : index
    %c0_186 = arith.constant 0 : index
    %391 = vector.load %arg22[%c0_185, %c0_186] : memref<2x32xf32, #tpu.memory_space<vmem>>, vector<1x32xf32>
    tpu.vector_store %arg22[%c0_185, %c0_186], %390 {strides = array<i32>} : memref<2x32xf32, #tpu.memory_space<vmem>>, vector<1x32xf32>,
    %392 = arith.mulf %390, %388 : vector<1x32xf32>
    %cst_187 = arith.constant dense<0.000000e+00> : vector<1xf32>
    %393 = vector.multi_reduction <add>, %392, %cst_187 [1] : vector<1x32xf32> to vector<1xf32>
    %394 = vector.shape_cast %393 : vector<1xf32> to vector<1x1xf32>
    %395 = arith.addf %394, %389 : vector<1x1xf32>
    %c0_188 = arith.constant 0 : index
    %c0_189 = arith.constant 0 : index
    %396 = vector.load %arg23[%c0_188, %c0_189] : memref<2x1xf32, #tpu.memory_space<vmem>>, vector<1x1xf32>
    tpu.vector_store %arg23[%c0_188, %c0_189], %395 {strides = array<i32>} : memref<2x1xf32, #tpu.memory_space<vmem>>, vector<1x1xf32>,
    %397 = vector.extract_strided_slice %387 {offsets = [5, 0], sizes = [1, 32], strides = [1, 1]} : vector<10x32xf32> to vector<1x32xf32>
    %c1_190 = arith.constant 1 : index
    %c0_191 = arith.constant 0 : index
    %398 = vector.load %arg22[%c1_190, %c0_191] : memref<2x32xf32, #tpu.memory_space<vmem>>, vector<1x32xf32>
    tpu.vector_store %arg22[%c1_190, %c0_191], %397 {strides = array<i32>} : memref<2x32xf32, #tpu.memory_space<vmem>>, vector<1x32xf32>,
    %399 = arith.mulf %397, %388 : vector<1x32xf32>
    %cst_192 = arith.constant dense<0.000000e+00> : vector<1xf32>
    %400 = vector.multi_reduction <add>, %399, %cst_192 [1] : vector<1x32xf32> to vector<1xf32>
    %401 = vector.shape_cast %400 : vector<1xf32> to vector<1x1xf32>
    %402 = arith.addf %401, %389 : vector<1x1xf32>
    %c1_193 = arith.constant 1 : index
    %c0_194 = arith.constant 0 : index
    %403 = vector.load %arg23[%c1_193, %c0_194] : memref<2x1xf32, #tpu.memory_space<vmem>>, vector<1x1xf32>
    tpu.vector_store %arg23[%c1_193, %c0_194], %402 {strides = array<i32>} : memref<2x1xf32, #tpu.memory_space<vmem>>, vector<1x1xf32>,
    return
  }
}

</mosaic_0001>

<llo_original>
// kernel: dino_forward.1
$region0: #{dino_forward.1}
  #allocation0 [shape = 'u32[]', space=smem, size = 0x4, offset = 0x4, fixed_abs, tag = 'smem constant byte address 0x4 - core index']
  #allocation1 [shape = 'u32[144,128]{1,0:T(1,128)}', space=vmem, size = 0x12000, scoped, tag = 'internal scratch']
  #allocation2 [shape = 'f32[10,32]{1,0:T(8,128)}', space=vmem, size = 0x2000, scoped, tag = 'scratch operand']
  #allocation3 [shape = 'f32[1,1]{1,0:T(1,128)S(1)}', space=vmem, size = 0x200, scoped, tag = 'scoped memory for dino_forward.1']
  %s0 = inlined_call_operand.vmem [shape: f32[8,640], index: 0, kind: input, shape index: {}]
  %s1 = inlined_call_operand.vmem [shape: f32[640,32], index: 1, kind: input, shape index: {}]
  %s2 = inlined_call_operand.vmem [shape: f32[1,32], index: 2, kind: input, shape index: {}]
  %s3 = inlined_call_operand.vmem [shape: f32[1,32], index: 3, kind: input, shape index: {}]
  %s4 = inlined_call_operand.vmem [shape: f32[5,32], index: 4, kind: input, shape index: {}]
  %s5 = inlined_call_operand.vmem [shape: f32[10,10], index: 5, kind: input, shape index: {}]
  %s6 = inlined_call_operand.vmem [shape: f32[2,1,32], index: 6, kind: input, shape index: {}]
  %s7 = inlined_call_operand.vmem [shape: f32[2,1,32], index: 7, kind: input, shape index: {}]
  %s8 = inlined_call_operand.vmem [shape: f32[2,32,96], index: 8, kind: input, shape index: {}]
  %s9 = inlined_call_operand.vmem [shape: f32[2,1,96], index: 9, kind: input, shape index: {}]
  %s10 = inlined_call_operand.vmem [shape: f32[2,32,32], index: 10, kind: input, shape index: {}]
  %s11 = inlined_call_operand.vmem [shape: f32[2,1,32], index: 11, kind: input, shape index: {}]
  %s12 = inlined_call_operand.vmem [shape: f32[2,1,32], index: 12, kind: input, shape index: {}]
  %s13 = inlined_call_operand.vmem [shape: f32[2,1,32], index: 13, kind: input, shape index: {}]
  %s14 = inlined_call_operand.vmem [shape: f32[2,32,128], index: 14, kind: input, shape index: {}]
  %s15 = inlined_call_operand.vmem [shape: f32[2,1,128], index: 15, kind: input, shape index: {}]
  %s16 = inlined_call_operand.vmem [shape: f32[2,128,32], index: 16, kind: input, shape index: {}]
  %s17 = inlined_call_operand.vmem [shape: f32[2,1,32], index: 17, kind: input, shape index: {}]
  %s18 = inlined_call_operand.vmem [shape: f32[1,32], index: 18, kind: input, shape index: {}]
  %s19 = inlined_call_operand.vmem [shape: f32[1,32], index: 19, kind: input, shape index: {}]
  %s20 = inlined_call_operand.vmem [shape: f32[1,32], index: 20, kind: input, shape index: {}]
  %s21 = inlined_call_operand.<no memory space> [shape: f32[1,1], index: 21, kind: input, shape index: {}]
  %s22 = inlined_call_operand.hbm [shape: f32[2,32], index: 22, kind: output, shape index: {0}]
  %s23 = inlined_call_operand.vmem [shape: f32[2,1], index: 23, kind: output, shape index: {1}]
  %24 = xla_tuple %s22, %s23
  %s25 = sld [smem:[#allocation0]]
  $region106: #{dino_forward.1} parent=0
    _
  %s27 = ssub.s32 1, %s25
  %s28 = scalar_select 0, %s27, %s25
  %v29 = vstv %s21
  %30 = vst [vmem:[#allocation3] sm:$0x1] %v29
  $region1: #{dino_forward.1} parent=0
    #allocation4 [shape = 'u8[1024]{0}', space=vmem, size = 0x400, scoped, tag = 'output window, operand 0, single buffered']
    #allocation5 [shape = 's32[1]{0}', space=sflag, size = 0x4, scoped, tag = 'scoped memory for dino_forward.1']
    %31 = vsyncpa [#allocation5], 0
    // Predicated region
    $region2: #{dino_forward.1} parent=1 // pred_check
      _
    $region3: #{dino_forward.1} parent=1 // pred_check_branch
      %33 = sbr.rel (0) target = $region5
    $region4: #{dino_forward.1} parent=1 // pred_region
      _
    $region5: #{dino_forward.1} parent=1 // pred_fallthru
      _
    // Predicated region
    $region6: #{dino_forward.1} parent=1 // pred_check
      _
    $region7: #{dino_forward.1} parent=1 // pred_check_branch
      %35 = sbr.rel (0) target = $region9
    $region8: #{dino_forward.1} parent=1 // pred_region
      _
    $region9: #{dino_forward.1} parent=1 // pred_fallthru
      _
    // Predicated region
    $region10: #{dino_forward.1} parent=1 // pred_check
      _
    $region11: #{dino_forward.1} parent=1 // pred_check_branch
      %37 = sbr.rel (0) target = $region13
    $region12: #{dino_forward.1} parent=1 // pred_region
      _
    $region13: #{dino_forward.1} parent=1 // pred_fallthru
      _
    // Predicated region
    $region14: #{dino_forward.1} parent=1 // pred_check
      _
    $region15: #{dino_forward.1} parent=1 // pred_check_branch
      %39 = sbr.rel (0) target = $region17
    $region16: #{dino_forward.1} parent=1 // pred_region
      _
    $region17: #{dino_forward.1} parent=1 // pred_fallthru
      _
    // Predicated region
    $region18: #{dino_forward.1} parent=1 // pred_check
      _
    $region19: #{dino_forward.1} parent=1 // pred_check_branch
      %41 = sbr.rel (0) target = $region21
    $region20: #{dino_forward.1} parent=1 // pred_region
      _
    $region21: #{dino_forward.1} parent=1 // pred_fallthru
      _
    // Predicated region
    $region22: #{dino_forward.1} parent=1 // pred_check
      _
    $region23: #{dino_forward.1} parent=1 // pred_check_branch
      %43 = sbr.rel (0) target = $region25
    $region24: #{dino_forward.1} parent=1 // pred_region
      _
    $region25: #{dino_forward.1} parent=1 // pred_fallthru
      _
    // Predicated region
    $region26: #{dino_forward.1} parent=1 // pred_check
      _
    $region27: #{dino_forward.1} parent=1 // pred_check_branch
      %45 = sbr.rel (0) target = $region29
    $region28: #{dino_forward.1} parent=1 // pred_region
      _
    $region29: #{dino_forward.1} parent=1 // pred_fallthru
      _
    // Predicated region
    $region30: #{dino_forward.1} parent=1 // pred_check
      _
    $region31: #{dino_forward.1} parent=1 // pred_check_branch
      %47 = sbr.rel (0) target = $region33
    $region32: #{dino_forward.1} parent=1 // pred_region
      _
    $region33: #{dino_forward.1} parent=1 // pred_fallthru
      _
    // Predicated region
    $region34: #{dino_forward.1} parent=1 // pred_check
      _
    $region35: #{dino_forward.1} parent=1 // pred_check_branch
      %49 = sbr.rel (0) target = $region37
    $region36: #{dino_forward.1} parent=1 // pred_region
      _
    $region37: #{dino_forward.1} parent=1 // pred_fallthru
      _
    // Predicated region
    $region38: #{dino_forward.1} parent=1 // pred_check
      _
    $region39: #{dino_forward.1} parent=1 // pred_check_branch
      %51 = sbr.rel (0) target = $region41
    $region40: #{dino_forward.1} parent=1 // pred_region
      _
    $region41: #{dino_forward.1} parent=1 // pred_fallthru
      _
    // Predicated region
    $region42: #{dino_forward.1} parent=1 // pred_check
      _
    $region43: #{dino_forward.1} parent=1 // pred_check_branch
      %53 = sbr.rel (0) target = $region45
    $region44: #{dino_forward.1} parent=1 // pred_region
      _
    $region45: #{dino_forward.1} parent=1 // pred_fallthru
      _
    // Predicated region
    $region46: #{dino_forward.1} parent=1 // pred_check
      _
    $region47: #{dino_forward.1} parent=1 // pred_check_branch
      %55 = sbr.rel (0) target = $region49
    $region48: #{dino_forward.1} parent=1 // pred_region
      _
    $region49: #{dino_forward.1} parent=1 // pred_fallthru
      _
    // Predicated region
    $region50: #{dino_forward.1} parent=1 // pred_check
      _
    $region51: #{dino_forward.1} parent=1 // pred_check_branch
      %57 = sbr.rel (0) target = $region53
    $region52: #{dino_forward.1} parent=1 // pred_region
      _
    $region53: #{dino_forward.1} parent=1 // pred_fallthru
      _
    // Predicated region
    $region54: #{dino_forward.1} parent=1 // pred_check
      _
    $region55: #{dino_forward.1} parent=1 // pred_check_branch
      %59 = sbr.rel (0) target = $region57
    $region56: #{dino_forward.1} parent=1 // pred_region
      _
    $region57: #{dino_forward.1} parent=1 // pred_fallthru
      _
    // Predicated region
    $region58: #{dino_forward.1} parent=1 // pred_check
      _
    $region59: #{dino_forward.1} parent=1 // pred_check_branch
      %61 = sbr.rel (0) target = $region61
    $region60: #{dino_forward.1} parent=1 // pred_region
      _
    $region61: #{dino_forward.1} parent=1 // pred_fallthru
      _
    // Predicated region
    $region62: #{dino_forward.1} parent=1 // pred_check
      _
    $region63: #{dino_forward.1} parent=1 // pred_check_branch
      %63 = sbr.rel (0) target = $region65
    $region64: #{dino_forward.1} parent=1 // pred_region
      _
    $region65: #{dino_forward.1} parent=1 // pred_fallthru
      _
    // Predicated region
    $region66: #{dino_forward.1} parent=1 // pred_check
      _
    $region67: #{dino_forward.1} parent=1 // pred_check_branch
      %65 = sbr.rel (0) target = $region69
    $region68: #{dino_forward.1} parent=1 // pred_region
      _
    $region69: #{dino_forward.1} parent=1 // pred_fallthru
      _
    // Predicated region
    $region70: #{dino_forward.1} parent=1 // pred_check
      _
    $region71: #{dino_forward.1} parent=1 // pred_check_branch
      %67 = sbr.rel (0) target = $region73
    $region72: #{dino_forward.1} parent=1 // pred_region
      _
    $region73: #{dino_forward.1} parent=1 // pred_fallthru
      _
    // Predicated region
    $region74: #{dino_forward.1} parent=1 // pred_check
      _
    $region75: #{dino_forward.1} parent=1 // pred_check_branch
      %69 = sbr.rel (0) target = $region77
    $region76: #{dino_forward.1} parent=1 // pred_region
      _
    $region77: #{dino_forward.1} parent=1 // pred_fallthru
      _
    // Predicated region
    $region78: #{dino_forward.1} parent=1 // pred_check
      _
    $region79: #{dino_forward.1} parent=1 // pred_check_branch
      %71 = sbr.rel (0) target = $region81
    $region80: #{dino_forward.1} parent=1 // pred_region
      _
    $region81: #{dino_forward.1} parent=1 // pred_fallthru
      _
    // Predicated region
    $region82: #{dino_forward.1} parent=1 // pred_check
      _
    $region83: #{dino_forward.1} parent=1 // pred_check_branch
      %73 = sbr.rel (0) target = $region85
    $region84: #{dino_forward.1} parent=1 // pred_region
      _
    $region85: #{dino_forward.1} parent=1 // pred_fallthru
      _
    // Predicated region
    $region86: #{dino_forward.1} parent=1 // pred_check
      _
    $region87: #{dino_forward.1} parent=1 // pred_check_branch
      %75 = sbr.rel (0) target = $region89
    $region88: #{dino_forward.1} parent=1 // pred_region
      _
    $region89: #{dino_forward.1} parent=1 // pred_fallthru
      _
    %v76 = vld [vmem:[%s0] sm:$0xff]
    %v77 = vld [vmem:[%s0 + $0x8] sm:$0xff]
    %v78 = vld [vmem:[%s0 + $0x10] sm:$0xff]
    %v79 = vld [vmem:[%s0 + $0x18] sm:$0xff]
    %v80 = vld [vmem:[%s0 + $0x20] sm:$0xff]
    %v81 = vld [vmem:[%s1] sm:$0xff]
    %v82 = vld [vmem:[%s1 + $0x8] sm:$0xff]
    %v83 = vld [vmem:[%s1 + $0x10] sm:$0xff]
    %v84 = vld [vmem:[%s1 + $0x18] sm:$0xff]
    %v85 = vld [vmem:[%s1 + $0x20] sm:$0xff]
    %v86 = vld [vmem:[%s1 + $0x28] sm:$0xff]
    %v87 = vld [vmem:[%s1 + $0x30] sm:$0xff]
    %v88 = vld [vmem:[%s1 + $0x38] sm:$0xff]
    %v89 = vld [vmem:[%s1 + $0x40] sm:$0xff]
    %v90 = vld [vmem:[%s1 + $0x48] sm:$0xff]
    %v91 = vld [vmem:[%s1 + $0x50] sm:$0xff]
    %v92 = vld [vmem:[%s1 + $0x58] sm:$0xff]
    %v93 = vld [vmem:[%s1 + $0x60] sm:$0xff]
    %v94 = vld [vmem:[%s1 + $0x68] sm:$0xff]
    %v95 = vld [vmem:[%s1 + $0x70] sm:$0xff]
    %v96 = vld [vmem:[%s1 + $0x78] sm:$0xff]
    %v97 = vld [vmem:[%s1 + $0x80] sm:$0xff]
    %v98 = vld [vmem:[%s1 + $0x88] sm:$0xff]
    %v99 = vld [vmem:[%s1 + $0x90] sm:$0xff]
    %v100 = vld [vmem:[%s1 + $0x98] sm:$0xff]
    %v101 = vld [vmem:[%s1 + $0xa0] sm:$0xff]
    %v102 = vld [vmem:[%s1 + $0xa8] sm:$0xff]
    %v103 = vld [vmem:[%s1 + $0xb0] sm:$0xff]
    %v104 = vld [vmem:[%s1 + $0xb8] sm:$0xff]
    %v105 = vld [vmem:[%s1 + $0xc0] sm:$0xff]
    %v106 = vld [vmem:[%s1 + $0xc8] sm:$0xff]
    %v107 = vld [vmem:[%s1 + $0xd0] sm:$0xff]
    %v108 = vld [vmem:[%s1 + $0xd8] sm:$0xff]
    %v109 = vld [vmem:[%s1 + $0xe0] sm:$0xff]
    %v110 = vld [vmem:[%s1 + $0xe8] sm:$0xff]
    %v111 = vld [vmem:[%s1 + $0xf0] sm:$0xff]
    %v112 = vld [vmem:[%s1 + $0xf8] sm:$0xff]
    %v113 = vld [vmem:[%s1 + $0x100] sm:$0xff]
    %v114 = vld [vmem:[%s1 + $0x108] sm:$0xff]
    %v115 = vld [vmem:[%s1 + $0x110] sm:$0xff]
    %v116 = vld [vmem:[%s1 + $0x118] sm:$0xff]
    %v117 = vld [vmem:[%s1 + $0x120] sm:$0xff]
    %v118 = vld [vmem:[%s1 + $0x128] sm:$0xff]
    %v119 = vld [vmem:[%s1 + $0x130] sm:$0xff]
    %v120 = vld [vmem:[%s1 + $0x138] sm:$0xff]
    %v121 = vld [vmem:[%s1 + $0x140] sm:$0xff]
    %v122 = vld [vmem:[%s1 + $0x148] sm:$0xff]
    %v123 = vld [vmem:[%s1 + $0x150] sm:$0xff]
    %v124 = vld [vmem:[%s1 + $0x158] sm:$0xff]
    %v125 = vld [vmem:[%s1 + $0x160] sm:$0xff]
    %v126 = vld [vmem:[%s1 + $0x168] sm:$0xff]
    %v127 = vld [vmem:[%s1 + $0x170] sm:$0xff]
    %v128 = vld [vmem:[%s1 + $0x178] sm:$0xff]
    %v129 = vld [vmem:[%s1 + $0x180] sm:$0xff]
    %v130 = vld [vmem:[%s1 + $0x188] sm:$0xff]
    %v131 = vld [vmem:[%s1 + $0x190] sm:$0xff]
    %v132 = vld [vmem:[%s1 + $0x198] sm:$0xff]
    %v133 = vld [vmem:[%s1 + $0x1a0] sm:$0xff]
    %v134 = vld [vmem:[%s1 + $0x1a8] sm:$0xff]
    %v135 = vld [vmem:[%s1 + $0x1b0] sm:$0xff]
    %v136 = vld [vmem:[%s1 + $0x1b8] sm:$0xff]
    %v137 = vld [vmem:[%s1 + $0x1c0] sm:$0xff]
    %v138 = vld [vmem:[%s1 + $0x1c8] sm:$0xff]
    %v139 = vld [vmem:[%s1 + $0x1d0] sm:$0xff]
    %v140 = vld [vmem:[%s1 + $0x1d8] sm:$0xff]
    %v141 = vld [vmem:[%s1 + $0x1e0] sm:$0xff]
    %v142 = vld [vmem:[%s1 + $0x1e8] sm:$0xff]
    %v143 = vld [vmem:[%s1 + $0x1f0] sm:$0xff]
    %v144 = vld [vmem:[%s1 + $0x1f8] sm:$0xff]
    %v145 = vld [vmem:[%s1 + $0x200] sm:$0xff]
    %v146 = vld [vmem:[%s1 + $0x208] sm:$0xff]
    %v147 = vld [vmem:[%s1 + $0x210] sm:$0xff]
    %v148 = vld [vmem:[%s1 + $0x218] sm:$0xff]
    %v149 = vld [vmem:[%s1 + $0x220] sm:$0xff]
    %v150 = vld [vmem:[%s1 + $0x228] sm:$0xff]
    %v151 = vld [vmem:[%s1 + $0x230] sm:$0xff]
    %v152 = vld [vmem:[%s1 + $0x238] sm:$0xff]
    %v153 = vld [vmem:[%s1 + $0x240] sm:$0xff]
    %v154 = vld [vmem:[%s1 + $0x248] sm:$0xff]
    %v155 = vld [vmem:[%s1 + $0x250] sm:$0xff]
    %v156 = vld [vmem:[%s1 + $0x258] sm:$0xff]
    %v157 = vld [vmem:[%s1 + $0x260] sm:$0xff]
    %v158 = vld [vmem:[%s1 + $0x268] sm:$0xff]
    %v159 = vld [vmem:[%s1 + $0x270] sm:$0xff]
    %v160 = vld [vmem:[%s1 + $0x278] sm:$0xff]
    %v161 = vld [vmem:[%s2] sm:$0x1]
    %v163 = vlaneseq
    %v164 = vshrl.u32 %v163, 7
    %v165 = vsub.s32 0, %v164
    %v166 = vrot.slane %v161, %v165
    %168 = vmatprep.subr.mxu0 0.0
    %169 = vmatpush1.msra.mxu0 %v81
    %170 = vmatprep.subr.mxu0 0.0
    %171 = vmatpush1.msra.mxu0 %v82
    %172 = vmatprep.subr.mxu0 0.0
    %173 = vmatpush1.msra.mxu0 %v83
    %174 = vmatprep.subr.mxu0 0.0
    %175 = vmatpush1.msra.mxu0 %v84
    %176 = vmatprep.subr.mxu0 0.0
    %177 = vmatpush1.msra.mxu0 %v85
    %178 = vmatprep.subr.mxu0 0.0
    %179 = vmatpush1.msra.mxu0 %v86
    %180 = vmatprep.subr.mxu0 0.0
    %181 = vmatpush1.msra.mxu0 %v87
    %182 = vmatprep.subr.mxu0 0.0
    %183 = vmatpush1.msra.mxu0 %v88
    %184 = vmatprep.subr.mxu0 0.0
    %185 = vmatpush1.msra.mxu0 %v89
    %186 = vmatprep.subr.mxu0 0.0
    %187 = vmatpush1.msra.mxu0 %v90
    %188 = vmatprep.subr.mxu0 0.0
    %189 = vmatpush1.msra.mxu0 %v91
    %190 = vmatprep.subr.mxu0 0.0
    %191 = vmatpush1.msra.mxu0 %v92
    %192 = vmatprep.subr.mxu0 0.0
    %193 = vmatpush1.msra.mxu0 %v93
    %194 = vmatprep.subr.mxu0 0.0
    %195 = vmatpush1.msra.mxu0 %v94
    %196 = vmatprep.subr.mxu0 0.0
    %197 = vmatpush1.msra.mxu0 %v95
    %198 = vmatprep.subr.mxu0 0.0
    %199 = vmatpush1.msra.mxu0 %v96
    %200 = vmatprep.subr.mxu0 0.0
    %201 = vmatpush1.msra.mxu0 %v97
    %202 = vmatprep.subr.mxu0 0.0
    %203 = vmatpush1.msra.mxu0 %v98
    %204 = vmatprep.subr.mxu0 0.0
    %205 = vmatpush1.msra.mxu0 %v99
    %206 = vmatprep.subr.mxu0 0.0
    %207 = vmatpush1.msra.mxu0 %v100
    %208 = vmatprep.subr.mxu0 0.0
    %209 = vmatpush1.msra.mxu0 %v101
    %210 = vmatprep.subr.mxu0 0.0
    %211 = vmatpush1.msra.mxu0 %v102
    %212 = vmatprep.subr.mxu0 0.0
    %213 = vmatpush1.msra.mxu0 %v103
    %214 = vmatprep.subr.mxu0 0.0
    %215 = vmatpush1.msra.mxu0 %v104
    %216 = vmatprep.subr.mxu0 0.0
    %217 = vmatpush1.msra.mxu0 %v105
    %218 = vmatprep.subr.mxu0 0.0
    %219 = vmatpush1.msra.mxu0 %v106
    %220 = vmatprep.subr.mxu0 0.0
    %221 = vmatpush1.msra.mxu0 %v107
    %222 = vmatprep.subr.mxu0 0.0
    %223 = vmatpush1.msra.mxu0 %v108
    %224 = vmatprep.subr.mxu0 0.0
    %225 = vmatpush1.msra.mxu0 %v109
    %226 = vmatprep.subr.mxu0 0.0
    %227 = vmatpush1.msra.mxu0 %v110
    %228 = vmatprep.subr.mxu0 0.0
    %229 = vmatpush1.msra.mxu0 %v111
    %230 = vmatprep.subr.mxu0 0.0
    %231 = vmatpush1.msra.mxu0 %v112
    %232 = vmatprep.mubr.f32.mxu0 %v77
    %233 = vmatmul.mubr.f32.gmra.mrb[0].mxu0 %v76
    %v234 = vpop.f32.mrb[0].mxu0
    %v235 = vadd.f32 %v166, %v234
    %v236 = vpop.f32.mrb[0].mxu0
    %237 = vdwg.mxu0
    %238 = vmatprep.subr.mxu0 0.0
    %239 = vmatpush1.msra.mxu0 %v113
    %240 = vmatprep.subr.mxu0 0.0
    %241 = vmatpush1.msra.mxu0 %v114
    %242 = vmatprep.subr.mxu0 0.0
    %243 = vmatpush1.msra.mxu0 %v115
    %244 = vmatprep.subr.mxu0 0.0
    %245 = vmatpush1.msra.mxu0 %v116
    %246 = vmatprep.subr.mxu0 0.0
    %247 = vmatpush1.msra.mxu0 %v117
    %248 = vmatprep.subr.mxu0 0.0
    %249 = vmatpush1.msra.mxu0 %v118
    %250 = vmatprep.subr.mxu0 0.0
    %251 = vmatpush1.msra.mxu0 %v119
    %252 = vmatprep.subr.mxu0 0.0
    %253 = vmatpush1.msra.mxu0 %v120
    %254 = vmatprep.subr.mxu0 0.0
    %255 = vmatpush1.msra.mxu0 %v121
    %256 = vmatprep.subr.mxu0 0.0
    %257 = vmatpush1.msra.mxu0 %v122
    %258 = vmatprep.subr.mxu0 0.0
    %259 = vmatpush1.msra.mxu0 %v123
    %260 = vmatprep.subr.mxu0 0.0
    %261 = vmatpush1.msra.mxu0 %v124
    %262 = vmatprep.subr.mxu0 0.0
    %263 = vmatpush1.msra.mxu0 %v125
    %264 = vmatprep.subr.mxu0 0.0
    %265 = vmatpush1.msra.mxu0 %v126
    %266 = vmatprep.subr.mxu0 0.0
    %267 = vmatpush1.msra.mxu0 %v127
    %268 = vmatprep.subr.mxu0 0.0
    %269 = vmatpush1.msra.mxu0 %v128
    %270 = vmatprep.subr.mxu0 0.0
    %271 = vmatpush1.msra.mxu0 %v129
    %272 = vmatprep.subr.mxu0 0.0
    %273 = vmatpush1.msra.mxu0 %v130
    %274 = vmatprep.subr.mxu0 0.0
    %275 = vmatpush1.msra.mxu0 %v131
    %276 = vmatprep.subr.mxu0 0.0
    %277 = vmatpush1.msra.mxu0 %v132
    %278 = vmatprep.subr.mxu0 0.0
    %279 = vmatpush1.msra.mxu0 %v133
    %280 = vmatprep.subr.mxu0 0.0
    %281 = vmatpush1.msra.mxu0 %v134
    %282 = vmatprep.subr.mxu0 0.0
    %283 = vmatpush1.msra.mxu0 %v135
    %284 = vmatprep.subr.mxu0 0.0
    %285 = vmatpush1.msra.mxu0 %v136
    %286 = vmatprep.subr.mxu0 0.0
    %287 = vmatpush1.msra.mxu0 %v137
    %288 = vmatprep.subr.mxu0 0.0
    %289 = vmatpush1.msra.mxu0 %v138
    %290 = vmatprep.subr.mxu0 0.0
    %291 = vmatpush1.msra.mxu0 %v139
    %292 = vmatprep.subr.mxu0 0.0
    %293 = vmatpush1.msra.mxu0 %v140
    %294 = vmatprep.subr.mxu0 0.0
    %295 = vmatpush1.msra.mxu0 %v141
    %296 = vmatprep.subr.mxu0 0.0
    %297 = vmatpush1.msra.mxu0 %v142
    %298 = vmatprep.subr.mxu0 0.0
    %299 = vmatpush1.msra.mxu0 %v143
    %300 = vmatprep.subr.mxu0 0.0
    %301 = vmatpush1.msra.mxu0 %v144
    %302 = vmatprep.mubr.f32.mxu0 %v79
    %303 = vmatmul.mubr.f32.gmra.mrb[0].mxu0 %v78
    %v304 = vpop.f32.mrb[0].mxu0
    %v305 = vadd.f32 %v235, %v304
    %v306 = vpop.f32.mrb[0].mxu0
    %307 = vdwg.mxu0
    %308 = vmatprep.subr.mxu0 0.0
    %309 = vmatpush1.msra.mxu0 %v145
    %310 = vmatprep.subr.mxu0 0.0
    %311 = vmatpush1.msra.mxu0 %v146
    %312 = vmatprep.subr.mxu0 0.0
    %313 = vmatpush1.msra.mxu0 %v147
    %314 = vmatprep.subr.mxu0 0.0
    %315 = vmatpush1.msra.mxu0 %v148
    %316 = vmatprep.subr.mxu0 0.0
    %317 = vmatpush1.msra.mxu0 %v149
    %318 = vmatprep.subr.mxu0 0.0
    %319 = vmatpush1.msra.mxu0 %v150
    %320 = vmatprep.subr.mxu0 0.0
    %321 = vmatpush1.msra.mxu0 %v151
    %322 = vmatprep.subr.mxu0 0.0
    %323 = vmatpush1.msra.mxu0 %v152
    %324 = vmatprep.subr.mxu0 0.0
    %325 = vmatpush1.msra.mxu0 %v153
    %326 = vmatprep.subr.mxu0 0.0
    %327 = vmatpush1.msra.mxu0 %v154
    %328 = vmatprep.subr.mxu0 0.0
    %329 = vmatpush1.msra.mxu0 %v155
    %330 = vmatprep.subr.mxu0 0.0
    %331 = vmatpush1.msra.mxu0 %v156
    %332 = vmatprep.subr.mxu0 0.0
    %333 = vmatpush1.msra.mxu0 %v157
    %334 = vmatprep.subr.mxu0 0.0
    %335 = vmatpush1.msra.mxu0 %v158
    %336 = vmatprep.subr.mxu0 0.0
    %337 = vmatpush1.msra.mxu0 %v159
    %338 = vmatprep.subr.mxu0 0.0
    %339 = vmatpush1.msra.mxu0 %v160
    %340 = vmatprep.subr.mxu0 0.0
    %341 = vmatpush1.msra.mxu0 0.0
    %342 = vmatprep.subr.mxu0 0.0
    %343 = vmatpush1.msra.mxu0 0.0
    %344 = vmatprep.subr.mxu0 0.0
    %345 = vmatpush1.msra.mxu0 0.0
    %346 = vmatprep.subr.mxu0 0.0
    %347 = vmatpush1.msra.mxu0 0.0
    %348 = vmatprep.subr.mxu0 0.0
    %349 = vmatpush1.msra.mxu0 0.0
    %350 = vmatprep.subr.mxu0 0.0
    %351 = vmatpush1.msra.mxu0 0.0
    %352 = vmatprep.subr.mxu0 0.0
    %353 = vmatpush1.msra.mxu0 0.0
    %354 = vmatprep.subr.mxu0 0.0
    %355 = vmatpush1.msra.mxu0 0.0
    %356 = vmatprep.subr.mxu0 0.0
    %357 = vmatpush1.msra.mxu0 0.0
    %358 = vmatprep.subr.mxu0 0.0
    %359 = vmatpush1.msra.mxu0 0.0
    %360 = vmatprep.subr.mxu0 0.0
    %361 = vmatpush1.msra.mxu0 0.0
    %362 = vmatprep.subr.mxu0 0.0
    %363 = vmatpush1.msra.mxu0 0.0
    %364 = vmatprep.subr.mxu0 0.0
    %365 = vmatpush1.msra.mxu0 0.0
    %366 = vmatprep.subr.mxu0 0.0
    %367 = vmatpush1.msra.mxu0 0.0
    %368 = vmatprep.subr.mxu0 0.0
    %369 = vmatpush1.msra.mxu0 0.0
    %370 = vmatprep.subr.mxu0 0.0
    %371 = vmatpush1.msra.mxu0 0.0
    %372 = vmatprep.mubr.f32.mxu0 0.0
    %373 = vmatmul.mubr.f32.gmra.mrb[0].mxu0 %v80
    %v374 = vpop.f32.mrb[0].mxu0
    %v375 = vadd.f32 %v305, %v374
    %v376 = vpop.f32.mrb[0].mxu0
    %377 = vdwg.mxu0
    %v378 = vld [vmem:[%s3] sm:$0x1]
    %v379 = vld [vmem:[%s4] sm:$0x1]
    %v380 = vadd.f32 %v378, %v379
    %v381 = vld [vmem:[%s4 + $0x1] sm:$0xf]
    %vm382 = vcmask 253952
    %383 = vst.msk [vmem:[#allocation2] sm:$0x1] %vm382, %v380
    %v384 = vadd.f32 %v375, %v381
    %vm385 = vcmask 257024
    %386 = vst.msk [vmem:[#allocation2 + $0x1] sm:$0xf] %vm385, %v384
    %387 = vst.msk [vmem:[#allocation2 + $0x5] sm:$0x1] %vm382, %v380
    %v389 = vrot.slane %v381, 4
    %v391 = vadd.f32 %v375, %v389
    %vm392 = vcmask 261124
    %393 = vst.msk [vmem:[#allocation2 + $0x2] sm:$0xf0] %vm392, %v391
    %v394 = vld [vmem:[#allocation2] sm:$0xff]
    %v395 = vld [vmem:[#allocation2 + $0x8] sm:$0x3]
    %v396 = vld [vmem:[%s5] sm:$0xff]
    %v397 = vld [vmem:[%s5 + $0x8] sm:$0x3]
    %v398 = vld [vmem:[%s6] sm:$0x1]
    %v399 = vld [vmem:[%s7] sm:$0x1]
    %vm400 = vcmask 261120
    %v401 = vsel %vm400, %v394, 0.0
    %402 = vadd.xlane.f32.xlu0 %v401
    %v403 = vpop.xlane.xlu0 %402
    %vm404 = vcmask 254976
    %v405 = vsel %vm404, %v395, 0.0
    %406 = vadd.xlane.f32.xlu0 %v405
    %v407 = vpop.xlane.xlu0 %406
    %v408 = vrcp.pop 32.0
    %v409 = vmul.f32 %v403, %v408
    %v410 = vmul.f32 %v407, %v408
    %v411 = vsub.f32 %v394, %v409
    %v412 = vsub.f32 %v395, %v410
    %v413 = vmul.f32 %v411, %v411
    %v414 = vmul.f32 %v412, %v412
    %v415 = vsel %vm400, %v413, 0.0
    %416 = vadd.xlane.f32.xlu0 %v415
    %v417 = vpop.xlane.xlu0 %416
    %v418 = vsel %vm404, %v414, 0.0
    %419 = vadd.xlane.f32.xlu0 %v418
    %v420 = vpop.xlane.xlu0 %419
    %v421 = vmul.f32 %v417, %v408
    %v422 = vmul.f32 %v420, %v408
    %v423 = vadd.f32 %v421, 1e-06
    %v424 = vadd.f32 %v422, 1e-06
    %v425 = vrsqrt.pop %v423
    %v426 = vrsqrt.pop %v424
    %v427 = vmul.f32 %v411, %v425
    %v428 = vmul.f32 %v412, %v426
    %v430 = vlaneseq
    %v431 = vshrl.u32 %v430, 7
    %v432 = vsub.s32 0, %v431
    %v433 = vrot.slane %v398, %v432
    %v435 = vmul.f32 %v427, %v433
    %v436 = vmul.f32 %v428, %v433
    %v438 = vlaneseq
    %v439 = vshrl.u32 %v438, 7
    %v440 = vsub.s32 0, %v439
    %v441 = vrot.slane %v399, %v440
    %v443 = vadd.f32 %v435, %v441
    %v444 = vadd.f32 %v436, %v441
    %v445 = vld [vmem:[%s8] sm:$0xff]
    %v446 = vld [vmem:[%s8 + $0x8] sm:$0xff]
    %v447 = vld [vmem:[%s8 + $0x10] sm:$0xff]
    %v448 = vld [vmem:[%s8 + $0x18] sm:$0xff]
    %v449 = vld [vmem:[%s9] sm:$0x1]
    %v451 = vlaneseq
    %v452 = vshrl.u32 %v451, 7
    %v453 = vsub.s32 0, %v452
    %v454 = vrot.slane %v449, %v453
    %v457 = vsel %vm400, %v443, 0
    %v460 = vsel %vm400, %v444, 0
    %462 = vmatprep.subr.mxu0 0.0
    %463 = vmatpush1.msra.mxu0 %v445
    %464 = vmatprep.subr.mxu0 0.0
    %465 = vmatpush1.msra.mxu0 %v446
    %466 = vmatprep.subr.mxu0 0.0
    %467 = vmatpush1.msra.mxu0 %v447
    %468 = vmatprep.subr.mxu0 0.0
    %469 = vmatpush1.msra.mxu0 %v448
    %470 = vmatprep.subr.mxu0 0.0
    %471 = vmatpush1.msra.mxu0 0.0
    %472 = vmatprep.subr.mxu0 0.0
    %473 = vmatpush1.msra.mxu0 0.0
    %474 = vmatprep.subr.mxu0 0.0
    %475 = vmatpush1.msra.mxu0 0.0
    %476 = vmatprep.subr.mxu0 0.0
    %477 = vmatpush1.msra.mxu0 0.0
    %478 = vmatprep.subr.mxu0 0.0
    %479 = vmatpush1.msra.mxu0 0.0
    %480 = vmatprep.subr.mxu0 0.0
    %481 = vmatpush1.msra.mxu0 0.0
    %482 = vmatprep.subr.mxu0 0.0
    %483 = vmatpush1.msra.mxu0 0.0
    %484 = vmatprep.subr.mxu0 0.0
    %485 = vmatpush1.msra.mxu0 0.0
    %486 = vmatprep.subr.mxu0 0.0
    %487 = vmatpush1.msra.mxu0 0.0
    %488 = vmatprep.subr.mxu0 0.0
    %489 = vmatpush1.msra.mxu0 0.0
    %490 = vmatprep.subr.mxu0 0.0
    %491 = vmatpush1.msra.mxu0 0.0
    %492 = vmatprep.subr.mxu0 0.0
    %493 = vmatpush1.msra.mxu0 0.0
    %494 = vmatprep.subr.mxu0 0.0
    %495 = vmatpush1.msra.mxu0 0.0
    %496 = vmatprep.subr.mxu0 0.0
    %497 = vmatpush1.msra.mxu0 0.0
    %498 = vmatprep.subr.mxu0 0.0
    %499 = vmatpush1.msra.mxu0 0.0
    %500 = vmatprep.subr.mxu0 0.0
    %501 = vmatpush1.msra.mxu0 0.0
    %502 = vmatprep.subr.mxu0 0.0
    %503 = vmatpush1.msra.mxu0 0.0
    %504 = vmatprep.subr.mxu0 0.0
    %505 = vmatpush1.msra.mxu0 0.0
    %506 = vmatprep.subr.mxu0 0.0
    %507 = vmatpush1.msra.mxu0 0.0
    %508 = vmatprep.subr.mxu0 0.0
    %509 = vmatpush1.msra.mxu0 0.0
    %510 = vmatprep.subr.mxu0 0.0
    %511 = vmatpush1.msra.mxu0 0.0
    %512 = vmatprep.subr.mxu0 0.0
    %513 = vmatpush1.msra.mxu0 0.0
    %514 = vmatprep.subr.mxu0 0.0
    %515 = vmatpush1.msra.mxu0 0.0
    %516 = vmatprep.subr.mxu0 0.0
    %517 = vmatpush1.msra.mxu0 0.0
    %518 = vmatprep.subr.mxu0 0.0
    %519 = vmatpush1.msra.mxu0 0.0
    %520 = vmatprep.subr.mxu0 0.0
    %521 = vmatpush1.msra.mxu0 0.0
    %522 = vmatprep.subr.mxu0 0.0
    %523 = vmatpush1.msra.mxu0 0.0
    %524 = vmatprep.subr.mxu0 0.0
    %525 = vmatpush1.msra.mxu0 0.0
    %526 = vmatprep.mubr.f32.mxu0 0.0
    %527 = vmatmul.mubr.f32.gmra.mrb[0].mxu0 %v457
    %v528 = vpop.f32.mrb[0].mxu0
    %v529 = vadd.f32 %v454, %v528
    %v530 = vpop.f32.mrb[0].mxu0
    %531 = vmatprep.mubr.f32.mxu0 0.0
    %532 = vmatmul.mubr.f32.gmra.mrb[0].mxu0 %v460
    %v533 = vpop.f32.mrb[0].mxu0
    %v534 = vadd.f32 %v454, %v533
    %v535 = vpop.f32.mrb[0].mxu0
    %536 = vdwg.mxu0
    %v537 = vld [vmem:[%s10] sm:$0xff]
    %v538 = vld [vmem:[%s10 + $0x8] sm:$0xff]
    %v539 = vld [vmem:[%s10 + $0x10] sm:$0xff]
    %v540 = vld [vmem:[%s10 + $0x18] sm:$0xff]
    %543 = vrot.lane.b32.xlu0 %v529, 96
    %v544 = vpop.permute.xlu0 %543
    %545 = vrot.lane.b32.xlu0 %v534, 96
    %v546 = vpop.permute.xlu0 %545
    %vm547 = vcmask 64512
    %v548 = vsel %vm547, %v529, 0
    %v550 = vsel %vm547, %v534, 0
    %v552 = vsel %vm547, %v544, 0
    %v554 = vsel %vm547, %v546, 0
    %556 = vmatprep.subr.mxu0 0.0
    %557 = vmatpush1.xpose.msra.mxu0 %v552
    %558 = vmatprep.subr.mxu0 0.0
    %559 = vmatpush1.xpose.msra.mxu0 %v554
    %560 = vmatprep.subr.mxu0 0.0
    %561 = vmatpush1.xpose.msra.mxu0 0.0
    %562 = vmatprep.subr.mxu0 0.0
    %563 = vmatpush1.xpose.msra.mxu0 0.0
    %564 = vmatprep.subr.mxu0 0.0
    %565 = vmatpush1.xpose.msra.mxu0 0.0
    %566 = vmatprep.subr.mxu0 0.0
    %567 = vmatpush1.xpose.msra.mxu0 0.0
    %568 = vmatprep.subr.mxu0 0.0
    %569 = vmatpush1.xpose.msra.mxu0 0.0
    %570 = vmatprep.subr.mxu0 0.0
    %571 = vmatpush1.xpose.msra.mxu0 0.0
    %572 = vmatprep.subr.mxu0 0.0
    %573 = vmatpush1.xpose.msra.mxu0 0.0
    %574 = vmatprep.subr.mxu0 0.0
    %575 = vmatpush1.xpose.msra.mxu0 0.0
    %576 = vmatprep.subr.mxu0 0.0
    %577 = vmatpush1.xpose.msra.mxu0 0.0
    %578 = vmatprep.subr.mxu0 0.0
    %579 = vmatpush1.xpose.msra.mxu0 0.0
    %580 = vmatprep.subr.mxu0 0.0
    %581 = vmatpush1.xpose.msra.mxu0 0.0
    %582 = vmatprep.subr.mxu0 0.0
    %583 = vmatpush1.xpose.msra.mxu0 0.0
    %584 = vmatprep.subr.mxu0 0.0
    %585 = vmatpush1.xpose.msra.mxu0 0.0
    %586 = vmatprep.subr.mxu0 0.0
    %587 = vmatpush1.xpose.msra.mxu0 0.0
    %588 = vmatprep.subr.mxu0 0.0
    %589 = vmatpush1.xpose.msra.mxu0 0.0
    %590 = vmatprep.subr.mxu0 0.0
    %591 = vmatpush1.xpose.msra.mxu0 0.0
    %592 = vmatprep.subr.mxu0 0.0
    %593 = vmatpush1.xpose.msra.mxu0 0.0
    %594 = vmatprep.subr.mxu0 0.0
    %595 = vmatpush1.xpose.msra.mxu0 0.0
    %596 = vmatprep.subr.mxu0 0.0
    %597 = vmatpush1.xpose.msra.mxu0 0.0
    %598 = vmatprep.subr.mxu0 0.0
    %599 = vmatpush1.xpose.msra.mxu0 0.0
    %600 = vmatprep.subr.mxu0 0.0
    %601 = vmatpush1.xpose.msra.mxu0 0.0
    %602 = vmatprep.subr.mxu0 0.0
    %603 = vmatpush1.xpose.msra.mxu0 0.0
    %604 = vmatprep.subr.mxu0 0.0
    %605 = vmatpush1.xpose.msra.mxu0 0.0
    %606 = vmatprep.subr.mxu0 0.0
    %607 = vmatpush1.xpose.msra.mxu0 0.0
    %608 = vmatprep.subr.mxu0 0.0
    %609 = vmatpush1.xpose.msra.mxu0 0.0
    %610 = vmatprep.subr.mxu0 0.0
    %611 = vmatpush1.xpose.msra.mxu0 0.0
    %612 = vmatprep.subr.mxu0 0.0
    %613 = vmatpush1.xpose.msra.mxu0 0.0
    %614 = vmatprep.subr.mxu0 0.0
    %615 = vmatpush1.xpose.msra.mxu0 0.0
    %616 = vmatprep.subr.mxu0 0.0
    %617 = vmatpush1.xpose.msra.mxu0 0.0
    %618 = vmatprep.subr.mxu0 0.0
    %619 = vmatpush1.xpose.msra.mxu0 0.0
    %620 = vmatprep.mubr.f32.mxu0 0.0
    %621 = vmatmul.mubr.f32.gmra.mrb[0].mxu0 %v548
    %v622 = vpop.f32.mrb[0].mxu0
    %v623 = vadd.f32 0.0, %v622
    %v624 = vpop.f32.mrb[0].mxu0
    %625 = vmatprep.mubr.f32.mxu0 0.0
    %626 = vmatmul.mubr.f32.gmra.mrb[0].mxu0 %v550
    %v627 = vpop.f32.mrb[0].mxu0
    %v628 = vadd.f32 0.0, %v627
    %v629 = vpop.f32.mrb[0].mxu0
    %630 = vdwg.mxu0
    %v631 = vmul.f32 %v623, 0.35355338
    %v632 = vmul.f32 %v628, 0.35355338
    %v633 = vadd.f32 %v631, %v396
    %v634 = vadd.f32 %v632, %v397
    %vm635 = vcmask 80896
    %v636 = vsel %vm635, %v633, -inf
    %637 = vmax.xlane.f32.xlu0 %v636
    %v638 = vpop.xlane.xlu0 %637
    %vm639 = vcmask 74752
    %v640 = vsel %vm639, %v634, -inf
    %641 = vmax.xlane.f32.xlu0 %v640
    %v642 = vpop.xlane.xlu0 %641
    %v643 = vsub.f32 %v633, %v638
    %v644 = vsub.f32 %v634, %v642
    %v645 = vmul.f32 %v643, 1.442695
    %v646 = vpow.pop %v645
    %v647 = vmul.f32 %v644, 1.442695
    %v648 = vpow.pop %v647
    %v649 = vsel %vm635, %v646, 0.0
    %650 = vadd.xlane.f32.xlu0 %v649
    %v651 = vpop.xlane.xlu0 %650
    %v652 = vsel %vm639, %v648, 0.0
    %653 = vadd.xlane.f32.xlu0 %v652
    %v654 = vpop.xlane.xlu0 %653
    %v655 = vrcp.pop %v651
    %v656 = vrcp.pop %v654
    %v657 = vmul.f32 %v646, %v655
    %v658 = vmul.f32 %v648, %v656
    %659 = vrot.lane.b32.xlu0 %v529, 64
    %v660 = vpop.permute.xlu0 %659
    %661 = vrot.lane.b32.xlu0 %v534, 64
    %v662 = vpop.permute.xlu0 %661
    %v665 = vsel %vm635, %v657, 0
    %v668 = vsel %vm635, %v658, 0
    %vm670 = vcmask 1041408
    %v671 = vsel %vm670, %v662, 0
    %673 = vmatprep.subr.mxu0 0.0
    %674 = vmatpush1.msra.mxu0 %v660
    %675 = vmatprep.subr.mxu0 0.0
    %676 = vmatpush1.msra.mxu0 %v671
    %677 = vmatprep.subr.mxu0 0.0
    %678 = vmatpush1.msra.mxu0 0.0
    %679 = vmatprep.subr.mxu0 0.0
    %680 = vmatpush1.msra.mxu0 0.0
    %681 = vmatprep.subr.mxu0 0.0
    %682 = vmatpush1.msra.mxu0 0.0
    %683 = vmatprep.subr.mxu0 0.0
    %684 = vmatpush1.msra.mxu0 0.0
    %685 = vmatprep.subr.mxu0 0.0
    %686 = vmatpush1.msra.mxu0 0.0
    %687 = vmatprep.subr.mxu0 0.0
    %688 = vmatpush1.msra.mxu0 0.0
    %689 = vmatprep.subr.mxu0 0.0
    %690 = vmatpush1.msra.mxu0 0.0
    %691 = vmatprep.subr.mxu0 0.0
    %692 = vmatpush1.msra.mxu0 0.0
    %693 = vmatprep.subr.mxu0 0.0
    %694 = vmatpush1.msra.mxu0 0.0
    %695 = vmatprep.subr.mxu0 0.0
    %696 = vmatpush1.msra.mxu0 0.0
    %697 = vmatprep.subr.mxu0 0.0
    %698 = vmatpush1.msra.mxu0 0.0
    %699 = vmatprep.subr.mxu0 0.0
    %700 = vmatpush1.msra.mxu0 0.0
    %701 = vmatprep.subr.mxu0 0.0
    %702 = vmatpush1.msra.mxu0 0.0
    %703 = vmatprep.subr.mxu0 0.0
    %704 = vmatpush1.msra.mxu0 0.0
    %705 = vmatprep.subr.mxu0 0.0
    %706 = vmatpush1.msra.mxu0 0.0
    %707 = vmatprep.subr.mxu0 0.0
    %708 = vmatpush1.msra.mxu0 0.0
    %709 = vmatprep.subr.mxu0 0.0
    %710 = vmatpush1.msra.mxu0 0.0
    %711 = vmatprep.subr.mxu0 0.0
    %712 = vmatpush1.msra.mxu0 0.0
    %713 = vmatprep.subr.mxu0 0.0
    %714 = vmatpush1.msra.mxu0 0.0
    %715 = vmatprep.subr.mxu0 0.0
    %716 = vmatpush1.msra.mxu0 0.0
    %717 = vmatprep.subr.mxu0 0.0
    %718 = vmatpush1.msra.mxu0 0.0
    %719 = vmatprep.subr.mxu0 0.0
    %720 = vmatpush1.msra.mxu0 0.0
    %721 = vmatprep.subr.mxu0 0.0
    %722 = vmatpush1.msra.mxu0 0.0
    %723 = vmatprep.subr.mxu0 0.0
    %724 = vmatpush1.msra.mxu0 0.0
    %725 = vmatprep.subr.mxu0 0.0
    %726 = vmatpush1.msra.mxu0 0.0
    %727 = vmatprep.subr.mxu0 0.0
    %728 = vmatpush1.msra.mxu0 0.0
    %729 = vmatprep.subr.mxu0 0.0
    %730 = vmatpush1.msra.mxu0 0.0
    %731 = vmatprep.subr.mxu0 0.0
    %732 = vmatpush1.msra.mxu0 0.0
    %733 = vmatprep.subr.mxu0 0.0
    %734 = vmatpush1.msra.mxu0 0.0
    %735 = vmatprep.subr.mxu0 0.0
    %736 = vmatpush1.msra.mxu0 0.0
    %737 = vmatprep.mubr.f32.mxu0 0.0
    %738 = vmatmul.mubr.f32.gmra.mrb[0].mxu0 %v665
    %v739 = vpop.f32.mrb[0].mxu0
    %v740 = vadd.f32 0.0, %v739
    %v741 = vpop.f32.mrb[0].mxu0
    %742 = vmatprep.mubr.f32.mxu0 0.0
    %743 = vmatmul.mubr.f32.gmra.mrb[0].mxu0 %v668
    %v744 = vpop.f32.mrb[0].mxu0
    %v745 = vadd.f32 0.0, %v744
    %v746 = vpop.f32.mrb[0].mxu0
    %747 = vdwg.mxu0
    %748 = vrot.lane.b32.xlu0 %v529, 120
    %v749 = vpop.permute.xlu0 %748
    %750 = vrot.lane.b32.xlu0 %v534, 120
    %v751 = vpop.permute.xlu0 %750
    %752 = vrot.lane.b32.xlu0 %v529, 88
    %v753 = vpop.permute.xlu0 %752
    %754 = vrot.lane.b32.xlu0 %v534, 88
    %v755 = vpop.permute.xlu0 %754
    %v756 = vsel %vm547, %v749, 0
    %v758 = vsel %vm547, %v751, 0
    %v760 = vsel %vm547, %v753, 0
    %v762 = vsel %vm547, %v755, 0
    %764 = vmatprep.subr.mxu0 0.0
    %765 = vmatpush1.xpose.msra.mxu0 %v760
    %766 = vmatprep.subr.mxu0 0.0
    %767 = vmatpush1.xpose.msra.mxu0 %v762
    %768 = vmatprep.subr.mxu0 0.0
    %769 = vmatpush1.xpose.msra.mxu0 0.0
    %770 = vmatprep.subr.mxu0 0.0
    %771 = vmatpush1.xpose.msra.mxu0 0.0
    %772 = vmatprep.subr.mxu0 0.0
    %773 = vmatpush1.xpose.msra.mxu0 0.0
    %774 = vmatprep.subr.mxu0 0.0
    %775 = vmatpush1.xpose.msra.mxu0 0.0
    %776 = vmatprep.subr.mxu0 0.0
    %777 = vmatpush1.xpose.msra.mxu0 0.0
    %778 = vmatprep.subr.mxu0 0.0
    %779 = vmatpush1.xpose.msra.mxu0 0.0
    %780 = vmatprep.subr.mxu0 0.0
    %781 = vmatpush1.xpose.msra.mxu0 0.0
    %782 = vmatprep.subr.mxu0 0.0
    %783 = vmatpush1.xpose.msra.mxu0 0.0
    %784 = vmatprep.subr.mxu0 0.0
    %785 = vmatpush1.xpose.msra.mxu0 0.0
    %786 = vmatprep.subr.mxu0 0.0
    %787 = vmatpush1.xpose.msra.mxu0 0.0
    %788 = vmatprep.subr.mxu0 0.0
    %789 = vmatpush1.xpose.msra.mxu0 0.0
    %790 = vmatprep.subr.mxu0 0.0
    %791 = vmatpush1.xpose.msra.mxu0 0.0
    %792 = vmatprep.subr.mxu0 0.0
    %793 = vmatpush1.xpose.msra.mxu0 0.0
    %794 = vmatprep.subr.mxu0 0.0
    %795 = vmatpush1.xpose.msra.mxu0 0.0
    %796 = vmatprep.subr.mxu0 0.0
    %797 = vmatpush1.xpose.msra.mxu0 0.0
    %798 = vmatprep.subr.mxu0 0.0
    %799 = vmatpush1.xpose.msra.mxu0 0.0
    %800 = vmatprep.subr.mxu0 0.0
    %801 = vmatpush1.xpose.msra.mxu0 0.0
    %802 = vmatprep.subr.mxu0 0.0
    %803 = vmatpush1.xpose.msra.mxu0 0.0
    %804 = vmatprep.subr.mxu0 0.0
    %805 = vmatpush1.xpose.msra.mxu0 0.0
    %806 = vmatprep.subr.mxu0 0.0
    %807 = vmatpush1.xpose.msra.mxu0 0.0
    %808 = vmatprep.subr.mxu0 0.0
    %809 = vmatpush1.xpose.msra.mxu0 0.0
    %810 = vmatprep.subr.mxu0 0.0
    %811 = vmatpush1.xpose.msra.mxu0 0.0
    %812 = vmatprep.subr.mxu0 0.0
    %813 = vmatpush1.xpose.msra.mxu0 0.0
    %814 = vmatprep.subr.mxu0 0.0
    %815 = vmatpush1.xpose.msra.mxu0 0.0
    %816 = vmatprep.subr.mxu0 0.0
    %817 = vmatpush1.xpose.msra.mxu0 0.0
    %818 = vmatprep.subr.mxu0 0.0
    %819 = vmatpush1.xpose.msra.mxu0 0.0
    %820 = vmatprep.subr.mxu0 0.0
    %821 = vmatpush1.xpose.msra.mxu0 0.0
    %822 = vmatprep.subr.mxu0 0.0
    %823 = vmatpush1.xpose.msra.mxu0 0.0
    %824 = vmatprep.subr.mxu0 0.0
    %825 = vmatpush1.xpose.msra.mxu0 0.0
    %826 = vmatprep.subr.mxu0 0.0
    %827 = vmatpush1.xpose.msra.mxu0 0.0
    %828 = vmatprep.mubr.f32.mxu0 0.0
    %829 = vmatmul.mubr.f32.gmra.mrb[0].mxu0 %v756
    %v830 = vpop.f32.mrb[0].mxu0
    %v831 = vadd.f32 0.0, %v830
    %v832 = vpop.f32.mrb[0].mxu0
    %833 = vmatprep.mubr.f32.mxu0 0.0
    %834 = vmatmul.mubr.f32.gmra.mrb[0].mxu0 %v758
    %v835 = vpop.f32.mrb[0].mxu0
    %v836 = vadd.f32 0.0, %v835
    %v837 = vpop.f32.mrb[0].mxu0
    %838 = vdwg.mxu0
    %v839 = vmul.f32 %v831, 0.35355338
    %v840 = vmul.f32 %v836, 0.35355338
    %v841 = vadd.f32 %v839, %v396
    %v842 = vadd.f32 %v840, %v397
    %v843 = vsel %vm635, %v841, -inf
    %844 = vmax.xlane.f32.xlu0 %v843
    %v845 = vpop.xlane.xlu0 %844
    %v846 = vsel %vm639, %v842, -inf
    %847 = vmax.xlane.f32.xlu0 %v846
    %v848 = vpop.xlane.xlu0 %847
    %v849 = vsub.f32 %v841, %v845
    %v850 = vsub.f32 %v842, %v848
    %v851 = vmul.f32 %v849, 1.442695
    %v852 = vpow.pop %v851
    %v853 = vmul.f32 %v850, 1.442695
    %v854 = vpow.pop %v853
    %v855 = vsel %vm635, %v852, 0.0
    %856 = vadd.xlane.f32.xlu0 %v855
    %v857 = vpop.xlane.xlu0 %856
    %v858 = vsel %vm639, %v854, 0.0
    %859 = vadd.xlane.f32.xlu0 %v858
    %v860 = vpop.xlane.xlu0 %859
    %v861 = vrcp.pop %v857
    %v862 = vrcp.pop %v860
    %v863 = vmul.f32 %v852, %v861
    %v864 = vmul.f32 %v854, %v862
    %865 = vrot.lane.b32.xlu0 %v529, 56
    %v866 = vpop.permute.xlu0 %865
    %867 = vrot.lane.b32.xlu0 %v534, 56
    %v868 = vpop.permute.xlu0 %867
    %v871 = vsel %vm635, %v863, 0
    %v874 = vsel %vm635, %v864, 0
    %v876 = vsel %vm670, %v868, 0
    %878 = vmatprep.subr.mxu0 0.0
    %879 = vmatpush1.msra.mxu0 %v866
    %880 = vmatprep.subr.mxu0 0.0
    %881 = vmatpush1.msra.mxu0 %v876
    %882 = vmatprep.subr.mxu0 0.0
    %883 = vmatpush1.msra.mxu0 0.0
    %884 = vmatprep.subr.mxu0 0.0
    %885 = vmatpush1.msra.mxu0 0.0
    %886 = vmatprep.subr.mxu0 0.0
    %887 = vmatpush1.msra.mxu0 0.0
    %888 = vmatprep.subr.mxu0 0.0
    %889 = vmatpush1.msra.mxu0 0.0
    %890 = vmatprep.subr.mxu0 0.0
    %891 = vmatpush1.msra.mxu0 0.0
    %892 = vmatprep.subr.mxu0 0.0
    %893 = vmatpush1.msra.mxu0 0.0
    %894 = vmatprep.subr.mxu0 0.0
    %895 = vmatpush1.msra.mxu0 0.0
    %896 = vmatprep.subr.mxu0 0.0
    %897 = vmatpush1.msra.mxu0 0.0
    %898 = vmatprep.subr.mxu0 0.0
    %899 = vmatpush1.msra.mxu0 0.0
    %900 = vmatprep.subr.mxu0 0.0
    %901 = vmatpush1.msra.mxu0 0.0
    %902 = vmatprep.subr.mxu0 0.0
    %903 = vmatpush1.msra.mxu0 0.0
    %904 = vmatprep.subr.mxu0 0.0
    %905 = vmatpush1.msra.mxu0 0.0
    %906 = vmatprep.subr.mxu0 0.0
    %907 = vmatpush1.msra.mxu0 0.0
    %908 = vmatprep.subr.mxu0 0.0
    %909 = vmatpush1.msra.mxu0 0.0
    %910 = vmatprep.subr.mxu0 0.0
    %911 = vmatpush1.msra.mxu0 0.0
    %912 = vmatprep.subr.mxu0 0.0
    %913 = vmatpush1.msra.mxu0 0.0
    %914 = vmatprep.subr.mxu0 0.0
    %915 = vmatpush1.msra.mxu0 0.0
    %916 = vmatprep.subr.mxu0 0.0
    %917 = vmatpush1.msra.mxu0 0.0
    %918 = vmatprep.subr.mxu0 0.0
    %919 = vmatpush1.msra.mxu0 0.0
    %920 = vmatprep.subr.mxu0 0.0
    %921 = vmatpush1.msra.mxu0 0.0
    %922 = vmatprep.subr.mxu0 0.0
    %923 = vmatpush1.msra.mxu0 0.0
    %924 = vmatprep.subr.mxu0 0.0
    %925 = vmatpush1.msra.mxu0 0.0
    %926 = vmatprep.subr.mxu0 0.0
    %927 = vmatpush1.msra.mxu0 0.0
    %928 = vmatprep.subr.mxu0 0.0
    %929 = vmatpush1.msra.mxu0 0.0
    %930 = vmatprep.subr.mxu0 0.0
    %931 = vmatpush1.msra.mxu0 0.0
    %932 = vmatprep.subr.mxu0 0.0
    %933 = vmatpush1.msra.mxu0 0.0
    %934 = vmatprep.subr.mxu0 0.0
    %935 = vmatpush1.msra.mxu0 0.0
    %936 = vmatprep.subr.mxu0 0.0
    %937 = vmatpush1.msra.mxu0 0.0
    %938 = vmatprep.subr.mxu0 0.0
    %939 = vmatpush1.msra.mxu0 0.0
    %940 = vmatprep.subr.mxu0 0.0
    %941 = vmatpush1.msra.mxu0 0.0
    %942 = vmatprep.mubr.f32.mxu0 0.0
    %943 = vmatmul.mubr.f32.gmra.mrb[0].mxu0 %v871
    %v944 = vpop.f32.mrb[0].mxu0
    %v945 = vadd.f32 0.0, %v944
    %v946 = vpop.f32.mrb[0].mxu0
    %947 = vmatprep.mubr.f32.mxu0 0.0
    %948 = vmatmul.mubr.f32.gmra.mrb[0].mxu0 %v874
    %v949 = vpop.f32.mrb[0].mxu0
    %v950 = vadd.f32 0.0, %v949
    %v951 = vpop.f32.mrb[0].mxu0
    %952 = vdwg.mxu0
    %v954 = vsel %vm547, %v945, 0
    %v957 = vsel %vm547, %v950, 0
    %959 = vmatprep.subr.mxu0 0.0
    %960 = vmatpush1.msra.mxu0 %v538
    %961 = vmatprep.subr.mxu0 0.0
    %962 = vmatpush1.msra.mxu0 0.0
    %963 = vmatprep.subr.mxu0 0.0
    %964 = vmatpush1.msra.mxu0 0.0
    %965 = vmatprep.subr.mxu0 0.0
    %966 = vmatpush1.msra.mxu0 0.0
    %967 = vmatprep.subr.mxu0 0.0
    %968 = vmatpush1.msra.mxu0 0.0
    %969 = vmatprep.subr.mxu0 0.0
    %970 = vmatpush1.msra.mxu0 0.0
    %971 = vmatprep.subr.mxu0 0.0
    %972 = vmatpush1.msra.mxu0 0.0
    %973 = vmatprep.subr.mxu0 0.0
    %974 = vmatpush1.msra.mxu0 0.0
    %975 = vmatprep.subr.mxu0 0.0
    %976 = vmatpush1.msra.mxu0 0.0
    %977 = vmatprep.subr.mxu0 0.0
    %978 = vmatpush1.msra.mxu0 0.0
    %979 = vmatprep.subr.mxu0 0.0
    %980 = vmatpush1.msra.mxu0 0.0
    %981 = vmatprep.subr.mxu0 0.0
    %982 = vmatpush1.msra.mxu0 0.0
    %983 = vmatprep.subr.mxu0 0.0
    %984 = vmatpush1.msra.mxu0 0.0
    %985 = vmatprep.subr.mxu0 0.0
    %986 = vmatpush1.msra.mxu0 0.0
    %987 = vmatprep.subr.mxu0 0.0
    %988 = vmatpush1.msra.mxu0 0.0
    %989 = vmatprep.subr.mxu0 0.0
    %990 = vmatpush1.msra.mxu0 0.0
    %991 = vmatprep.subr.mxu0 0.0
    %992 = vmatpush1.msra.mxu0 0.0
    %993 = vmatprep.subr.mxu0 0.0
    %994 = vmatpush1.msra.mxu0 0.0
    %995 = vmatprep.subr.mxu0 0.0
    %996 = vmatpush1.msra.mxu0 0.0
    %997 = vmatprep.subr.mxu0 0.0
    %998 = vmatpush1.msra.mxu0 0.0
    %999 = vmatprep.subr.mxu0 0.0
    %1000 = vmatpush1.msra.mxu0 0.0
    %1001 = vmatprep.subr.mxu0 0.0
    %1002 = vmatpush1.msra.mxu0 0.0
    %1003 = vmatprep.subr.mxu0 0.0
    %1004 = vmatpush1.msra.mxu0 0.0
    %1005 = vmatprep.subr.mxu0 0.0
    %1006 = vmatpush1.msra.mxu0 0.0
    %1007 = vmatprep.subr.mxu0 0.0
    %1008 = vmatpush1.msra.mxu0 0.0
    %1009 = vmatprep.subr.mxu0 0.0
    %1010 = vmatpush1.msra.mxu0 0.0
    %1011 = vmatprep.subr.mxu0 0.0
    %1012 = vmatpush1.msra.mxu0 0.0
    %1013 = vmatprep.subr.mxu0 0.0
    %1014 = vmatpush1.msra.mxu0 0.0
    %1015 = vmatprep.subr.mxu0 0.0
    %1016 = vmatpush1.msra.mxu0 0.0
    %1017 = vmatprep.subr.mxu0 0.0
    %1018 = vmatpush1.msra.mxu0 0.0
    %1019 = vmatprep.subr.mxu0 0.0
    %1020 = vmatpush1.msra.mxu0 0.0
    %1021 = vmatprep.subr.mxu0 0.0
    %1022 = vmatpush1.msra.mxu0 0.0
    %1023 = vmatprep.mubr.f32.mxu0 0.0
    %1024 = vmatmul.mubr.f32.gmra.mrb[0].mxu0 %v954
    %v1025 = vpop.f32.mrb[0].mxu0
    %v1026 = vadd.f32 0.0, %v1025
    %v1027 = vpop.f32.mrb[0].mxu0
    %1028 = vmatprep.mubr.f32.mxu0 0.0
    %1029 = vmatmul.mubr.f32.gmra.mrb[0].mxu0 %v957
    %v1030 = vpop.f32.mrb[0].mxu0
    %v1031 = vadd.f32 0.0, %v1030
    %v1032 = vpop.f32.mrb[0].mxu0
    %1033 = vdwg.mxu0
    %v1035 = vsel %vm547, %v740, 0
    %v1038 = vsel %vm547, %v745, 0
    %1040 = vmatprep.subr.mxu0 0.0
    %1041 = vmatpush1.msra.mxu0 %v537
    %1042 = vmatprep.subr.mxu0 0.0
    %1043 = vmatpush1.msra.mxu0 0.0
    %1044 = vmatprep.subr.mxu0 0.0
    %1045 = vmatpush1.msra.mxu0 0.0
    %1046 = vmatprep.subr.mxu0 0.0
    %1047 = vmatpush1.msra.mxu0 0.0
    %1048 = vmatprep.subr.mxu0 0.0
    %1049 = vmatpush1.msra.mxu0 0.0
    %1050 = vmatprep.subr.mxu0 0.0
    %1051 = vmatpush1.msra.mxu0 0.0
    %1052 = vmatprep.subr.mxu0 0.0
    %1053 = vmatpush1.msra.mxu0 0.0
    %1054 = vmatprep.subr.mxu0 0.0
    %1055 = vmatpush1.msra.mxu0 0.0
    %1056 = vmatprep.subr.mxu0 0.0
    %1057 = vmatpush1.msra.mxu0 0.0
    %1058 = vmatprep.subr.mxu0 0.0
    %1059 = vmatpush1.msra.mxu0 0.0
    %1060 = vmatprep.subr.mxu0 0.0
    %1061 = vmatpush1.msra.mxu0 0.0
    %1062 = vmatprep.subr.mxu0 0.0
    %1063 = vmatpush1.msra.mxu0 0.0
    %1064 = vmatprep.subr.mxu0 0.0
    %1065 = vmatpush1.msra.mxu0 0.0
    %1066 = vmatprep.subr.mxu0 0.0
    %1067 = vmatpush1.msra.mxu0 0.0
    %1068 = vmatprep.subr.mxu0 0.0
    %1069 = vmatpush1.msra.mxu0 0.0
    %1070 = vmatprep.subr.mxu0 0.0
    %1071 = vmatpush1.msra.mxu0 0.0
    %1072 = vmatprep.subr.mxu0 0.0
    %1073 = vmatpush1.msra.mxu0 0.0
    %1074 = vmatprep.subr.mxu0 0.0
    %1075 = vmatpush1.msra.mxu0 0.0
    %1076 = vmatprep.subr.mxu0 0.0
    %1077 = vmatpush1.msra.mxu0 0.0
    %1078 = vmatprep.subr.mxu0 0.0
    %1079 = vmatpush1.msra.mxu0 0.0
    %1080 = vmatprep.subr.mxu0 0.0
    %1081 = vmatpush1.msra.mxu0 0.0
    %1082 = vmatprep.subr.mxu0 0.0
    %1083 = vmatpush1.msra.mxu0 0.0
    %1084 = vmatprep.subr.mxu0 0.0
    %1085 = vmatpush1.msra.mxu0 0.0
    %1086 = vmatprep.subr.mxu0 0.0
    %1087 = vmatpush1.msra.mxu0 0.0
    %1088 = vmatprep.subr.mxu0 0.0
    %1089 = vmatpush1.msra.mxu0 0.0
    %1090 = vmatprep.subr.mxu0 0.0
    %1091 = vmatpush1.msra.mxu0 0.0
    %1092 = vmatprep.subr.mxu0 0.0
    %1093 = vmatpush1.msra.mxu0 0.0
    %1094 = vmatprep.subr.mxu0 0.0
    %1095 = vmatpush1.msra.mxu0 0.0
    %1096 = vmatprep.subr.mxu0 0.0
    %1097 = vmatpush1.msra.mxu0 0.0
    %1098 = vmatprep.subr.mxu0 0.0
    %1099 = vmatpush1.msra.mxu0 0.0
    %1100 = vmatprep.subr.mxu0 0.0
    %1101 = vmatpush1.msra.mxu0 0.0
    %1102 = vmatprep.subr.mxu0 0.0
    %1103 = vmatpush1.msra.mxu0 0.0
    %1104 = vmatprep.mubr.f32.mxu0 0.0
    %1105 = vmatmul.mubr.f32.gmra.mrb[0].mxu0 %v1035
    %v1106 = vpop.f32.mrb[0].mxu0
    %v1107 = vadd.f32 %v1026, %v1106
    %v1108 = vpop.f32.mrb[0].mxu0
    %1109 = vmatprep.mubr.f32.mxu0 0.0
    %1110 = vmatmul.mubr.f32.gmra.mrb[0].mxu0 %v1038
    %v1111 = vpop.f32.mrb[0].mxu0
    %v1112 = vadd.f32 %v1031, %v1111
    %v1113 = vpop.f32.mrb[0].mxu0
    %1114 = vdwg.mxu0
    %1115 = vrot.lane.b32.xlu0 %v529, 112
    %v1116 = vpop.permute.xlu0 %1115
    %1117 = vrot.lane.b32.xlu0 %v534, 112
    %v1118 = vpop.permute.xlu0 %1117
    %1119 = vrot.lane.b32.xlu0 %v529, 80
    %v1120 = vpop.permute.xlu0 %1119
    %1121 = vrot.lane.b32.xlu0 %v534, 80
    %v1122 = vpop.permute.xlu0 %1121
    %v1123 = vsel %vm547, %v1116, 0
    %v1125 = vsel %vm547, %v1118, 0
    %v1127 = vsel %vm547, %v1120, 0
    %v1129 = vsel %vm547, %v1122, 0
    %1131 = vmatprep.subr.mxu0 0.0
    %1132 = vmatpush1.xpose.msra.mxu0 %v1127
    %1133 = vmatprep.subr.mxu0 0.0
    %1134 = vmatpush1.xpose.msra.mxu0 %v1129
    %1135 = vmatprep.subr.mxu0 0.0
    %1136 = vmatpush1.xpose.msra.mxu0 0.0
    %1137 = vmatprep.subr.mxu0 0.0
    %1138 = vmatpush1.xpose.msra.mxu0 0.0
    %1139 = vmatprep.subr.mxu0 0.0
    %1140 = vmatpush1.xpose.msra.mxu0 0.0
    %1141 = vmatprep.subr.mxu0 0.0
    %1142 = vmatpush1.xpose.msra.mxu0 0.0
    %1143 = vmatprep.subr.mxu0 0.0
    %1144 = vmatpush1.xpose.msra.mxu0 0.0
    %1145 = vmatprep.subr.mxu0 0.0
    %1146 = vmatpush1.xpose.msra.mxu0 0.0
    %1147 = vmatprep.subr.mxu0 0.0
    %1148 = vmatpush1.xpose.msra.mxu0 0.0
    %1149 = vmatprep.subr.mxu0 0.0
    %1150 = vmatpush1.xpose.msra.mxu0 0.0
    %1151 = vmatprep.subr.mxu0 0.0
    %1152 = vmatpush1.xpose.msra.mxu0 0.0
    %1153 = vmatprep.subr.mxu0 0.0
    %1154 = vmatpush1.xpose.msra.mxu0 0.0
    %1155 = vmatprep.subr.mxu0 0.0
    %1156 = vmatpush1.xpose.msra.mxu0 0.0
    %1157 = vmatprep.subr.mxu0 0.0
    %1158 = vmatpush1.xpose.msra.mxu0 0.0
    %1159 = vmatprep.subr.mxu0 0.0
    %1160 = vmatpush1.xpose.msra.mxu0 0.0
    %1161 = vmatprep.subr.mxu0 0.0
    %1162 = vmatpush1.xpose.msra.mxu0 0.0
    %1163 = vmatprep.subr.mxu0 0.0
    %1164 = vmatpush1.xpose.msra.mxu0 0.0
    %1165 = vmatprep.subr.mxu0 0.0
    %1166 = vmatpush1.xpose.msra.mxu0 0.0
    %1167 = vmatprep.subr.mxu0 0.0
    %1168 = vmatpush1.xpose.msra.mxu0 0.0
    %1169 = vmatprep.subr.mxu0 0.0
    %1170 = vmatpush1.xpose.msra.mxu0 0.0
    %1171 = vmatprep.subr.mxu0 0.0
    %1172 = vmatpush1.xpose.msra.mxu0 0.0
    %1173 = vmatprep.subr.mxu0 0.0
    %1174 = vmatpush1.xpose.msra.mxu0 0.0
    %1175 = vmatprep.subr.mxu0 0.0
    %1176 = vmatpush1.xpose.msra.mxu0 0.0
    %1177 = vmatprep.subr.mxu0 0.0
    %1178 = vmatpush1.xpose.msra.mxu0 0.0
    %1179 = vmatprep.subr.mxu0 0.0
    %1180 = vmatpush1.xpose.msra.mxu0 0.0
    %1181 = vmatprep.subr.mxu0 0.0
    %1182 = vmatpush1.xpose.msra.mxu0 0.0
    %1183 = vmatprep.subr.mxu0 0.0
    %1184 = vmatpush1.xpose.msra.mxu0 0.0
    %1185 = vmatprep.subr.mxu0 0.0
    %1186 = vmatpush1.xpose.msra.mxu0 0.0
    %1187 = vmatprep.subr.mxu0 0.0
    %1188 = vmatpush1.xpose.msra.mxu0 0.0
    %1189 = vmatprep.subr.mxu0 0.0
    %1190 = vmatpush1.xpose.msra.mxu0 0.0
    %1191 = vmatprep.subr.mxu0 0.0
    %1192 = vmatpush1.xpose.msra.mxu0 0.0
    %1193 = vmatprep.subr.mxu0 0.0
    %1194 = vmatpush1.xpose.msra.mxu0 0.0
    %1195 = vmatprep.mubr.f32.mxu0 0.0
    %1196 = vmatmul.mubr.f32.gmra.mrb[0].mxu0 %v1123
    %v1197 = vpop.f32.mrb[0].mxu0
    %v1198 = vadd.f32 0.0, %v1197
    %v1199 = vpop.f32.mrb[0].mxu0
    %1200 = vmatprep.mubr.f32.mxu0 0.0
    %1201 = vmatmul.mubr.f32.gmra.mrb[0].mxu0 %v1125
    %v1202 = vpop.f32.mrb[0].mxu0
    %v1203 = vadd.f32 0.0, %v1202
    %v1204 = vpop.f32.mrb[0].mxu0
    %1205 = vdwg.mxu0
    %v1206 = vmul.f32 %v1198, 0.35355338
    %v1207 = vmul.f32 %v1203, 0.35355338
    %v1208 = vadd.f32 %v1206, %v396
    %v1209 = vadd.f32 %v1207, %v397
    %v1210 = vsel %vm635, %v1208, -inf
    %1211 = vmax.xlane.f32.xlu0 %v1210
    %v1212 = vpop.xlane.xlu0 %1211
    %v1213 = vsel %vm639, %v1209, -inf
    %1214 = vmax.xlane.f32.xlu0 %v1213
    %v1215 = vpop.xlane.xlu0 %1214
    %v1216 = vsub.f32 %v1208, %v1212
    %v1217 = vsub.f32 %v1209, %v1215
    %v1218 = vmul.f32 %v1216, 1.442695
    %v1219 = vpow.pop %v1218
    %v1220 = vmul.f32 %v1217, 1.442695
    %v1221 = vpow.pop %v1220
    %v1222 = vsel %vm635, %v1219, 0.0
    %1223 = vadd.xlane.f32.xlu0 %v1222
    %v1224 = vpop.xlane.xlu0 %1223
    %v1225 = vsel %vm639, %v1221, 0.0
    %1226 = vadd.xlane.f32.xlu0 %v1225
    %v1227 = vpop.xlane.xlu0 %1226
    %v1228 = vrcp.pop %v1224
    %v1229 = vrcp.pop %v1227
    %v1230 = vmul.f32 %v1219, %v1228
    %v1231 = vmul.f32 %v1221, %v1229
    %1232 = vrot.lane.b32.xlu0 %v529, 48
    %v1233 = vpop.permute.xlu0 %1232
    %1234 = vrot.lane.b32.xlu0 %v534, 48
    %v1235 = vpop.permute.xlu0 %1234
    %v1238 = vsel %vm635, %v1230, 0
    %v1241 = vsel %vm635, %v1231, 0
    %v1243 = vsel %vm670, %v1235, 0
    %1245 = vmatprep.subr.mxu0 0.0
    %1246 = vmatpush1.msra.mxu0 %v1233
    %1247 = vmatprep.subr.mxu0 0.0
    %1248 = vmatpush1.msra.mxu0 %v1243
    %1249 = vmatprep.subr.mxu0 0.0
    %1250 = vmatpush1.msra.mxu0 0.0
    %1251 = vmatprep.subr.mxu0 0.0
    %1252 = vmatpush1.msra.mxu0 0.0
    %1253 = vmatprep.subr.mxu0 0.0
    %1254 = vmatpush1.msra.mxu0 0.0
    %1255 = vmatprep.subr.mxu0 0.0
    %1256 = vmatpush1.msra.mxu0 0.0
    %1257 = vmatprep.subr.mxu0 0.0
    %1258 = vmatpush1.msra.mxu0 0.0
    %1259 = vmatprep.subr.mxu0 0.0
    %1260 = vmatpush1.msra.mxu0 0.0
    %1261 = vmatprep.subr.mxu0 0.0
    %1262 = vmatpush1.msra.mxu0 0.0
    %1263 = vmatprep.subr.mxu0 0.0
    %1264 = vmatpush1.msra.mxu0 0.0
    %1265 = vmatprep.subr.mxu0 0.0
    %1266 = vmatpush1.msra.mxu0 0.0
    %1267 = vmatprep.subr.mxu0 0.0
    %1268 = vmatpush1.msra.mxu0 0.0
    %1269 = vmatprep.subr.mxu0 0.0
    %1270 = vmatpush1.msra.mxu0 0.0
    %1271 = vmatprep.subr.mxu0 0.0
    %1272 = vmatpush1.msra.mxu0 0.0
    %1273 = vmatprep.subr.mxu0 0.0
    %1274 = vmatpush1.msra.mxu0 0.0
    %1275 = vmatprep.subr.mxu0 0.0
    %1276 = vmatpush1.msra.mxu0 0.0
    %1277 = vmatprep.subr.mxu0 0.0
    %1278 = vmatpush1.msra.mxu0 0.0
    %1279 = vmatprep.subr.mxu0 0.0
    %1280 = vmatpush1.msra.mxu0 0.0
    %1281 = vmatprep.subr.mxu0 0.0
    %1282 = vmatpush1.msra.mxu0 0.0
    %1283 = vmatprep.subr.mxu0 0.0
    %1284 = vmatpush1.msra.mxu0 0.0
    %1285 = vmatprep.subr.mxu0 0.0
    %1286 = vmatpush1.msra.mxu0 0.0
    %1287 = vmatprep.subr.mxu0 0.0
    %1288 = vmatpush1.msra.mxu0 0.0
    %1289 = vmatprep.subr.mxu0 0.0
    %1290 = vmatpush1.msra.mxu0 0.0
    %1291 = vmatprep.subr.mxu0 0.0
    %1292 = vmatpush1.msra.mxu0 0.0
    %1293 = vmatprep.subr.mxu0 0.0
    %1294 = vmatpush1.msra.mxu0 0.0
    %1295 = vmatprep.subr.mxu0 0.0
    %1296 = vmatpush1.msra.mxu0 0.0
    %1297 = vmatprep.subr.mxu0 0.0
    %1298 = vmatpush1.msra.mxu0 0.0
    %1299 = vmatprep.subr.mxu0 0.0
    %1300 = vmatpush1.msra.mxu0 0.0
    %1301 = vmatprep.subr.mxu0 0.0
    %1302 = vmatpush1.msra.mxu0 0.0
    %1303 = vmatprep.subr.mxu0 0.0
    %1304 = vmatpush1.msra.mxu0 0.0
    %1305 = vmatprep.subr.mxu0 0.0
    %1306 = vmatpush1.msra.mxu0 0.0
    %1307 = vmatprep.subr.mxu0 0.0
    %1308 = vmatpush1.msra.mxu0 0.0
    %1309 = vmatprep.mubr.f32.mxu0 0.0
    %1310 = vmatmul.mubr.f32.gmra.mrb[0].mxu0 %v1238
    %v1311 = vpop.f32.mrb[0].mxu0
    %v1312 = vadd.f32 0.0, %v1311
    %v1313 = vpop.f32.mrb[0].mxu0
    %1314 = vmatprep.mubr.f32.mxu0 0.0
    %1315 = vmatmul.mubr.f32.gmra.mrb[0].mxu0 %v1241
    %v1316 = vpop.f32.mrb[0].mxu0
    %v1317 = vadd.f32 0.0, %v1316
    %v1318 = vpop.f32.mrb[0].mxu0
    %1319 = vdwg.mxu0
    %v1321 = vsel %vm547, %v1312, 0
    %v1324 = vsel %vm547, %v1317, 0
    %1326 = vmatprep.subr.mxu0 0.0
    %1327 = vmatpush1.msra.mxu0 %v539
    %1328 = vmatprep.subr.mxu0 0.0
    %1329 = vmatpush1.msra.mxu0 0.0
    %1330 = vmatprep.subr.mxu0 0.0
    %1331 = vmatpush1.msra.mxu0 0.0
    %1332 = vmatprep.subr.mxu0 0.0
    %1333 = vmatpush1.msra.mxu0 0.0
    %1334 = vmatprep.subr.mxu0 0.0
    %1335 = vmatpush1.msra.mxu0 0.0
    %1336 = vmatprep.subr.mxu0 0.0
    %1337 = vmatpush1.msra.mxu0 0.0
    %1338 = vmatprep.subr.mxu0 0.0
    %1339 = vmatpush1.msra.mxu0 0.0
    %1340 = vmatprep.subr.mxu0 0.0
    %1341 = vmatpush1.msra.mxu0 0.0
    %1342 = vmatprep.subr.mxu0 0.0
    %1343 = vmatpush1.msra.mxu0 0.0
    %1344 = vmatprep.subr.mxu0 0.0
    %1345 = vmatpush1.msra.mxu0 0.0
    %1346 = vmatprep.subr.mxu0 0.0
    %1347 = vmatpush1.msra.mxu0 0.0
    %1348 = vmatprep.subr.mxu0 0.0
    %1349 = vmatpush1.msra.mxu0 0.0
    %1350 = vmatprep.subr.mxu0 0.0
    %1351 = vmatpush1.msra.mxu0 0.0
    %1352 = vmatprep.subr.mxu0 0.0
    %1353 = vmatpush1.msra.mxu0 0.0
    %1354 = vmatprep.subr.mxu0 0.0
    %1355 = vmatpush1.msra.mxu0 0.0
    %1356 = vmatprep.subr.mxu0 0.0
    %1357 = vmatpush1.msra.mxu0 0.0
    %1358 = vmatprep.subr.mxu0 0.0
    %1359 = vmatpush1.msra.mxu0 0.0
    %1360 = vmatprep.subr.mxu0 0.0
    %1361 = vmatpush1.msra.mxu0 0.0
    %1362 = vmatprep.subr.mxu0 0.0
    %1363 = vmatpush1.msra.mxu0 0.0
    %1364 = vmatprep.subr.mxu0 0.0
    %1365 = vmatpush1.msra.mxu0 0.0
    %1366 = vmatprep.subr.mxu0 0.0
    %1367 = vmatpush1.msra.mxu0 0.0
    %1368 = vmatprep.subr.mxu0 0.0
    %1369 = vmatpush1.msra.mxu0 0.0
    %1370 = vmatprep.subr.mxu0 0.0
    %1371 = vmatpush1.msra.mxu0 0.0
    %1372 = vmatprep.subr.mxu0 0.0
    %1373 = vmatpush1.msra.mxu0 0.0
    %1374 = vmatprep.subr.mxu0 0.0
    %1375 = vmatpush1.msra.mxu0 0.0
    %1376 = vmatprep.subr.mxu0 0.0
    %1377 = vmatpush1.msra.mxu0 0.0
    %1378 = vmatprep.subr.mxu0 0.0
    %1379 = vmatpush1.msra.mxu0 0.0
    %1380 = vmatprep.subr.mxu0 0.0
    %1381 = vmatpush1.msra.mxu0 0.0
    %1382 = vmatprep.subr.mxu0 0.0
    %1383 = vmatpush1.msra.mxu0 0.0
    %1384 = vmatprep.subr.mxu0 0.0
    %1385 = vmatpush1.msra.mxu0 0.0
    %1386 = vmatprep.subr.mxu0 0.0
    %1387 = vmatpush1.msra.mxu0 0.0
    %1388 = vmatprep.subr.mxu0 0.0
    %1389 = vmatpush1.msra.mxu0 0.0
    %1390 = vmatprep.mubr.f32.mxu0 0.0
    %1391 = vmatmul.mubr.f32.gmra.mrb[0].mxu0 %v1321
    %v1392 = vpop.f32.mrb[0].mxu0
    %v1393 = vadd.f32 0.0, %v1392
    %v1394 = vpop.f32.mrb[0].mxu0
    %1395 = vmatprep.mubr.f32.mxu0 0.0
    %1396 = vmatmul.mubr.f32.gmra.mrb[0].mxu0 %v1324
    %v1397 = vpop.f32.mrb[0].mxu0
    %v1398 = vadd.f32 0.0, %v1397
    %v1399 = vpop.f32.mrb[0].mxu0
    %1400 = vdwg.mxu0
    %v1401 = vadd.f32 %v1107, %v1393
    %v1402 = vadd.f32 %v1112, %v1398
    %1403 = vrot.lane.b32.xlu0 %v529, 104
    %v1404 = vpop.permute.xlu0 %1403
    %1405 = vrot.lane.b32.xlu0 %v534, 104
    %v1406 = vpop.permute.xlu0 %1405
    %1407 = vrot.lane.b32.xlu0 %v529, 72
    %v1408 = vpop.permute.xlu0 %1407
    %1409 = vrot.lane.b32.xlu0 %v534, 72
    %v1410 = vpop.permute.xlu0 %1409
    %v1411 = vsel %vm547, %v1404, 0
    %v1413 = vsel %vm547, %v1406, 0
    %v1415 = vsel %vm547, %v1408, 0
    %v1417 = vsel %vm547, %v1410, 0
    %1419 = vmatprep.subr.mxu0 0.0
    %1420 = vmatpush1.xpose.msra.mxu0 %v1415
    %1421 = vmatprep.subr.mxu0 0.0
    %1422 = vmatpush1.xpose.msra.mxu0 %v1417
    %1423 = vmatprep.subr.mxu0 0.0
    %1424 = vmatpush1.xpose.msra.mxu0 0.0
    %1425 = vmatprep.subr.mxu0 0.0
    %1426 = vmatpush1.xpose.msra.mxu0 0.0
    %1427 = vmatprep.subr.mxu0 0.0
    %1428 = vmatpush1.xpose.msra.mxu0 0.0
    %1429 = vmatprep.subr.mxu0 0.0
    %1430 = vmatpush1.xpose.msra.mxu0 0.0
    %1431 = vmatprep.subr.mxu0 0.0
    %1432 = vmatpush1.xpose.msra.mxu0 0.0
    %1433 = vmatprep.subr.mxu0 0.0
    %1434 = vmatpush1.xpose.msra.mxu0 0.0
    %1435 = vmatprep.subr.mxu0 0.0
    %1436 = vmatpush1.xpose.msra.mxu0 0.0
    %1437 = vmatprep.subr.mxu0 0.0
    %1438 = vmatpush1.xpose.msra.mxu0 0.0
    %1439 = vmatprep.subr.mxu0 0.0
    %1440 = vmatpush1.xpose.msra.mxu0 0.0
    %1441 = vmatprep.subr.mxu0 0.0
    %1442 = vmatpush1.xpose.msra.mxu0 0.0
    %1443 = vmatprep.subr.mxu0 0.0
    %1444 = vmatpush1.xpose.msra.mxu0 0.0
    %1445 = vmatprep.subr.mxu0 0.0
    %1446 = vmatpush1.xpose.msra.mxu0 0.0
    %1447 = vmatprep.subr.mxu0 0.0
    %1448 = vmatpush1.xpose.msra.mxu0 0.0
    %1449 = vmatprep.subr.mxu0 0.0
    %1450 = vmatpush1.xpose.msra.mxu0 0.0
    %1451 = vmatprep.subr.mxu0 0.0
    %1452 = vmatpush1.xpose.msra.mxu0 0.0
    %1453 = vmatprep.subr.mxu0 0.0
    %1454 = vmatpush1.xpose.msra.mxu0 0.0
    %1455 = vmatprep.subr.mxu0 0.0
    %1456 = vmatpush1.xpose.msra.mxu0 0.0
    %1457 = vmatprep.subr.mxu0 0.0
    %1458 = vmatpush1.xpose.msra.mxu0 0.0
    %1459 = vmatprep.subr.mxu0 0.0
    %1460 = vmatpush1.xpose.msra.mxu0 0.0
    %1461 = vmatprep.subr.mxu0 0.0
    %1462 = vmatpush1.xpose.msra.mxu0 0.0
    %1463 = vmatprep.subr.mxu0 0.0
    %1464 = vmatpush1.xpose.msra.mxu0 0.0
    %1465 = vmatprep.subr.mxu0 0.0
    %1466 = vmatpush1.xpose.msra.mxu0 0.0
    %1467 = vmatprep.subr.mxu0 0.0
    %1468 = vmatpush1.xpose.msra.mxu0 0.0
    %1469 = vmatprep.subr.mxu0 0.0
    %1470 = vmatpush1.xpose.msra.mxu0 0.0
    %1471 = vmatprep.subr.mxu0 0.0
    %1472 = vmatpush1.xpose.msra.mxu0 0.0
    %1473 = vmatprep.subr.mxu0 0.0
    %1474 = vmatpush1.xpose.msra.mxu0 0.0
    %1475 = vmatprep.subr.mxu0 0.0
    %1476 = vmatpush1.xpose.msra.mxu0 0.0
    %1477 = vmatprep.subr.mxu0 0.0
    %1478 = vmatpush1.xpose.msra.mxu0 0.0
    %1479 = vmatprep.subr.mxu0 0.0
    %1480 = vmatpush1.xpose.msra.mxu0 0.0
    %1481 = vmatprep.subr.mxu0 0.0
    %1482 = vmatpush1.xpose.msra.mxu0 0.0
    %1483 = vmatprep.mubr.f32.mxu0 0.0
    %1484 = vmatmul.mubr.f32.gmra.mrb[0].mxu0 %v1411
    %v1485 = vpop.f32.mrb[0].mxu0
    %v1486 = vadd.f32 0.0, %v1485
    %v1487 = vpop.f32.mrb[0].mxu0
    %1488 = vmatprep.mubr.f32.mxu0 0.0
    %1489 = vmatmul.mubr.f32.gmra.mrb[0].mxu0 %v1413
    %v1490 = vpop.f32.mrb[0].mxu0
    %v1491 = vadd.f32 0.0, %v1490
    %v1492 = vpop.f32.mrb[0].mxu0
    %1493 = vdwg.mxu0
    %v1494 = vmul.f32 %v1486, 0.35355338
    %v1495 = vmul.f32 %v1491, 0.35355338
    %v1496 = vadd.f32 %v1494, %v396
    %v1497 = vadd.f32 %v1495, %v397
    %v1498 = vsel %vm635, %v1496, -inf
    %1499 = vmax.xlane.f32.xlu0 %v1498
    %v1500 = vpop.xlane.xlu0 %1499
    %v1501 = vsel %vm639, %v1497, -inf
    %1502 = vmax.xlane.f32.xlu0 %v1501
    %v1503 = vpop.xlane.xlu0 %1502
    %v1504 = vsub.f32 %v1496, %v1500
    %v1505 = vsub.f32 %v1497, %v1503
    %v1506 = vmul.f32 %v1504, 1.442695
    %v1507 = vpow.pop %v1506
    %v1508 = vmul.f32 %v1505, 1.442695
    %v1509 = vpow.pop %v1508
    %v1510 = vsel %vm635, %v1507, 0.0
    %1511 = vadd.xlane.f32.xlu0 %v1510
    %v1512 = vpop.xlane.xlu0 %1511
    %v1513 = vsel %vm639, %v1509, 0.0
    %1514 = vadd.xlane.f32.xlu0 %v1513
    %v1515 = vpop.xlane.xlu0 %1514
    %v1516 = vrcp.pop %v1512
    %v1517 = vrcp.pop %v1515
    %v1518 = vmul.f32 %v1507, %v1516
    %v1519 = vmul.f32 %v1509, %v1517
    %1520 = vrot.lane.b32.xlu0 %v529, 40
    %v1521 = vpop.permute.xlu0 %1520
    %1522 = vrot.lane.b32.xlu0 %v534, 40
    %v1523 = vpop.permute.xlu0 %1522
    %v1526 = vsel %vm635, %v1518, 0
    %v1529 = vsel %vm635, %v1519, 0
    %v1531 = vsel %vm670, %v1523, 0
    %1533 = vmatprep.subr.mxu0 0.0
    %1534 = vmatpush1.msra.mxu0 %v1521
    %1535 = vmatprep.subr.mxu0 0.0
    %1536 = vmatpush1.msra.mxu0 %v1531
    %1537 = vmatprep.subr.mxu0 0.0
    %1538 = vmatpush1.msra.mxu0 0.0
    %1539 = vmatprep.subr.mxu0 0.0
    %1540 = vmatpush1.msra.mxu0 0.0
    %1541 = vmatprep.subr.mxu0 0.0
    %1542 = vmatpush1.msra.mxu0 0.0
    %1543 = vmatprep.subr.mxu0 0.0
    %1544 = vmatpush1.msra.mxu0 0.0
    %1545 = vmatprep.subr.mxu0 0.0
    %1546 = vmatpush1.msra.mxu0 0.0
    %1547 = vmatprep.subr.mxu0 0.0
    %1548 = vmatpush1.msra.mxu0 0.0
    %1549 = vmatprep.subr.mxu0 0.0
    %1550 = vmatpush1.msra.mxu0 0.0
    %1551 = vmatprep.subr.mxu0 0.0
    %1552 = vmatpush1.msra.mxu0 0.0
    %1553 = vmatprep.subr.mxu0 0.0
    %1554 = vmatpush1.msra.mxu0 0.0
    %1555 = vmatprep.subr.mxu0 0.0
    %1556 = vmatpush1.msra.mxu0 0.0
    %1557 = vmatprep.subr.mxu0 0.0
    %1558 = vmatpush1.msra.mxu0 0.0
    %1559 = vmatprep.subr.mxu0 0.0
    %1560 = vmatpush1.msra.mxu0 0.0
    %1561 = vmatprep.subr.mxu0 0.0
    %1562 = vmatpush1.msra.mxu0 0.0
    %1563 = vmatprep.subr.mxu0 0.0
    %1564 = vmatpush1.msra.mxu0 0.0
    %1565 = vmatprep.subr.mxu0 0.0
    %1566 = vmatpush1.msra.mxu0 0.0
    %1567 = vmatprep.subr.mxu0 0.0
    %1568 = vmatpush1.msra.mxu0 0.0
    %1569 = vmatprep.subr.mxu0 0.0
    %1570 = vmatpush1.msra.mxu0 0.0
    %1571 = vmatprep.subr.mxu0 0.0
    %1572 = vmatpush1.msra.mxu0 0.0
    %1573 = vmatprep.subr.mxu0 0.0
    %1574 = vmatpush1.msra.mxu0 0.0
    %1575 = vmatprep.subr.mxu0 0.0
    %1576 = vmatpush1.msra.mxu0 0.0
    %1577 = vmatprep.subr.mxu0 0.0
    %1578 = vmatpush1.msra.mxu0 0.0
    %1579 = vmatprep.subr.mxu0 0.0
    %1580 = vmatpush1.msra.mxu0 0.0
    %1581 = vmatprep.subr.mxu0 0.0
    %1582 = vmatpush1.msra.mxu0 0.0
    %1583 = vmatprep.subr.mxu0 0.0
    %1584 = vmatpush1.msra.mxu0 0.0
    %1585 = vmatprep.subr.mxu0 0.0
    %1586 = vmatpush1.msra.mxu0 0.0
    %1587 = vmatprep.subr.mxu0 0.0
    %1588 = vmatpush1.msra.mxu0 0.0
    %1589 = vmatprep.subr.mxu0 0.0
    %1590 = vmatpush1.msra.mxu0 0.0
    %1591 = vmatprep.subr.mxu0 0.0
    %1592 = vmatpush1.msra.mxu0 0.0
    %1593 = vmatprep.subr.mxu0 0.0
    %1594 = vmatpush1.msra.mxu0 0.0
    %1595 = vmatprep.subr.mxu0 0.0
    %1596 = vmatpush1.msra.mxu0 0.0
    %1597 = vmatprep.mubr.f32.mxu0 0.0
    %1598 = vmatmul.mubr.f32.gmra.mrb[0].mxu0 %v1526
    %v1599 = vpop.f32.mrb[0].mxu0
    %v1600 = vadd.f32 0.0, %v1599
    %v1601 = vpop.f32.mrb[0].mxu0
    %1602 = vmatprep.mubr.f32.mxu0 0.0
    %1603 = vmatmul.mubr.f32.gmra.mrb[0].mxu0 %v1529
    %v1604 = vpop.f32.mrb[0].mxu0
    %v1605 = vadd.f32 0.0, %v1604
    %v1606 = vpop.f32.mrb[0].mxu0
    %1607 = vdwg.mxu0
    %v1609 = vsel %vm547, %v1600, 0
    %v1612 = vsel %vm547, %v1605, 0
    %1614 = vmatprep.subr.mxu0 0.0
    %1615 = vmatpush1.msra.mxu0 %v540
    %1616 = vmatprep.subr.mxu0 0.0
    %1617 = vmatpush1.msra.mxu0 0.0
    %1618 = vmatprep.subr.mxu0 0.0
    %1619 = vmatpush1.msra.mxu0 0.0
    %1620 = vmatprep.subr.mxu0 0.0
    %1621 = vmatpush1.msra.mxu0 0.0
    %1622 = vmatprep.subr.mxu0 0.0
    %1623 = vmatpush1.msra.mxu0 0.0
    %1624 = vmatprep.subr.mxu0 0.0
    %1625 = vmatpush1.msra.mxu0 0.0
    %1626 = vmatprep.subr.mxu0 0.0
    %1627 = vmatpush1.msra.mxu0 0.0
    %1628 = vmatprep.subr.mxu0 0.0
    %1629 = vmatpush1.msra.mxu0 0.0
    %1630 = vmatprep.subr.mxu0 0.0
    %1631 = vmatpush1.msra.mxu0 0.0
    %1632 = vmatprep.subr.mxu0 0.0
    %1633 = vmatpush1.msra.mxu0 0.0
    %1634 = vmatprep.subr.mxu0 0.0
    %1635 = vmatpush1.msra.mxu0 0.0
    %1636 = vmatprep.subr.mxu0 0.0
    %1637 = vmatpush1.msra.mxu0 0.0
    %1638 = vmatprep.subr.mxu0 0.0
    %1639 = vmatpush1.msra.mxu0 0.0
    %1640 = vmatprep.subr.mxu0 0.0
    %1641 = vmatpush1.msra.mxu0 0.0
    %1642 = vmatprep.subr.mxu0 0.0
    %1643 = vmatpush1.msra.mxu0 0.0
    %1644 = vmatprep.subr.mxu0 0.0
    %1645 = vmatpush1.msra.mxu0 0.0
    %1646 = vmatprep.subr.mxu0 0.0
    %1647 = vmatpush1.msra.mxu0 0.0
    %1648 = vmatprep.subr.mxu0 0.0
    %1649 = vmatpush1.msra.mxu0 0.0
    %1650 = vmatprep.subr.mxu0 0.0
    %1651 = vmatpush1.msra.mxu0 0.0
    %1652 = vmatprep.subr.mxu0 0.0
    %1653 = vmatpush1.msra.mxu0 0.0
    %1654 = vmatprep.subr.mxu0 0.0
    %1655 = vmatpush1.msra.mxu0 0.0
    %1656 = vmatprep.subr.mxu0 0.0
    %1657 = vmatpush1.msra.mxu0 0.0
    %1658 = vmatprep.subr.mxu0 0.0
    %1659 = vmatpush1.msra.mxu0 0.0
    %1660 = vmatprep.subr.mxu0 0.0
    %1661 = vmatpush1.msra.mxu0 0.0
    %1662 = vmatprep.subr.mxu0 0.0
    %1663 = vmatpush1.msra.mxu0 0.0
    %1664 = vmatprep.subr.mxu0 0.0
    %1665 = vmatpush1.msra.mxu0 0.0
    %1666 = vmatprep.subr.mxu0 0.0
    %1667 = vmatpush1.msra.mxu0 0.0
    %1668 = vmatprep.subr.mxu0 0.0
    %1669 = vmatpush1.msra.mxu0 0.0
    %1670 = vmatprep.subr.mxu0 0.0
    %1671 = vmatpush1.msra.mxu0 0.0
    %1672 = vmatprep.subr.mxu0 0.0
    %1673 = vmatpush1.msra.mxu0 0.0
    %1674 = vmatprep.subr.mxu0 0.0
    %1675 = vmatpush1.msra.mxu0 0.0
    %1676 = vmatprep.subr.mxu0 0.0
    %1677 = vmatpush1.msra.mxu0 0.0
    %1678 = vmatprep.mubr.f32.mxu0 0.0
    %1679 = vmatmul.mubr.f32.gmra.mrb[0].mxu0 %v1609
    %v1680 = vpop.f32.mrb[0].mxu0
    %v1681 = vadd.f32 0.0, %v1680
    %v1682 = vpop.f32.mrb[0].mxu0
    %1683 = vmatprep.mubr.f32.mxu0 0.0
    %1684 = vmatmul.mubr.f32.gmra.mrb[0].mxu0 %v1612
    %v1685 = vpop.f32.mrb[0].mxu0
    %v1686 = vadd.f32 0.0, %v1685
    %v1687 = vpop.f32.mrb[0].mxu0
    %1688 = vdwg.mxu0
    %v1689 = vadd.f32 %v1401, %v1681
    %v1690 = vadd.f32 %v1402, %v1686
    %v1691 = vadd.f32 %v394, %v1689
    %v1692 = vadd.f32 %v395, %v1690
    %v1693 = vld [vmem:[%s11] sm:$0x1]
    %v1695 = vlaneseq
    %v1696 = vshrl.u32 %v1695, 7
    %v1697 = vsub.s32 0, %v1696
    %v1698 = vrot.slane %v1693, %v1697
    %v1700 = vadd.f32 %v1691, %v1698
    %v1701 = vadd.f32 %v1692, %v1698
    %v1702 = vld [vmem:[%s12] sm:$0x1]
    %v1703 = vld [vmem:[%s13] sm:$0x1]
    %v1704 = vsel %vm400, %v1700, 0.0
    %1705 = vadd.xlane.f32.xlu0 %v1704
    %v1706 = vpop.xlane.xlu0 %1705
    %v1707 = vsel %vm404, %v1701, 0.0
    %1708 = vadd.xlane.f32.xlu0 %v1707
    %v1709 = vpop.xlane.xlu0 %1708
    %v1710 = vmul.f32 %v1706, %v408
    %v1711 = vmul.f32 %v1709, %v408
    %v1712 = vsub.f32 %v1700, %v1710
    %v1713 = vsub.f32 %v1701, %v1711
    %v1714 = vmul.f32 %v1712, %v1712
    %v1715 = vmul.f32 %v1713, %v1713
    %v1716 = vsel %vm400, %v1714, 0.0
    %1717 = vadd.xlane.f32.xlu0 %v1716
    %v1718 = vpop.xlane.xlu0 %1717
    %v1719 = vsel %vm404, %v1715, 0.0
    %1720 = vadd.xlane.f32.xlu0 %v1719
    %v1721 = vpop.xlane.xlu0 %1720
    %v1722 = vmul.f32 %v1718, %v408
    %v1723 = vmul.f32 %v1721, %v408
    %v1724 = vadd.f32 %v1722, 1e-06
    %v1725 = vadd.f32 %v1723, 1e-06
    %v1726 = vrsqrt.pop %v1724
    %v1727 = vrsqrt.pop %v1725
    %v1728 = vmul.f32 %v1712, %v1726
    %v1729 = vmul.f32 %v1713, %v1727
    %v1731 = vlaneseq
    %v1732 = vshrl.u32 %v1731, 7
    %v1733 = vsub.s32 0, %v1732
    %v1734 = vrot.slane %v1702, %v1733
    %v1736 = vmul.f32 %v1728, %v1734
    %v1737 = vmul.f32 %v1729, %v1734
    %v1739 = vlaneseq
    %v1740 = vshrl.u32 %v1739, 7
    %v1741 = vsub.s32 0, %v1740
    %v1742 = vrot.slane %v1703, %v1741
    %v1744 = vadd.f32 %v1736, %v1742
    %v1745 = vadd.f32 %v1737, %v1742
    %v1746 = vld [vmem:[%s14] sm:$0xff]
    %v1747 = vld [vmem:[%s14 + $0x8] sm:$0xff]
    %v1748 = vld [vmem:[%s14 + $0x10] sm:$0xff]
    %v1749 = vld [vmem:[%s14 + $0x18] sm:$0xff]
    %v1750 = vld [vmem:[%s15] sm:$0x1]
    %v1752 = vlaneseq
    %v1753 = vshrl.u32 %v1752, 7
    %v1754 = vsub.s32 0, %v1753
    %v1755 = vrot.slane %v1750, %v1754
    %v1758 = vsel %vm400, %v1744, 0
    %v1761 = vsel %vm400, %v1745, 0
    %1763 = vmatprep.subr.mxu0 0.0
    %1764 = vmatpush1.msra.mxu0 %v1746
    %1765 = vmatprep.subr.mxu0 0.0
    %1766 = vmatpush1.msra.mxu0 %v1747
    %1767 = vmatprep.subr.mxu0 0.0
    %1768 = vmatpush1.msra.mxu0 %v1748
    %1769 = vmatprep.subr.mxu0 0.0
    %1770 = vmatpush1.msra.mxu0 %v1749
    %1771 = vmatprep.subr.mxu0 0.0
    %1772 = vmatpush1.msra.mxu0 0.0
    %1773 = vmatprep.subr.mxu0 0.0
    %1774 = vmatpush1.msra.mxu0 0.0
    %1775 = vmatprep.subr.mxu0 0.0
    %1776 = vmatpush1.msra.mxu0 0.0
    %1777 = vmatprep.subr.mxu0 0.0
    %1778 = vmatpush1.msra.mxu0 0.0
    %1779 = vmatprep.subr.mxu0 0.0
    %1780 = vmatpush1.msra.mxu0 0.0
    %1781 = vmatprep.subr.mxu0 0.0
    %1782 = vmatpush1.msra.mxu0 0.0
    %1783 = vmatprep.subr.mxu0 0.0
    %1784 = vmatpush1.msra.mxu0 0.0
    %1785 = vmatprep.subr.mxu0 0.0
    %1786 = vmatpush1.msra.mxu0 0.0
    %1787 = vmatprep.subr.mxu0 0.0
    %1788 = vmatpush1.msra.mxu0 0.0
    %1789 = vmatprep.subr.mxu0 0.0
    %1790 = vmatpush1.msra.mxu0 0.0
    %1791 = vmatprep.subr.mxu0 0.0
    %1792 = vmatpush1.msra.mxu0 0.0
    %1793 = vmatprep.subr.mxu0 0.0
    %1794 = vmatpush1.msra.mxu0 0.0
    %1795 = vmatprep.subr.mxu0 0.0
    %1796 = vmatpush1.msra.mxu0 0.0
    %1797 = vmatprep.subr.mxu0 0.0
    %1798 = vmatpush1.msra.mxu0 0.0
    %1799 = vmatprep.subr.mxu0 0.0
    %1800 = vmatpush1.msra.mxu0 0.0
    %1801 = vmatprep.subr.mxu0 0.0
    %1802 = vmatpush1.msra.mxu0 0.0
    %1803 = vmatprep.subr.mxu0 0.0
    %1804 = vmatpush1.msra.mxu0 0.0
    %1805 = vmatprep.subr.mxu0 0.0
    %1806 = vmatpush1.msra.mxu0 0.0
    %1807 = vmatprep.subr.mxu0 0.0
    %1808 = vmatpush1.msra.mxu0 0.0
    %1809 = vmatprep.subr.mxu0 0.0
    %1810 = vmatpush1.msra.mxu0 0.0
    %1811 = vmatprep.subr.mxu0 0.0
    %1812 = vmatpush1.msra.mxu0 0.0
    %1813 = vmatprep.subr.mxu0 0.0
    %1814 = vmatpush1.msra.mxu0 0.0
    %1815 = vmatprep.subr.mxu0 0.0
    %1816 = vmatpush1.msra.mxu0 0.0
    %1817 = vmatprep.subr.mxu0 0.0
    %1818 = vmatpush1.msra.mxu0 0.0
    %1819 = vmatprep.subr.mxu0 0.0
    %1820 = vmatpush1.msra.mxu0 0.0
    %1821 = vmatprep.subr.mxu0 0.0
    %1822 = vmatpush1.msra.mxu0 0.0
    %1823 = vmatprep.subr.mxu0 0.0
    %1824 = vmatpush1.msra.mxu0 0.0
    %1825 = vmatprep.subr.mxu0 0.0
    %1826 = vmatpush1.msra.mxu0 0.0
    %1827 = vmatprep.mubr.f32.mxu0 0.0
    %1828 = vmatmul.mubr.f32.gmra.mrb[0].mxu0 %v1758
    %v1829 = vpop.f32.mrb[0].mxu0
    %v1830 = vadd.f32 %v1755, %v1829
    %v1831 = vpop.f32.mrb[0].mxu0
    %1832 = vmatprep.mubr.f32.mxu0 0.0
    %1833 = vmatmul.mubr.f32.gmra.mrb[0].mxu0 %v1761
    %v1834 = vpop.f32.mrb[0].mxu0
    %v1835 = vadd.f32 %v1755, %v1834
    %v1836 = vpop.f32.mrb[0].mxu0
    %1837 = vdwg.mxu0
    %v1838 = vmul.f32 %v1830, 0.5
    %v1839 = vmul.f32 %v1835, 0.5
    %v1840 = vmul.f32 %v1830, 0.70710677
    %v1841 = vmul.f32 %v1835, 0.70710677
    %v1842 = verf.f32.pop %v1840
    %v1843 = verf.f32.pop %v1841
    %v1844 = vadd.f32 %v1842, 1.0
    %v1845 = vadd.f32 %v1843, 1.0
    %v1846 = vmul.f32 %v1838, %v1844
    %v1847 = vmul.f32 %v1839, %v1845
    %v1848 = vld [vmem:[%s16] sm:$0xff]
    %v1849 = vld [vmem:[%s16 + $0x8] sm:$0xff]
    %v1850 = vld [vmem:[%s16 + $0x10] sm:$0xff]
    %v1851 = vld [vmem:[%s16 + $0x18] sm:$0xff]
    %v1852 = vld [vmem:[%s16 + $0x20] sm:$0xff]
    %v1853 = vld [vmem:[%s16 + $0x28] sm:$0xff]
    %v1854 = vld [vmem:[%s16 + $0x30] sm:$0xff]
    %v1855 = vld [vmem:[%s16 + $0x38] sm:$0xff]
    %v1856 = vld [vmem:[%s16 + $0x40] sm:$0xff]
    %v1857 = vld [vmem:[%s16 + $0x48] sm:$0xff]
    %v1858 = vld [vmem:[%s16 + $0x50] sm:$0xff]
    %v1859 = vld [vmem:[%s16 + $0x58] sm:$0xff]
    %v1860 = vld [vmem:[%s16 + $0x60] sm:$0xff]
    %v1861 = vld [vmem:[%s16 + $0x68] sm:$0xff]
    %v1862 = vld [vmem:[%s16 + $0x70] sm:$0xff]
    %v1863 = vld [vmem:[%s16 + $0x78] sm:$0xff]
    %1864 = vmatprep.subr.mxu0 0.0
    %1865 = vmatpush1.msra.mxu0 %v1848
    %1866 = vmatprep.subr.mxu0 0.0
    %1867 = vmatpush1.msra.mxu0 %v1849
    %1868 = vmatprep.subr.mxu0 0.0
    %1869 = vmatpush1.msra.mxu0 %v1850
    %1870 = vmatprep.subr.mxu0 0.0
    %1871 = vmatpush1.msra.mxu0 %v1851
    %1872 = vmatprep.subr.mxu0 0.0
    %1873 = vmatpush1.msra.mxu0 %v1852
    %1874 = vmatprep.subr.mxu0 0.0
    %1875 = vmatpush1.msra.mxu0 %v1853
    %1876 = vmatprep.subr.mxu0 0.0
    %1877 = vmatpush1.msra.mxu0 %v1854
    %1878 = vmatprep.subr.mxu0 0.0
    %1879 = vmatpush1.msra.mxu0 %v1855
    %1880 = vmatprep.subr.mxu0 0.0
    %1881 = vmatpush1.msra.mxu0 %v1856
    %1882 = vmatprep.subr.mxu0 0.0
    %1883 = vmatpush1.msra.mxu0 %v1857
    %1884 = vmatprep.subr.mxu0 0.0
    %1885 = vmatpush1.msra.mxu0 %v1858
    %1886 = vmatprep.subr.mxu0 0.0
    %1887 = vmatpush1.msra.mxu0 %v1859
    %1888 = vmatprep.subr.mxu0 0.0
    %1889 = vmatpush1.msra.mxu0 %v1860
    %1890 = vmatprep.subr.mxu0 0.0
    %1891 = vmatpush1.msra.mxu0 %v1861
    %1892 = vmatprep.subr.mxu0 0.0
    %1893 = vmatpush1.msra.mxu0 %v1862
    %1894 = vmatprep.subr.mxu0 0.0
    %1895 = vmatpush1.msra.mxu0 %v1863
    %1896 = vmatprep.subr.mxu0 0.0
    %1897 = vmatpush1.msra.mxu0 0.0
    %1898 = vmatprep.subr.mxu0 0.0
    %1899 = vmatpush1.msra.mxu0 0.0
    %1900 = vmatprep.subr.mxu0 0.0
    %1901 = vmatpush1.msra.mxu0 0.0
    %1902 = vmatprep.subr.mxu0 0.0
    %1903 = vmatpush1.msra.mxu0 0.0
    %1904 = vmatprep.subr.mxu0 0.0
    %1905 = vmatpush1.msra.mxu0 0.0
    %1906 = vmatprep.subr.mxu0 0.0
    %1907 = vmatpush1.msra.mxu0 0.0
    %1908 = vmatprep.subr.mxu0 0.0
    %1909 = vmatpush1.msra.mxu0 0.0
    %1910 = vmatprep.subr.mxu0 0.0
    %1911 = vmatpush1.msra.mxu0 0.0
    %1912 = vmatprep.subr.mxu0 0.0
    %1913 = vmatpush1.msra.mxu0 0.0
    %1914 = vmatprep.subr.mxu0 0.0
    %1915 = vmatpush1.msra.mxu0 0.0
    %1916 = vmatprep.subr.mxu0 0.0
    %1917 = vmatpush1.msra.mxu0 0.0
    %1918 = vmatprep.subr.mxu0 0.0
    %1919 = vmatpush1.msra.mxu0 0.0
    %1920 = vmatprep.subr.mxu0 0.0
    %1921 = vmatpush1.msra.mxu0 0.0
    %1922 = vmatprep.subr.mxu0 0.0
    %1923 = vmatpush1.msra.mxu0 0.0
    %1924 = vmatprep.subr.mxu0 0.0
    %1925 = vmatpush1.msra.mxu0 0.0
    %1926 = vmatprep.subr.mxu0 0.0
    %1927 = vmatpush1.msra.mxu0 0.0
    %1928 = vmatprep.mubr.f32.mxu0 0.0
    %1929 = vmatmul.mubr.f32.gmra.mrb[0].mxu0 %v1846
    %v1930 = vpop.f32.mrb[0].mxu0
    %v1931 = vadd.f32 0.0, %v1930
    %v1932 = vpop.f32.mrb[0].mxu0
    %1933 = vmatprep.mubr.f32.mxu0 0.0
    %1934 = vmatmul.mubr.f32.gmra.mrb[0].mxu0 %v1847
    %v1935 = vpop.f32.mrb[0].mxu0
    %v1936 = vadd.f32 0.0, %v1935
    %v1937 = vpop.f32.mrb[0].mxu0
    %1938 = vdwg.mxu0
    %v1939 = vadd.f32 %v1700, %v1931
    %v1940 = vadd.f32 %v1701, %v1936
    %v1941 = vld [vmem:[%s17] sm:$0x1]
    %v1943 = vlaneseq
    %v1944 = vshrl.u32 %v1943, 7
    %v1945 = vsub.s32 0, %v1944
    %v1946 = vrot.slane %v1941, %v1945
    %v1948 = vadd.f32 %v1939, %v1946
    %v1949 = vadd.f32 %v1940, %v1946
    %s1950 = scalar_lea.vmem %s6, 1
    %v1951 = vld [vmem:[%s1950] sm:$0x1]
    %s1952 = scalar_lea.vmem %s7, 1
    %v1953 = vld [vmem:[%s1952] sm:$0x1]
    %v1954 = vsel %vm400, %v1948, 0.0
    %1955 = vadd.xlane.f32.xlu0 %v1954
    %v1956 = vpop.xlane.xlu0 %1955
    %v1957 = vsel %vm404, %v1949, 0.0
    %1958 = vadd.xlane.f32.xlu0 %v1957
    %v1959 = vpop.xlane.xlu0 %1958
    %v1960 = vmul.f32 %v1956, %v408
    %v1961 = vmul.f32 %v1959, %v408
    %v1962 = vsub.f32 %v1948, %v1960
    %v1963 = vsub.f32 %v1949, %v1961
    %v1964 = vmul.f32 %v1962, %v1962
    %v1965 = vmul.f32 %v1963, %v1963
    %v1966 = vsel %vm400, %v1964, 0.0
    %1967 = vadd.xlane.f32.xlu0 %v1966
    %v1968 = vpop.xlane.xlu0 %1967
    %v1969 = vsel %vm404, %v1965, 0.0
    %1970 = vadd.xlane.f32.xlu0 %v1969
    %v1971 = vpop.xlane.xlu0 %1970
    %v1972 = vmul.f32 %v1968, %v408
    %v1973 = vmul.f32 %v1971, %v408
    %v1974 = vadd.f32 %v1972, 1e-06
    %v1975 = vadd.f32 %v1973, 1e-06
    %v1976 = vrsqrt.pop %v1974
    %v1977 = vrsqrt.pop %v1975
    %v1978 = vmul.f32 %v1962, %v1976
    %v1979 = vmul.f32 %v1963, %v1977
    %v1981 = vlaneseq
    %v1982 = vshrl.u32 %v1981, 7
    %v1983 = vsub.s32 0, %v1982
    %v1984 = vrot.slane %v1951, %v1983
    %v1986 = vmul.f32 %v1978, %v1984
    %v1987 = vmul.f32 %v1979, %v1984
    %v1989 = vlaneseq
    %v1990 = vshrl.u32 %v1989, 7
    %v1991 = vsub.s32 0, %v1990
    %v1992 = vrot.slane %v1953, %v1991
    %v1994 = vadd.f32 %v1986, %v1992
    %v1995 = vadd.f32 %v1987, %v1992
    %s1996 = scalar_lea.vmem %s8, 32
    %v1997 = vld [vmem:[%s1996] sm:$0xff]
    %v1998 = vld [vmem:[%s1996 + $0x8] sm:$0xff]
    %v1999 = vld [vmem:[%s1996 + $0x10] sm:$0xff]
    %v2000 = vld [vmem:[%s1996 + $0x18] sm:$0xff]
    %s2001 = scalar_lea.vmem %s9, 1
    %v2002 = vld [vmem:[%s2001] sm:$0x1]
    %v2004 = vlaneseq
    %v2005 = vshrl.u32 %v2004, 7
    %v2006 = vsub.s32 0, %v2005
    %v2007 = vrot.slane %v2002, %v2006
    %v2010 = vsel %vm400, %v1994, 0
    %v2013 = vsel %vm400, %v1995, 0
    %2015 = vmatprep.subr.mxu0 0.0
    %2016 = vmatpush1.msra.mxu0 %v1997
    %2017 = vmatprep.subr.mxu0 0.0
    %2018 = vmatpush1.msra.mxu0 %v1998
    %2019 = vmatprep.subr.mxu0 0.0
    %2020 = vmatpush1.msra.mxu0 %v1999
    %2021 = vmatprep.subr.mxu0 0.0
    %2022 = vmatpush1.msra.mxu0 %v2000
    %2023 = vmatprep.subr.mxu0 0.0
    %2024 = vmatpush1.msra.mxu0 0.0
    %2025 = vmatprep.subr.mxu0 0.0
    %2026 = vmatpush1.msra.mxu0 0.0
    %2027 = vmatprep.subr.mxu0 0.0
    %2028 = vmatpush1.msra.mxu0 0.0
    %2029 = vmatprep.subr.mxu0 0.0
    %2030 = vmatpush1.msra.mxu0 0.0
    %2031 = vmatprep.subr.mxu0 0.0
    %2032 = vmatpush1.msra.mxu0 0.0
    %2033 = vmatprep.subr.mxu0 0.0
    %2034 = vmatpush1.msra.mxu0 0.0
    %2035 = vmatprep.subr.mxu0 0.0
    %2036 = vmatpush1.msra.mxu0 0.0
    %2037 = vmatprep.subr.mxu0 0.0
    %2038 = vmatpush1.msra.mxu0 0.0
    %2039 = vmatprep.subr.mxu0 0.0
    %2040 = vmatpush1.msra.mxu0 0.0
    %2041 = vmatprep.subr.mxu0 0.0
    %2042 = vmatpush1.msra.mxu0 0.0
    %2043 = vmatprep.subr.mxu0 0.0
    %2044 = vmatpush1.msra.mxu0 0.0
    %2045 = vmatprep.subr.mxu0 0.0
    %2046 = vmatpush1.msra.mxu0 0.0
    %2047 = vmatprep.subr.mxu0 0.0
    %2048 = vmatpush1.msra.mxu0 0.0
    %2049 = vmatprep.subr.mxu0 0.0
    %2050 = vmatpush1.msra.mxu0 0.0
    %2051 = vmatprep.subr.mxu0 0.0
    %2052 = vmatpush1.msra.mxu0 0.0
    %2053 = vmatprep.subr.mxu0 0.0
    %2054 = vmatpush1.msra.mxu0 0.0
    %2055 = vmatprep.subr.mxu0 0.0
    %2056 = vmatpush1.msra.mxu0 0.0
    %2057 = vmatprep.subr.mxu0 0.0
    %2058 = vmatpush1.msra.mxu0 0.0
    %2059 = vmatprep.subr.mxu0 0.0
    %2060 = vmatpush1.msra.mxu0 0.0
    %2061 = vmatprep.subr.mxu0 0.0
    %2062 = vmatpush1.msra.mxu0 0.0
    %2063 = vmatprep.subr.mxu0 0.0
    %2064 = vmatpush1.msra.mxu0 0.0
    %2065 = vmatprep.subr.mxu0 0.0
    %2066 = vmatpush1.msra.mxu0 0.0
    %2067 = vmatprep.subr.mxu0 0.0
    %2068 = vmatpush1.msra.mxu0 0.0
    %2069 = vmatprep.subr.mxu0 0.0
    %2070 = vmatpush1.msra.mxu0 0.0
    %2071 = vmatprep.subr.mxu0 0.0
    %2072 = vmatpush1.msra.mxu0 0.0
    %2073 = vmatprep.subr.mxu0 0.0
    %2074 = vmatpush1.msra.mxu0 0.0
    %2075 = vmatprep.subr.mxu0 0.0
    %2076 = vmatpush1.msra.mxu0 0.0
    %2077 = vmatprep.subr.mxu0 0.0
    %2078 = vmatpush1.msra.mxu0 0.0
    %2079 = vmatprep.mubr.f32.mxu0 0.0
    %2080 = vmatmul.mubr.f32.gmra.mrb[0].mxu0 %v2010
    %v2081 = vpop.f32.mrb[0].mxu0
    %v2082 = vadd.f32 %v2007, %v2081
    %v2083 = vpop.f32.mrb[0].mxu0
    %2084 = vmatprep.mubr.f32.mxu0 0.0
    %2085 = vmatmul.mubr.f32.gmra.mrb[0].mxu0 %v2013
    %v2086 = vpop.f32.mrb[0].mxu0
    %v2087 = vadd.f32 %v2007, %v2086
    %v2088 = vpop.f32.mrb[0].mxu0
    %2089 = vdwg.mxu0
    %s2090 = scalar_lea.vmem %s10, 32
    %v2091 = vld [vmem:[%s2090] sm:$0xff]
    %v2092 = vld [vmem:[%s2090 + $0x8] sm:$0xff]
    %v2093 = vld [vmem:[%s2090 + $0x10] sm:$0xff]
    %v2094 = vld [vmem:[%s2090 + $0x18] sm:$0xff]
    %2097 = vrot.lane.b32.xlu0 %v2082, 96
    %v2098 = vpop.permute.xlu0 %2097
    %2099 = vrot.lane.b32.xlu0 %v2087, 96
    %v2100 = vpop.permute.xlu0 %2099
    %v2101 = vsel %vm547, %v2082, 0
    %v2103 = vsel %vm547, %v2087, 0
    %v2105 = vsel %vm547, %v2098, 0
    %v2107 = vsel %vm547, %v2100, 0
    %2109 = vmatprep.subr.mxu0 0.0
    %2110 = vmatpush1.xpose.msra.mxu0 %v2105
    %2111 = vmatprep.subr.mxu0 0.0
    %2112 = vmatpush1.xpose.msra.mxu0 %v2107
    %2113 = vmatprep.subr.mxu0 0.0
    %2114 = vmatpush1.xpose.msra.mxu0 0.0
    %2115 = vmatprep.subr.mxu0 0.0
    %2116 = vmatpush1.xpose.msra.mxu0 0.0
    %2117 = vmatprep.subr.mxu0 0.0
    %2118 = vmatpush1.xpose.msra.mxu0 0.0
    %2119 = vmatprep.subr.mxu0 0.0
    %2120 = vmatpush1.xpose.msra.mxu0 0.0
    %2121 = vmatprep.subr.mxu0 0.0
    %2122 = vmatpush1.xpose.msra.mxu0 0.0
    %2123 = vmatprep.subr.mxu0 0.0
    %2124 = vmatpush1.xpose.msra.mxu0 0.0
    %2125 = vmatprep.subr.mxu0 0.0
    %2126 = vmatpush1.xpose.msra.mxu0 0.0
    %2127 = vmatprep.subr.mxu0 0.0
    %2128 = vmatpush1.xpose.msra.mxu0 0.0
    %2129 = vmatprep.subr.mxu0 0.0
    %2130 = vmatpush1.xpose.msra.mxu0 0.0
    %2131 = vmatprep.subr.mxu0 0.0
    %2132 = vmatpush1.xpose.msra.mxu0 0.0
    %2133 = vmatprep.subr.mxu0 0.0
    %2134 = vmatpush1.xpose.msra.mxu0 0.0
    %2135 = vmatprep.subr.mxu0 0.0
    %2136 = vmatpush1.xpose.msra.mxu0 0.0
    %2137 = vmatprep.subr.mxu0 0.0
    %2138 = vmatpush1.xpose.msra.mxu0 0.0
    %2139 = vmatprep.subr.mxu0 0.0
    %2140 = vmatpush1.xpose.msra.mxu0 0.0
    %2141 = vmatprep.subr.mxu0 0.0
    %2142 = vmatpush1.xpose.msra.mxu0 0.0
    %2143 = vmatprep.subr.mxu0 0.0
    %2144 = vmatpush1.xpose.msra.mxu0 0.0
    %2145 = vmatprep.subr.mxu0 0.0
    %2146 = vmatpush1.xpose.msra.mxu0 0.0
    %2147 = vmatprep.subr.mxu0 0.0
    %2148 = vmatpush1.xpose.msra.mxu0 0.0
    %2149 = vmatprep.subr.mxu0 0.0
    %2150 = vmatpush1.xpose.msra.mxu0 0.0
    %2151 = vmatprep.subr.mxu0 0.0
    %2152 = vmatpush1.xpose.msra.mxu0 0.0
    %2153 = vmatprep.subr.mxu0 0.0
    %2154 = vmatpush1.xpose.msra.mxu0 0.0
    %2155 = vmatprep.subr.mxu0 0.0
    %2156 = vmatpush1.xpose.msra.mxu0 0.0
    %2157 = vmatprep.subr.mxu0 0.0
    %2158 = vmatpush1.xpose.msra.mxu0 0.0
    %2159 = vmatprep.subr.mxu0 0.0
    %2160 = vmatpush1.xpose.msra.mxu0 0.0
    %2161 = vmatprep.subr.mxu0 0.0
    %2162 = vmatpush1.xpose.msra.mxu0 0.0
    %2163 = vmatprep.subr.mxu0 0.0
    %2164 = vmatpush1.xpose.msra.mxu0 0.0
    %2165 = vmatprep.subr.mxu0 0.0
    %2166 = vmatpush1.xpose.msra.mxu0 0.0
    %2167 = vmatprep.subr.mxu0 0.0
    %2168 = vmatpush1.xpose.msra.mxu0 0.0
    %2169 = vmatprep.subr.mxu0 0.0
    %2170 = vmatpush1.xpose.msra.mxu0 0.0
    %2171 = vmatprep.subr.mxu0 0.0
    %2172 = vmatpush1.xpose.msra.mxu0 0.0
    %2173 = vmatprep.mubr.f32.mxu0 0.0
    %2174 = vmatmul.mubr.f32.gmra.mrb[0].mxu0 %v2101
    %v2175 = vpop.f32.mrb[0].mxu0
    %v2176 = vadd.f32 0.0, %v2175
    %v2177 = vpop.f32.mrb[0].mxu0
    %2178 = vmatprep.mubr.f32.mxu0 0.0
    %2179 = vmatmul.mubr.f32.gmra.mrb[0].mxu0 %v2103
    %v2180 = vpop.f32.mrb[0].mxu0
    %v2181 = vadd.f32 0.0, %v2180
    %v2182 = vpop.f32.mrb[0].mxu0
    %2183 = vdwg.mxu0
    %v2184 = vmul.f32 %v2176, 0.35355338
    %v2185 = vmul.f32 %v2181, 0.35355338
    %v2186 = vadd.f32 %v2184, %v396
    %v2187 = vadd.f32 %v2185, %v397
    %v2188 = vsel %vm635, %v2186, -inf
    %2189 = vmax.xlane.f32.xlu0 %v2188
    %v2190 = vpop.xlane.xlu0 %2189
    %v2191 = vsel %vm639, %v2187, -inf
    %2192 = vmax.xlane.f32.xlu0 %v2191
    %v2193 = vpop.xlane.xlu0 %2192
    %v2194 = vsub.f32 %v2186, %v2190
    %v2195 = vsub.f32 %v2187, %v2193
    %v2196 = vmul.f32 %v2194, 1.442695
    %v2197 = vpow.pop %v2196
    %v2198 = vmul.f32 %v2195, 1.442695
    %v2199 = vpow.pop %v2198
    %v2200 = vsel %vm635, %v2197, 0.0
    %2201 = vadd.xlane.f32.xlu0 %v2200
    %v2202 = vpop.xlane.xlu0 %2201
    %v2203 = vsel %vm639, %v2199, 0.0
    %2204 = vadd.xlane.f32.xlu0 %v2203
    %v2205 = vpop.xlane.xlu0 %2204
    %v2206 = vrcp.pop %v2202
    %v2207 = vrcp.pop %v2205
    %v2208 = vmul.f32 %v2197, %v2206
    %v2209 = vmul.f32 %v2199, %v2207
    %2210 = vrot.lane.b32.xlu0 %v2082, 64
    %v2211 = vpop.permute.xlu0 %2210
    %2212 = vrot.lane.b32.xlu0 %v2087, 64
    %v2213 = vpop.permute.xlu0 %2212
    %v2216 = vsel %vm635, %v2208, 0
    %v2219 = vsel %vm635, %v2209, 0
    %v2221 = vsel %vm670, %v2213, 0
    %2223 = vmatprep.subr.mxu0 0.0
    %2224 = vmatpush1.msra.mxu0 %v2211
    %2225 = vmatprep.subr.mxu0 0.0
    %2226 = vmatpush1.msra.mxu0 %v2221
    %2227 = vmatprep.subr.mxu0 0.0
    %2228 = vmatpush1.msra.mxu0 0.0
    %2229 = vmatprep.subr.mxu0 0.0
    %2230 = vmatpush1.msra.mxu0 0.0
    %2231 = vmatprep.subr.mxu0 0.0
    %2232 = vmatpush1.msra.mxu0 0.0
    %2233 = vmatprep.subr.mxu0 0.0
    %2234 = vmatpush1.msra.mxu0 0.0
    %2235 = vmatprep.subr.mxu0 0.0
    %2236 = vmatpush1.msra.mxu0 0.0
    %2237 = vmatprep.subr.mxu0 0.0
    %2238 = vmatpush1.msra.mxu0 0.0
    %2239 = vmatprep.subr.mxu0 0.0
    %2240 = vmatpush1.msra.mxu0 0.0
    %2241 = vmatprep.subr.mxu0 0.0
    %2242 = vmatpush1.msra.mxu0 0.0
    %2243 = vmatprep.subr.mxu0 0.0
    %2244 = vmatpush1.msra.mxu0 0.0
    %2245 = vmatprep.subr.mxu0 0.0
    %2246 = vmatpush1.msra.mxu0 0.0
    %2247 = vmatprep.subr.mxu0 0.0
    %2248 = vmatpush1.msra.mxu0 0.0
    %2249 = vmatprep.subr.mxu0 0.0
    %2250 = vmatpush1.msra.mxu0 0.0
    %2251 = vmatprep.subr.mxu0 0.0
    %2252 = vmatpush1.msra.mxu0 0.0
    %2253 = vmatprep.subr.mxu0 0.0
    %2254 = vmatpush1.msra.mxu0 0.0
    %2255 = vmatprep.subr.mxu0 0.0
    %2256 = vmatpush1.msra.mxu0 0.0
    %2257 = vmatprep.subr.mxu0 0.0
    %2258 = vmatpush1.msra.mxu0 0.0
    %2259 = vmatprep.subr.mxu0 0.0
    %2260 = vmatpush1.msra.mxu0 0.0
    %2261 = vmatprep.subr.mxu0 0.0
    %2262 = vmatpush1.msra.mxu0 0.0
    %2263 = vmatprep.subr.mxu0 0.0
    %2264 = vmatpush1.msra.mxu0 0.0
    %2265 = vmatprep.subr.mxu0 0.0
    %2266 = vmatpush1.msra.mxu0 0.0
    %2267 = vmatprep.subr.mxu0 0.0
    %2268 = vmatpush1.msra.mxu0 0.0
    %2269 = vmatprep.subr.mxu0 0.0
    %2270 = vmatpush1.msra.mxu0 0.0
    %2271 = vmatprep.subr.mxu0 0.0
    %2272 = vmatpush1.msra.mxu0 0.0
    %2273 = vmatprep.subr.mxu0 0.0
    %2274 = vmatpush1.msra.mxu0 0.0
    %2275 = vmatprep.subr.mxu0 0.0
    %2276 = vmatpush1.msra.mxu0 0.0
    %2277 = vmatprep.subr.mxu0 0.0
    %2278 = vmatpush1.msra.mxu0 0.0
    %2279 = vmatprep.subr.mxu0 0.0
    %2280 = vmatpush1.msra.mxu0 0.0
    %2281 = vmatprep.subr.mxu0 0.0
    %2282 = vmatpush1.msra.mxu0 0.0
    %2283 = vmatprep.subr.mxu0 0.0
    %2284 = vmatpush1.msra.mxu0 0.0
    %2285 = vmatprep.subr.mxu0 0.0
    %2286 = vmatpush1.msra.mxu0 0.0
    %2287 = vmatprep.mubr.f32.mxu0 0.0
    %2288 = vmatmul.mubr.f32.gmra.mrb[0].mxu0 %v2216
    %v2289 = vpop.f32.mrb[0].mxu0
    %v2290 = vadd.f32 0.0, %v2289
    %v2291 = vpop.f32.mrb[0].mxu0
    %2292 = vmatprep.mubr.f32.mxu0 0.0
    %2293 = vmatmul.mubr.f32.gmra.mrb[0].mxu0 %v2219
    %v2294 = vpop.f32.mrb[0].mxu0
    %v2295 = vadd.f32 0.0, %v2294
    %v2296 = vpop.f32.mrb[0].mxu0
    %2297 = vdwg.mxu0
    %2298 = vrot.lane.b32.xlu0 %v2082, 120
    %v2299 = vpop.permute.xlu0 %2298
    %2300 = vrot.lane.b32.xlu0 %v2087, 120
    %v2301 = vpop.permute.xlu0 %2300
    %2302 = vrot.lane.b32.xlu0 %v2082, 88
    %v2303 = vpop.permute.xlu0 %2302
    %2304 = vrot.lane.b32.xlu0 %v2087, 88
    %v2305 = vpop.permute.xlu0 %2304
    %v2306 = vsel %vm547, %v2299, 0
    %v2308 = vsel %vm547, %v2301, 0
    %v2310 = vsel %vm547, %v2303, 0
    %v2312 = vsel %vm547, %v2305, 0
    %2314 = vmatprep.subr.mxu0 0.0
    %2315 = vmatpush1.xpose.msra.mxu0 %v2310
    %2316 = vmatprep.subr.mxu0 0.0
    %2317 = vmatpush1.xpose.msra.mxu0 %v2312
    %2318 = vmatprep.subr.mxu0 0.0
    %2319 = vmatpush1.xpose.msra.mxu0 0.0
    %2320 = vmatprep.subr.mxu0 0.0
    %2321 = vmatpush1.xpose.msra.mxu0 0.0
    %2322 = vmatprep.subr.mxu0 0.0
    %2323 = vmatpush1.xpose.msra.mxu0 0.0
    %2324 = vmatprep.subr.mxu0 0.0
    %2325 = vmatpush1.xpose.msra.mxu0 0.0
    %2326 = vmatprep.subr.mxu0 0.0
    %2327 = vmatpush1.xpose.msra.mxu0 0.0
    %2328 = vmatprep.subr.mxu0 0.0
    %2329 = vmatpush1.xpose.msra.mxu0 0.0
    %2330 = vmatprep.subr.mxu0 0.0
    %2331 = vmatpush1.xpose.msra.mxu0 0.0
    %2332 = vmatprep.subr.mxu0 0.0
    %2333 = vmatpush1.xpose.msra.mxu0 0.0
    %2334 = vmatprep.subr.mxu0 0.0
    %2335 = vmatpush1.xpose.msra.mxu0 0.0
    %2336 = vmatprep.subr.mxu0 0.0
    %2337 = vmatpush1.xpose.msra.mxu0 0.0
    %2338 = vmatprep.subr.mxu0 0.0
    %2339 = vmatpush1.xpose.msra.mxu0 0.0
    %2340 = vmatprep.subr.mxu0 0.0
    %2341 = vmatpush1.xpose.msra.mxu0 0.0
    %2342 = vmatprep.subr.mxu0 0.0
    %2343 = vmatpush1.xpose.msra.mxu0 0.0
    %2344 = vmatprep.subr.mxu0 0.0
    %2345 = vmatpush1.xpose.msra.mxu0 0.0
    %2346 = vmatprep.subr.mxu0 0.0
    %2347 = vmatpush1.xpose.msra.mxu0 0.0
    %2348 = vmatprep.subr.mxu0 0.0
    %2349 = vmatpush1.xpose.msra.mxu0 0.0
    %2350 = vmatprep.subr.mxu0 0.0
    %2351 = vmatpush1.xpose.msra.mxu0 0.0
    %2352 = vmatprep.subr.mxu0 0.0
    %2353 = vmatpush1.xpose.msra.mxu0 0.0
    %2354 = vmatprep.subr.mxu0 0.0
    %2355 = vmatpush1.xpose.msra.mxu0 0.0
    %2356 = vmatprep.subr.mxu0 0.0
    %2357 = vmatpush1.xpose.msra.mxu0 0.0
    %2358 = vmatprep.subr.mxu0 0.0
    %2359 = vmatpush1.xpose.msra.mxu0 0.0
    %2360 = vmatprep.subr.mxu0 0.0
    %2361 = vmatpush1.xpose.msra.mxu0 0.0
    %2362 = vmatprep.subr.mxu0 0.0
    %2363 = vmatpush1.xpose.msra.mxu0 0.0
    %2364 = vmatprep.subr.mxu0 0.0
    %2365 = vmatpush1.xpose.msra.mxu0 0.0
    %2366 = vmatprep.subr.mxu0 0.0
    %2367 = vmatpush1.xpose.msra.mxu0 0.0
    %2368 = vmatprep.subr.mxu0 0.0
    %2369 = vmatpush1.xpose.msra.mxu0 0.0
    %2370 = vmatprep.subr.mxu0 0.0
    %2371 = vmatpush1.xpose.msra.mxu0 0.0
    %2372 = vmatprep.subr.mxu0 0.0
    %2373 = vmatpush1.xpose.msra.mxu0 0.0
    %2374 = vmatprep.subr.mxu0 0.0
    %2375 = vmatpush1.xpose.msra.mxu0 0.0
    %2376 = vmatprep.subr.mxu0 0.0
    %2377 = vmatpush1.xpose.msra.mxu0 0.0
    %2378 = vmatprep.mubr.f32.mxu0 0.0
    %2379 = vmatmul.mubr.f32.gmra.mrb[0].mxu0 %v2306
    %v2380 = vpop.f32.mrb[0].mxu0
    %v2381 = vadd.f32 0.0, %v2380
    %v2382 = vpop.f32.mrb[0].mxu0
    %2383 = vmatprep.mubr.f32.mxu0 0.0
    %2384 = vmatmul.mubr.f32.gmra.mrb[0].mxu0 %v2308
    %v2385 = vpop.f32.mrb[0].mxu0
    %v2386 = vadd.f32 0.0, %v2385
    %v2387 = vpop.f32.mrb[0].mxu0
    %2388 = vdwg.mxu0
    %v2389 = vmul.f32 %v2381, 0.35355338
    %v2390 = vmul.f32 %v2386, 0.35355338
    %v2391 = vadd.f32 %v2389, %v396
    %v2392 = vadd.f32 %v2390, %v397
    %v2393 = vsel %vm635, %v2391, -inf
    %2394 = vmax.xlane.f32.xlu0 %v2393
    %v2395 = vpop.xlane.xlu0 %2394
    %v2396 = vsel %vm639, %v2392, -inf
    %2397 = vmax.xlane.f32.xlu0 %v2396
    %v2398 = vpop.xlane.xlu0 %2397
    %v2399 = vsub.f32 %v2391, %v2395
    %v2400 = vsub.f32 %v2392, %v2398
    %v2401 = vmul.f32 %v2399, 1.442695
    %v2402 = vpow.pop %v2401
    %v2403 = vmul.f32 %v2400, 1.442695
    %v2404 = vpow.pop %v2403
    %v2405 = vsel %vm635, %v2402, 0.0
    %2406 = vadd.xlane.f32.xlu0 %v2405
    %v2407 = vpop.xlane.xlu0 %2406
    %v2408 = vsel %vm639, %v2404, 0.0
    %2409 = vadd.xlane.f32.xlu0 %v2408
    %v2410 = vpop.xlane.xlu0 %2409
    %v2411 = vrcp.pop %v2407
    %v2412 = vrcp.pop %v2410
    %v2413 = vmul.f32 %v2402, %v2411
    %v2414 = vmul.f32 %v2404, %v2412
    %2415 = vrot.lane.b32.xlu0 %v2082, 56
    %v2416 = vpop.permute.xlu0 %2415
    %2417 = vrot.lane.b32.xlu0 %v2087, 56
    %v2418 = vpop.permute.xlu0 %2417
    %v2421 = vsel %vm635, %v2413, 0
    %v2424 = vsel %vm635, %v2414, 0
    %v2426 = vsel %vm670, %v2418, 0
    %2428 = vmatprep.subr.mxu0 0.0
    %2429 = vmatpush1.msra.mxu0 %v2416
    %2430 = vmatprep.subr.mxu0 0.0
    %2431 = vmatpush1.msra.mxu0 %v2426
    %2432 = vmatprep.subr.mxu0 0.0
    %2433 = vmatpush1.msra.mxu0 0.0
    %2434 = vmatprep.subr.mxu0 0.0
    %2435 = vmatpush1.msra.mxu0 0.0
    %2436 = vmatprep.subr.mxu0 0.0
    %2437 = vmatpush1.msra.mxu0 0.0
    %2438 = vmatprep.subr.mxu0 0.0
    %2439 = vmatpush1.msra.mxu0 0.0
    %2440 = vmatprep.subr.mxu0 0.0
    %2441 = vmatpush1.msra.mxu0 0.0
    %2442 = vmatprep.subr.mxu0 0.0
    %2443 = vmatpush1.msra.mxu0 0.0
    %2444 = vmatprep.subr.mxu0 0.0
    %2445 = vmatpush1.msra.mxu0 0.0
    %2446 = vmatprep.subr.mxu0 0.0
    %2447 = vmatpush1.msra.mxu0 0.0
    %2448 = vmatprep.subr.mxu0 0.0
    %2449 = vmatpush1.msra.mxu0 0.0
    %2450 = vmatprep.subr.mxu0 0.0
    %2451 = vmatpush1.msra.mxu0 0.0
    %2452 = vmatprep.subr.mxu0 0.0
    %2453 = vmatpush1.msra.mxu0 0.0
    %2454 = vmatprep.subr.mxu0 0.0
    %2455 = vmatpush1.msra.mxu0 0.0
    %2456 = vmatprep.subr.mxu0 0.0
    %2457 = vmatpush1.msra.mxu0 0.0
    %2458 = vmatprep.subr.mxu0 0.0
    %2459 = vmatpush1.msra.mxu0 0.0
    %2460 = vmatprep.subr.mxu0 0.0
    %2461 = vmatpush1.msra.mxu0 0.0
    %2462 = vmatprep.subr.mxu0 0.0
    %2463 = vmatpush1.msra.mxu0 0.0
    %2464 = vmatprep.subr.mxu0 0.0
    %2465 = vmatpush1.msra.mxu0 0.0
    %2466 = vmatprep.subr.mxu0 0.0
    %2467 = vmatpush1.msra.mxu0 0.0
    %2468 = vmatprep.subr.mxu0 0.0
    %2469 = vmatpush1.msra.mxu0 0.0
    %2470 = vmatprep.subr.mxu0 0.0
    %2471 = vmatpush1.msra.mxu0 0.0
    %2472 = vmatprep.subr.mxu0 0.0
    %2473 = vmatpush1.msra.mxu0 0.0
    %2474 = vmatprep.subr.mxu0 0.0
    %2475 = vmatpush1.msra.mxu0 0.0
    %2476 = vmatprep.subr.mxu0 0.0
    %2477 = vmatpush1.msra.mxu0 0.0
    %2478 = vmatprep.subr.mxu0 0.0
    %2479 = vmatpush1.msra.mxu0 0.0
    %2480 = vmatprep.subr.mxu0 0.0
    %2481 = vmatpush1.msra.mxu0 0.0
    %2482 = vmatprep.subr.mxu0 0.0
    %2483 = vmatpush1.msra.mxu0 0.0
    %2484 = vmatprep.subr.mxu0 0.0
    %2485 = vmatpush1.msra.mxu0 0.0
    %2486 = vmatprep.subr.mxu0 0.0
    %2487 = vmatpush1.msra.mxu0 0.0
    %2488 = vmatprep.subr.mxu0 0.0
    %2489 = vmatpush1.msra.mxu0 0.0
    %2490 = vmatprep.subr.mxu0 0.0
    %2491 = vmatpush1.msra.mxu0 0.0
    %2492 = vmatprep.mubr.f32.mxu0 0.0
    %2493 = vmatmul.mubr.f32.gmra.mrb[0].mxu0 %v2421
    %v2494 = vpop.f32.mrb[0].mxu0
    %v2495 = vadd.f32 0.0, %v2494
    %v2496 = vpop.f32.mrb[0].mxu0
    %2497 = vmatprep.mubr.f32.mxu0 0.0
    %2498 = vmatmul.mubr.f32.gmra.mrb[0].mxu0 %v2424
    %v2499 = vpop.f32.mrb[0].mxu0
    %v2500 = vadd.f32 0.0, %v2499
    %v2501 = vpop.f32.mrb[0].mxu0
    %2502 = vdwg.mxu0
    %v2504 = vsel %vm547, %v2495, 0
    %v2507 = vsel %vm547, %v2500, 0
    %2509 = vmatprep.subr.mxu0 0.0
    %2510 = vmatpush1.msra.mxu0 %v2092
    %2511 = vmatprep.subr.mxu0 0.0
    %2512 = vmatpush1.msra.mxu0 0.0
    %2513 = vmatprep.subr.mxu0 0.0
    %2514 = vmatpush1.msra.mxu0 0.0
    %2515 = vmatprep.subr.mxu0 0.0
    %2516 = vmatpush1.msra.mxu0 0.0
    %2517 = vmatprep.subr.mxu0 0.0
    %2518 = vmatpush1.msra.mxu0 0.0
    %2519 = vmatprep.subr.mxu0 0.0
    %2520 = vmatpush1.msra.mxu0 0.0
    %2521 = vmatprep.subr.mxu0 0.0
    %2522 = vmatpush1.msra.mxu0 0.0
    %2523 = vmatprep.subr.mxu0 0.0
    %2524 = vmatpush1.msra.mxu0 0.0
    %2525 = vmatprep.subr.mxu0 0.0
    %2526 = vmatpush1.msra.mxu0 0.0
    %2527 = vmatprep.subr.mxu0 0.0
    %2528 = vmatpush1.msra.mxu0 0.0
    %2529 = vmatprep.subr.mxu0 0.0
    %2530 = vmatpush1.msra.mxu0 0.0
    %2531 = vmatprep.subr.mxu0 0.0
    %2532 = vmatpush1.msra.mxu0 0.0
    %2533 = vmatprep.subr.mxu0 0.0
    %2534 = vmatpush1.msra.mxu0 0.0
    %2535 = vmatprep.subr.mxu0 0.0
    %2536 = vmatpush1.msra.mxu0 0.0
    %2537 = vmatprep.subr.mxu0 0.0
    %2538 = vmatpush1.msra.mxu0 0.0
    %2539 = vmatprep.subr.mxu0 0.0
    %2540 = vmatpush1.msra.mxu0 0.0
    %2541 = vmatprep.subr.mxu0 0.0
    %2542 = vmatpush1.msra.mxu0 0.0
    %2543 = vmatprep.subr.mxu0 0.0
    %2544 = vmatpush1.msra.mxu0 0.0
    %2545 = vmatprep.subr.mxu0 0.0
    %2546 = vmatpush1.msra.mxu0 0.0
    %2547 = vmatprep.subr.mxu0 0.0
    %2548 = vmatpush1.msra.mxu0 0.0
    %2549 = vmatprep.subr.mxu0 0.0
    %2550 = vmatpush1.msra.mxu0 0.0
    %2551 = vmatprep.subr.mxu0 0.0
    %2552 = vmatpush1.msra.mxu0 0.0
    %2553 = vmatprep.subr.mxu0 0.0
    %2554 = vmatpush1.msra.mxu0 0.0
    %2555 = vmatprep.subr.mxu0 0.0
    %2556 = vmatpush1.msra.mxu0 0.0
    %2557 = vmatprep.subr.mxu0 0.0
    %2558 = vmatpush1.msra.mxu0 0.0
    %2559 = vmatprep.subr.mxu0 0.0
    %2560 = vmatpush1.msra.mxu0 0.0
    %2561 = vmatprep.subr.mxu0 0.0
    %2562 = vmatpush1.msra.mxu0 0.0
    %2563 = vmatprep.subr.mxu0 0.0
    %2564 = vmatpush1.msra.mxu0 0.0
    %2565 = vmatprep.subr.mxu0 0.0
    %2566 = vmatpush1.msra.mxu0 0.0
    %2567 = vmatprep.subr.mxu0 0.0
    %2568 = vmatpush1.msra.mxu0 0.0
    %2569 = vmatprep.subr.mxu0 0.0
    %2570 = vmatpush1.msra.mxu0 0.0
    %2571 = vmatprep.subr.mxu0 0.0
    %2572 = vmatpush1.msra.mxu0 0.0
    %2573 = vmatprep.mubr.f32.mxu0 0.0
    %2574 = vmatmul.mubr.f32.gmra.mrb[0].mxu0 %v2504
    %v2575 = vpop.f32.mrb[0].mxu0
    %v2576 = vadd.f32 0.0, %v2575
    %v2577 = vpop.f32.mrb[0].mxu0
    %2578 = vmatprep.mubr.f32.mxu0 0.0
    %2579 = vmatmul.mubr.f32.gmra.mrb[0].mxu0 %v2507
    %v2580 = vpop.f32.mrb[0].mxu0
    %v2581 = vadd.f32 0.0, %v2580
    %v2582 = vpop.f32.mrb[0].mxu0
    %2583 = vdwg.mxu0
    %v2585 = vsel %vm547, %v2290, 0
    %v2588 = vsel %vm547, %v2295, 0
    %2590 = vmatprep.subr.mxu0 0.0
    %2591 = vmatpush1.msra.mxu0 %v2091
    %2592 = vmatprep.subr.mxu0 0.0
    %2593 = vmatpush1.msra.mxu0 0.0
    %2594 = vmatprep.subr.mxu0 0.0
    %2595 = vmatpush1.msra.mxu0 0.0
    %2596 = vmatprep.subr.mxu0 0.0
    %2597 = vmatpush1.msra.mxu0 0.0
    %2598 = vmatprep.subr.mxu0 0.0
    %2599 = vmatpush1.msra.mxu0 0.0
    %2600 = vmatprep.subr.mxu0 0.0
    %2601 = vmatpush1.msra.mxu0 0.0
    %2602 = vmatprep.subr.mxu0 0.0
    %2603 = vmatpush1.msra.mxu0 0.0
    %2604 = vmatprep.subr.mxu0 0.0
    %2605 = vmatpush1.msra.mxu0 0.0
    %2606 = vmatprep.subr.mxu0 0.0
    %2607 = vmatpush1.msra.mxu0 0.0
    %2608 = vmatprep.subr.mxu0 0.0
    %2609 = vmatpush1.msra.mxu0 0.0
    %2610 = vmatprep.subr.mxu0 0.0
    %2611 = vmatpush1.msra.mxu0 0.0
    %2612 = vmatprep.subr.mxu0 0.0
    %2613 = vmatpush1.msra.mxu0 0.0
    %2614 = vmatprep.subr.mxu0 0.0
    %2615 = vmatpush1.msra.mxu0 0.0
    %2616 = vmatprep.subr.mxu0 0.0
    %2617 = vmatpush1.msra.mxu0 0.0
    %2618 = vmatprep.subr.mxu0 0.0
    %2619 = vmatpush1.msra.mxu0 0.0
    %2620 = vmatprep.subr.mxu0 0.0
    %2621 = vmatpush1.msra.mxu0 0.0
    %2622 = vmatprep.subr.mxu0 0.0
    %2623 = vmatpush1.msra.mxu0 0.0
    %2624 = vmatprep.subr.mxu0 0.0
    %2625 = vmatpush1.msra.mxu0 0.0
    %2626 = vmatprep.subr.mxu0 0.0
    %2627 = vmatpush1.msra.mxu0 0.0
    %2628 = vmatprep.subr.mxu0 0.0
    %2629 = vmatpush1.msra.mxu0 0.0
    %2630 = vmatprep.subr.mxu0 0.0
    %2631 = vmatpush1.msra.mxu0 0.0
    %2632 = vmatprep.subr.mxu0 0.0
    %2633 = vmatpush1.msra.mxu0 0.0
    %2634 = vmatprep.subr.mxu0 0.0
    %2635 = vmatpush1.msra.mxu0 0.0
    %2636 = vmatprep.subr.mxu0 0.0
    %2637 = vmatpush1.msra.mxu0 0.0
    %2638 = vmatprep.subr.mxu0 0.0
    %2639 = vmatpush1.msra.mxu0 0.0
    %2640 = vmatprep.subr.mxu0 0.0
    %2641 = vmatpush1.msra.mxu0 0.0
    %2642 = vmatprep.subr.mxu0 0.0
    %2643 = vmatpush1.msra.mxu0 0.0
    %2644 = vmatprep.subr.mxu0 0.0
    %2645 = vmatpush1.msra.mxu0 0.0
    %2646 = vmatprep.subr.mxu0 0.0
    %2647 = vmatpush1.msra.mxu0 0.0
    %2648 = vmatprep.subr.mxu0 0.0
    %2649 = vmatpush1.msra.mxu0 0.0
    %2650 = vmatprep.subr.mxu0 0.0
    %2651 = vmatpush1.msra.mxu0 0.0
    %2652 = vmatprep.subr.mxu0 0.0
    %2653 = vmatpush1.msra.mxu0 0.0
    %2654 = vmatprep.mubr.f32.mxu0 0.0
    %2655 = vmatmul.mubr.f32.gmra.mrb[0].mxu0 %v2585
    %v2656 = vpop.f32.mrb[0].mxu0
    %v2657 = vadd.f32 %v2576, %v2656
    %v2658 = vpop.f32.mrb[0].mxu0
    %2659 = vmatprep.mubr.f32.mxu0 0.0
    %2660 = vmatmul.mubr.f32.gmra.mrb[0].mxu0 %v2588
    %v2661 = vpop.f32.mrb[0].mxu0
    %v2662 = vadd.f32 %v2581, %v2661
    %v2663 = vpop.f32.mrb[0].mxu0
    %2664 = vdwg.mxu0
    %2665 = vrot.lane.b32.xlu0 %v2082, 112
    %v2666 = vpop.permute.xlu0 %2665
    %2667 = vrot.lane.b32.xlu0 %v2087, 112
    %v2668 = vpop.permute.xlu0 %2667
    %2669 = vrot.lane.b32.xlu0 %v2082, 80
    %v2670 = vpop.permute.xlu0 %2669
    %2671 = vrot.lane.b32.xlu0 %v2087, 80
    %v2672 = vpop.permute.xlu0 %2671
    %v2673 = vsel %vm547, %v2666, 0
    %v2675 = vsel %vm547, %v2668, 0
    %v2677 = vsel %vm547, %v2670, 0
    %v2679 = vsel %vm547, %v2672, 0
    %2681 = vmatprep.subr.mxu0 0.0
    %2682 = vmatpush1.xpose.msra.mxu0 %v2677
    %2683 = vmatprep.subr.mxu0 0.0
    %2684 = vmatpush1.xpose.msra.mxu0 %v2679
    %2685 = vmatprep.subr.mxu0 0.0
    %2686 = vmatpush1.xpose.msra.mxu0 0.0
    %2687 = vmatprep.subr.mxu0 0.0
    %2688 = vmatpush1.xpose.msra.mxu0 0.0
    %2689 = vmatprep.subr.mxu0 0.0
    %2690 = vmatpush1.xpose.msra.mxu0 0.0
    %2691 = vmatprep.subr.mxu0 0.0
    %2692 = vmatpush1.xpose.msra.mxu0 0.0
    %2693 = vmatprep.subr.mxu0 0.0
    %2694 = vmatpush1.xpose.msra.mxu0 0.0
    %2695 = vmatprep.subr.mxu0 0.0
    %2696 = vmatpush1.xpose.msra.mxu0 0.0
    %2697 = vmatprep.subr.mxu0 0.0
    %2698 = vmatpush1.xpose.msra.mxu0 0.0
    %2699 = vmatprep.subr.mxu0 0.0
    %2700 = vmatpush1.xpose.msra.mxu0 0.0
    %2701 = vmatprep.subr.mxu0 0.0
    %2702 = vmatpush1.xpose.msra.mxu0 0.0
    %2703 = vmatprep.subr.mxu0 0.0
    %2704 = vmatpush1.xpose.msra.mxu0 0.0
    %2705 = vmatprep.subr.mxu0 0.0
    %2706 = vmatpush1.xpose.msra.mxu0 0.0
    %2707 = vmatprep.subr.mxu0 0.0
    %2708 = vmatpush1.xpose.msra.mxu0 0.0
    %2709 = vmatprep.subr.mxu0 0.0
    %2710 = vmatpush1.xpose.msra.mxu0 0.0
    %2711 = vmatprep.subr.mxu0 0.0
    %2712 = vmatpush1.xpose.msra.mxu0 0.0
    %2713 = vmatprep.subr.mxu0 0.0
    %2714 = vmatpush1.xpose.msra.mxu0 0.0
    %2715 = vmatprep.subr.mxu0 0.0
    %2716 = vmatpush1.xpose.msra.mxu0 0.0
    %2717 = vmatprep.subr.mxu0 0.0
    %2718 = vmatpush1.xpose.msra.mxu0 0.0
    %2719 = vmatprep.subr.mxu0 0.0
    %2720 = vmatpush1.xpose.msra.mxu0 0.0
    %2721 = vmatprep.subr.mxu0 0.0
    %2722 = vmatpush1.xpose.msra.mxu0 0.0
    %2723 = vmatprep.subr.mxu0 0.0
    %2724 = vmatpush1.xpose.msra.mxu0 0.0
    %2725 = vmatprep.subr.mxu0 0.0
    %2726 = vmatpush1.xpose.msra.mxu0 0.0
    %2727 = vmatprep.subr.mxu0 0.0
    %2728 = vmatpush1.xpose.msra.mxu0 0.0
    %2729 = vmatprep.subr.mxu0 0.0
    %2730 = vmatpush1.xpose.msra.mxu0 0.0
    %2731 = vmatprep.subr.mxu0 0.0
    %2732 = vmatpush1.xpose.msra.mxu0 0.0
    %2733 = vmatprep.subr.mxu0 0.0
    %2734 = vmatpush1.xpose.msra.mxu0 0.0
    %2735 = vmatprep.subr.mxu0 0.0
    %2736 = vmatpush1.xpose.msra.mxu0 0.0
    %2737 = vmatprep.subr.mxu0 0.0
    %2738 = vmatpush1.xpose.msra.mxu0 0.0
    %2739 = vmatprep.subr.mxu0 0.0
    %2740 = vmatpush1.xpose.msra.mxu0 0.0
    %2741 = vmatprep.subr.mxu0 0.0
    %2742 = vmatpush1.xpose.msra.mxu0 0.0
    %2743 = vmatprep.subr.mxu0 0.0
    %2744 = vmatpush1.xpose.msra.mxu0 0.0
    %2745 = vmatprep.mubr.f32.mxu0 0.0
    %2746 = vmatmul.mubr.f32.gmra.mrb[0].mxu0 %v2673
    %v2747 = vpop.f32.mrb[0].mxu0
    %v2748 = vadd.f32 0.0, %v2747
    %v2749 = vpop.f32.mrb[0].mxu0
    %2750 = vmatprep.mubr.f32.mxu0 0.0
    %2751 = vmatmul.mubr.f32.gmra.mrb[0].mxu0 %v2675
    %v2752 = vpop.f32.mrb[0].mxu0
    %v2753 = vadd.f32 0.0, %v2752
    %v2754 = vpop.f32.mrb[0].mxu0
    %2755 = vdwg.mxu0
    %v2756 = vmul.f32 %v2748, 0.35355338
    %v2757 = vmul.f32 %v2753, 0.35355338
    %v2758 = vadd.f32 %v2756, %v396
    %v2759 = vadd.f32 %v2757, %v397
    %v2760 = vsel %vm635, %v2758, -inf
    %2761 = vmax.xlane.f32.xlu0 %v2760
    %v2762 = vpop.xlane.xlu0 %2761
    %v2763 = vsel %vm639, %v2759, -inf
    %2764 = vmax.xlane.f32.xlu0 %v2763
    %v2765 = vpop.xlane.xlu0 %2764
    %v2766 = vsub.f32 %v2758, %v2762
    %v2767 = vsub.f32 %v2759, %v2765
    %v2768 = vmul.f32 %v2766, 1.442695
    %v2769 = vpow.pop %v2768
    %v2770 = vmul.f32 %v2767, 1.442695
    %v2771 = vpow.pop %v2770
    %v2772 = vsel %vm635, %v2769, 0.0
    %2773 = vadd.xlane.f32.xlu0 %v2772
    %v2774 = vpop.xlane.xlu0 %2773
    %v2775 = vsel %vm639, %v2771, 0.0
    %2776 = vadd.xlane.f32.xlu0 %v2775
    %v2777 = vpop.xlane.xlu0 %2776
    %v2778 = vrcp.pop %v2774
    %v2779 = vrcp.pop %v2777
    %v2780 = vmul.f32 %v2769, %v2778
    %v2781 = vmul.f32 %v2771, %v2779
    %2782 = vrot.lane.b32.xlu0 %v2082, 48
    %v2783 = vpop.permute.xlu0 %2782
    %2784 = vrot.lane.b32.xlu0 %v2087, 48
    %v2785 = vpop.permute.xlu0 %2784
    %v2788 = vsel %vm635, %v2780, 0
    %v2791 = vsel %vm635, %v2781, 0
    %v2793 = vsel %vm670, %v2785, 0
    %2795 = vmatprep.subr.mxu0 0.0
    %2796 = vmatpush1.msra.mxu0 %v2783
    %2797 = vmatprep.subr.mxu0 0.0
    %2798 = vmatpush1.msra.mxu0 %v2793
    %2799 = vmatprep.subr.mxu0 0.0
    %2800 = vmatpush1.msra.mxu0 0.0
    %2801 = vmatprep.subr.mxu0 0.0
    %2802 = vmatpush1.msra.mxu0 0.0
    %2803 = vmatprep.subr.mxu0 0.0
    %2804 = vmatpush1.msra.mxu0 0.0
    %2805 = vmatprep.subr.mxu0 0.0
    %2806 = vmatpush1.msra.mxu0 0.0
    %2807 = vmatprep.subr.mxu0 0.0
    %2808 = vmatpush1.msra.mxu0 0.0
    %2809 = vmatprep.subr.mxu0 0.0
    %2810 = vmatpush1.msra.mxu0 0.0
    %2811 = vmatprep.subr.mxu0 0.0
    %2812 = vmatpush1.msra.mxu0 0.0
    %2813 = vmatprep.subr.mxu0 0.0
    %2814 = vmatpush1.msra.mxu0 0.0
    %2815 = vmatprep.subr.mxu0 0.0
    %2816 = vmatpush1.msra.mxu0 0.0
    %2817 = vmatprep.subr.mxu0 0.0
    %2818 = vmatpush1.msra.mxu0 0.0
    %2819 = vmatprep.subr.mxu0 0.0
    %2820 = vmatpush1.msra.mxu0 0.0
    %2821 = vmatprep.subr.mxu0 0.0
    %2822 = vmatpush1.msra.mxu0 0.0
    %2823 = vmatprep.subr.mxu0 0.0
    %2824 = vmatpush1.msra.mxu0 0.0
    %2825 = vmatprep.subr.mxu0 0.0
    %2826 = vmatpush1.msra.mxu0 0.0
    %2827 = vmatprep.subr.mxu0 0.0
    %2828 = vmatpush1.msra.mxu0 0.0
    %2829 = vmatprep.subr.mxu0 0.0
    %2830 = vmatpush1.msra.mxu0 0.0
    %2831 = vmatprep.subr.mxu0 0.0
    %2832 = vmatpush1.msra.mxu0 0.0
    %2833 = vmatprep.subr.mxu0 0.0
    %2834 = vmatpush1.msra.mxu0 0.0
    %2835 = vmatprep.subr.mxu0 0.0
    %2836 = vmatpush1.msra.mxu0 0.0
    %2837 = vmatprep.subr.mxu0 0.0
    %2838 = vmatpush1.msra.mxu0 0.0
    %2839 = vmatprep.subr.mxu0 0.0
    %2840 = vmatpush1.msra.mxu0 0.0
    %2841 = vmatprep.subr.mxu0 0.0
    %2842 = vmatpush1.msra.mxu0 0.0
    %2843 = vmatprep.subr.mxu0 0.0
    %2844 = vmatpush1.msra.mxu0 0.0
    %2845 = vmatprep.subr.mxu0 0.0
    %2846 = vmatpush1.msra.mxu0 0.0
    %2847 = vmatprep.subr.mxu0 0.0
    %2848 = vmatpush1.msra.mxu0 0.0
    %2849 = vmatprep.subr.mxu0 0.0
    %2850 = vmatpush1.msra.mxu0 0.0
    %2851 = vmatprep.subr.mxu0 0.0
    %2852 = vmatpush1.msra.mxu0 0.0
    %2853 = vmatprep.subr.mxu0 0.0
    %2854 = vmatpush1.msra.mxu0 0.0
    %2855 = vmatprep.subr.mxu0 0.0
    %2856 = vmatpush1.msra.mxu0 0.0
    %2857 = vmatprep.subr.mxu0 0.0
    %2858 = vmatpush1.msra.mxu0 0.0
    %2859 = vmatprep.mubr.f32.mxu0 0.0
    %2860 = vmatmul.mubr.f32.gmra.mrb[0].mxu0 %v2788
    %v2861 = vpop.f32.mrb[0].mxu0
    %v2862 = vadd.f32 0.0, %v2861
    %v2863 = vpop.f32.mrb[0].mxu0
    %2864 = vmatprep.mubr.f32.mxu0 0.0
    %2865 = vmatmul.mubr.f32.gmra.mrb[0].mxu0 %v2791
    %v2866 = vpop.f32.mrb[0].mxu0
    %v2867 = vadd.f32 0.0, %v2866
    %v2868 = vpop.f32.mrb[0].mxu0
    %2869 = vdwg.mxu0
    %v2871 = vsel %vm547, %v2862, 0
    %v2874 = vsel %vm547, %v2867, 0
    %2876 = vmatprep.subr.mxu0 0.0
    %2877 = vmatpush1.msra.mxu0 %v2093
    %2878 = vmatprep.subr.mxu0 0.0
    %2879 = vmatpush1.msra.mxu0 0.0
    %2880 = vmatprep.subr.mxu0 0.0
    %2881 = vmatpush1.msra.mxu0 0.0
    %2882 = vmatprep.subr.mxu0 0.0
    %2883 = vmatpush1.msra.mxu0 0.0
    %2884 = vmatprep.subr.mxu0 0.0
    %2885 = vmatpush1.msra.mxu0 0.0
    %2886 = vmatprep.subr.mxu0 0.0
    %2887 = vmatpush1.msra.mxu0 0.0
    %2888 = vmatprep.subr.mxu0 0.0
    %2889 = vmatpush1.msra.mxu0 0.0
    %2890 = vmatprep.subr.mxu0 0.0
    %2891 = vmatpush1.msra.mxu0 0.0
    %2892 = vmatprep.subr.mxu0 0.0
    %2893 = vmatpush1.msra.mxu0 0.0
    %2894 = vmatprep.subr.mxu0 0.0
    %2895 = vmatpush1.msra.mxu0 0.0
    %2896 = vmatprep.subr.mxu0 0.0
    %2897 = vmatpush1.msra.mxu0 0.0
    %2898 = vmatprep.subr.mxu0 0.0
    %2899 = vmatpush1.msra.mxu0 0.0
    %2900 = vmatprep.subr.mxu0 0.0
    %2901 = vmatpush1.msra.mxu0 0.0
    %2902 = vmatprep.subr.mxu0 0.0
    %2903 = vmatpush1.msra.mxu0 0.0
    %2904 = vmatprep.subr.mxu0 0.0
    %2905 = vmatpush1.msra.mxu0 0.0
    %2906 = vmatprep.subr.mxu0 0.0
    %2907 = vmatpush1.msra.mxu0 0.0
    %2908 = vmatprep.subr.mxu0 0.0
    %2909 = vmatpush1.msra.mxu0 0.0
    %2910 = vmatprep.subr.mxu0 0.0
    %2911 = vmatpush1.msra.mxu0 0.0
    %2912 = vmatprep.subr.mxu0 0.0
    %2913 = vmatpush1.msra.mxu0 0.0
    %2914 = vmatprep.subr.mxu0 0.0
    %2915 = vmatpush1.msra.mxu0 0.0
    %2916 = vmatprep.subr.mxu0 0.0
    %2917 = vmatpush1.msra.mxu0 0.0
    %2918 = vmatprep.subr.mxu0 0.0
    %2919 = vmatpush1.msra.mxu0 0.0
    %2920 = vmatprep.subr.mxu0 0.0
    %2921 = vmatpush1.msra.mxu0 0.0
    %2922 = vmatprep.subr.mxu0 0.0
    %2923 = vmatpush1.msra.mxu0 0.0
    %2924 = vmatprep.subr.mxu0 0.0
    %2925 = vmatpush1.msra.mxu0 0.0
    %2926 = vmatprep.subr.mxu0 0.0
    %2927 = vmatpush1.msra.mxu0 0.0
    %2928 = vmatprep.subr.mxu0 0.0
    %2929 = vmatpush1.msra.mxu0 0.0
    %2930 = vmatprep.subr.mxu0 0.0
    %2931 = vmatpush1.msra.mxu0 0.0
    %2932 = vmatprep.subr.mxu0 0.0
    %2933 = vmatpush1.msra.mxu0 0.0
    %2934 = vmatprep.subr.mxu0 0.0
    %2935 = vmatpush1.msra.mxu0 0.0
    %2936 = vmatprep.subr.mxu0 0.0
    %2937 = vmatpush1.msra.mxu0 0.0
    %2938 = vmatprep.subr.mxu0 0.0
    %2939 = vmatpush1.msra.mxu0 0.0
    %2940 = vmatprep.mubr.f32.mxu0 0.0
    %2941 = vmatmul.mubr.f32.gmra.mrb[0].mxu0 %v2871
    %v2942 = vpop.f32.mrb[0].mxu0
    %v2943 = vadd.f32 0.0, %v2942
    %v2944 = vpop.f32.mrb[0].mxu0
    %2945 = vmatprep.mubr.f32.mxu0 0.0
    %2946 = vmatmul.mubr.f32.gmra.mrb[0].mxu0 %v2874
    %v2947 = vpop.f32.mrb[0].mxu0
    %v2948 = vadd.f32 0.0, %v2947
    %v2949 = vpop.f32.mrb[0].mxu0
    %2950 = vdwg.mxu0
    %v2951 = vadd.f32 %v2657, %v2943
    %v2952 = vadd.f32 %v2662, %v2948
    %2953 = vrot.lane.b32.xlu0 %v2082, 104
    %v2954 = vpop.permute.xlu0 %2953
    %2955 = vrot.lane.b32.xlu0 %v2087, 104
    %v2956 = vpop.permute.xlu0 %2955
    %2957 = vrot.lane.b32.xlu0 %v2082, 72
    %v2958 = vpop.permute.xlu0 %2957
    %2959 = vrot.lane.b32.xlu0 %v2087, 72
    %v2960 = vpop.permute.xlu0 %2959
    %v2961 = vsel %vm547, %v2954, 0
    %v2963 = vsel %vm547, %v2956, 0
    %v2965 = vsel %vm547, %v2958, 0
    %v2967 = vsel %vm547, %v2960, 0
    %2969 = vmatprep.subr.mxu0 0.0
    %2970 = vmatpush1.xpose.msra.mxu0 %v2965
    %2971 = vmatprep.subr.mxu0 0.0
    %2972 = vmatpush1.xpose.msra.mxu0 %v2967
    %2973 = vmatprep.subr.mxu0 0.0
    %2974 = vmatpush1.xpose.msra.mxu0 0.0
    %2975 = vmatprep.subr.mxu0 0.0
    %2976 = vmatpush1.xpose.msra.mxu0 0.0
    %2977 = vmatprep.subr.mxu0 0.0
    %2978 = vmatpush1.xpose.msra.mxu0 0.0
    %2979 = vmatprep.subr.mxu0 0.0
    %2980 = vmatpush1.xpose.msra.mxu0 0.0
    %2981 = vmatprep.subr.mxu0 0.0
    %2982 = vmatpush1.xpose.msra.mxu0 0.0
    %2983 = vmatprep.subr.mxu0 0.0
    %2984 = vmatpush1.xpose.msra.mxu0 0.0
    %2985 = vmatprep.subr.mxu0 0.0
    %2986 = vmatpush1.xpose.msra.mxu0 0.0
    %2987 = vmatprep.subr.mxu0 0.0
    %2988 = vmatpush1.xpose.msra.mxu0 0.0
    %2989 = vmatprep.subr.mxu0 0.0
    %2990 = vmatpush1.xpose.msra.mxu0 0.0
    %2991 = vmatprep.subr.mxu0 0.0
    %2992 = vmatpush1.xpose.msra.mxu0 0.0
    %2993 = vmatprep.subr.mxu0 0.0
    %2994 = vmatpush1.xpose.msra.mxu0 0.0
    %2995 = vmatprep.subr.mxu0 0.0
    %2996 = vmatpush1.xpose.msra.mxu0 0.0
    %2997 = vmatprep.subr.mxu0 0.0
    %2998 = vmatpush1.xpose.msra.mxu0 0.0
    %2999 = vmatprep.subr.mxu0 0.0
    %3000 = vmatpush1.xpose.msra.mxu0 0.0
    %3001 = vmatprep.subr.mxu0 0.0
    %3002 = vmatpush1.xpose.msra.mxu0 0.0
    %3003 = vmatprep.subr.mxu0 0.0
    %3004 = vmatpush1.xpose.msra.mxu0 0.0
    %3005 = vmatprep.subr.mxu0 0.0
    %3006 = vmatpush1.xpose.msra.mxu0 0.0
    %3007 = vmatprep.subr.mxu0 0.0
    %3008 = vmatpush1.xpose.msra.mxu0 0.0
    %3009 = vmatprep.subr.mxu0 0.0
    %3010 = vmatpush1.xpose.msra.mxu0 0.0
    %3011 = vmatprep.subr.mxu0 0.0
    %3012 = vmatpush1.xpose.msra.mxu0 0.0
    %3013 = vmatprep.subr.mxu0 0.0
    %3014 = vmatpush1.xpose.msra.mxu0 0.0
    %3015 = vmatprep.subr.mxu0 0.0
    %3016 = vmatpush1.xpose.msra.mxu0 0.0
    %3017 = vmatprep.subr.mxu0 0.0
    %3018 = vmatpush1.xpose.msra.mxu0 0.0
    %3019 = vmatprep.subr.mxu0 0.0
    %3020 = vmatpush1.xpose.msra.mxu0 0.0
    %3021 = vmatprep.subr.mxu0 0.0
    %3022 = vmatpush1.xpose.msra.mxu0 0.0
    %3023 = vmatprep.subr.mxu0 0.0
    %3024 = vmatpush1.xpose.msra.mxu0 0.0
    %3025 = vmatprep.subr.mxu0 0.0
    %3026 = vmatpush1.xpose.msra.mxu0 0.0
    %3027 = vmatprep.subr.mxu0 0.0
    %3028 = vmatpush1.xpose.msra.mxu0 0.0
    %3029 = vmatprep.subr.mxu0 0.0
    %3030 = vmatpush1.xpose.msra.mxu0 0.0
    %3031 = vmatprep.subr.mxu0 0.0
    %3032 = vmatpush1.xpose.msra.mxu0 0.0
    %3033 = vmatprep.mubr.f32.mxu0 0.0
    %3034 = vmatmul.mubr.f32.gmra.mrb[0].mxu0 %v2961
    %v3035 = vpop.f32.mrb[0].mxu0
    %v3036 = vadd.f32 0.0, %v3035
    %v3037 = vpop.f32.mrb[0].mxu0
    %3038 = vmatprep.mubr.f32.mxu0 0.0
    %3039 = vmatmul.mubr.f32.gmra.mrb[0].mxu0 %v2963
    %v3040 = vpop.f32.mrb[0].mxu0
    %v3041 = vadd.f32 0.0, %v3040
    %v3042 = vpop.f32.mrb[0].mxu0
    %3043 = vdwg.mxu0
    %v3044 = vmul.f32 %v3036, 0.35355338
    %v3045 = vmul.f32 %v3041, 0.35355338
    %v3046 = vadd.f32 %v3044, %v396
    %v3047 = vadd.f32 %v3045, %v397
    %v3048 = vsel %vm635, %v3046, -inf
    %3049 = vmax.xlane.f32.xlu0 %v3048
    %v3050 = vpop.xlane.xlu0 %3049
    %v3051 = vsel %vm639, %v3047, -inf
    %3052 = vmax.xlane.f32.xlu0 %v3051
    %v3053 = vpop.xlane.xlu0 %3052
    %v3054 = vsub.f32 %v3046, %v3050
    %v3055 = vsub.f32 %v3047, %v3053
    %v3056 = vmul.f32 %v3054, 1.442695
    %v3057 = vpow.pop %v3056
    %v3058 = vmul.f32 %v3055, 1.442695
    %v3059 = vpow.pop %v3058
    %v3060 = vsel %vm635, %v3057, 0.0
    %3061 = vadd.xlane.f32.xlu0 %v3060
    %v3062 = vpop.xlane.xlu0 %3061
    %v3063 = vsel %vm639, %v3059, 0.0
    %3064 = vadd.xlane.f32.xlu0 %v3063
    %v3065 = vpop.xlane.xlu0 %3064
    %v3066 = vrcp.pop %v3062
    %v3067 = vrcp.pop %v3065
    %v3068 = vmul.f32 %v3057, %v3066
    %v3069 = vmul.f32 %v3059, %v3067
    %3070 = vrot.lane.b32.xlu0 %v2082, 40
    %v3071 = vpop.permute.xlu0 %3070
    %3072 = vrot.lane.b32.xlu0 %v2087, 40
    %v3073 = vpop.permute.xlu0 %3072
    %v3076 = vsel %vm635, %v3068, 0
    %v3079 = vsel %vm635, %v3069, 0
    %v3081 = vsel %vm670, %v3073, 0
    %3083 = vmatprep.subr.mxu0 0.0
    %3084 = vmatpush1.msra.mxu0 %v3071
    %3085 = vmatprep.subr.mxu0 0.0
    %3086 = vmatpush1.msra.mxu0 %v3081
    %3087 = vmatprep.subr.mxu0 0.0
    %3088 = vmatpush1.msra.mxu0 0.0
    %3089 = vmatprep.subr.mxu0 0.0
    %3090 = vmatpush1.msra.mxu0 0.0
    %3091 = vmatprep.subr.mxu0 0.0
    %3092 = vmatpush1.msra.mxu0 0.0
    %3093 = vmatprep.subr.mxu0 0.0
    %3094 = vmatpush1.msra.mxu0 0.0
    %3095 = vmatprep.subr.mxu0 0.0
    %3096 = vmatpush1.msra.mxu0 0.0
    %3097 = vmatprep.subr.mxu0 0.0
    %3098 = vmatpush1.msra.mxu0 0.0
    %3099 = vmatprep.subr.mxu0 0.0
    %3100 = vmatpush1.msra.mxu0 0.0
    %3101 = vmatprep.subr.mxu0 0.0
    %3102 = vmatpush1.msra.mxu0 0.0
    %3103 = vmatprep.subr.mxu0 0.0
    %3104 = vmatpush1.msra.mxu0 0.0
    %3105 = vmatprep.subr.mxu0 0.0
    %3106 = vmatpush1.msra.mxu0 0.0
    %3107 = vmatprep.subr.mxu0 0.0
    %3108 = vmatpush1.msra.mxu0 0.0
    %3109 = vmatprep.subr.mxu0 0.0
    %3110 = vmatpush1.msra.mxu0 0.0
    %3111 = vmatprep.subr.mxu0 0.0
    %3112 = vmatpush1.msra.mxu0 0.0
    %3113 = vmatprep.subr.mxu0 0.0
    %3114 = vmatpush1.msra.mxu0 0.0
    %3115 = vmatprep.subr.mxu0 0.0
    %3116 = vmatpush1.msra.mxu0 0.0
    %3117 = vmatprep.subr.mxu0 0.0
    %3118 = vmatpush1.msra.mxu0 0.0
    %3119 = vmatprep.subr.mxu0 0.0
    %3120 = vmatpush1.msra.mxu0 0.0
    %3121 = vmatprep.subr.mxu0 0.0
    %3122 = vmatpush1.msra.mxu0 0.0
    %3123 = vmatprep.subr.mxu0 0.0
    %3124 = vmatpush1.msra.mxu0 0.0
    %3125 = vmatprep.subr.mxu0 0.0
    %3126 = vmatpush1.msra.mxu0 0.0
    %3127 = vmatprep.subr.mxu0 0.0
    %3128 = vmatpush1.msra.mxu0 0.0
    %3129 = vmatprep.subr.mxu0 0.0
    %3130 = vmatpush1.msra.mxu0 0.0
    %3131 = vmatprep.subr.mxu0 0.0
    %3132 = vmatpush1.msra.mxu0 0.0
    %3133 = vmatprep.subr.mxu0 0.0
    %3134 = vmatpush1.msra.mxu0 0.0
    %3135 = vmatprep.subr.mxu0 0.0
    %3136 = vmatpush1.msra.mxu0 0.0
    %3137 = vmatprep.subr.mxu0 0.0
    %3138 = vmatpush1.msra.mxu0 0.0
    %3139 = vmatprep.subr.mxu0 0.0
    %3140 = vmatpush1.msra.mxu0 0.0
    %3141 = vmatprep.subr.mxu0 0.0
    %3142 = vmatpush1.msra.mxu0 0.0
    %3143 = vmatprep.subr.mxu0 0.0
    %3144 = vmatpush1.msra.mxu0 0.0
    %3145 = vmatprep.subr.mxu0 0.0
    %3146 = vmatpush1.msra.mxu0 0.0
    %3147 = vmatprep.mubr.f32.mxu0 0.0
    %3148 = vmatmul.mubr.f32.gmra.mrb[0].mxu0 %v3076
    %v3149 = vpop.f32.mrb[0].mxu0
    %v3150 = vadd.f32 0.0, %v3149
    %v3151 = vpop.f32.mrb[0].mxu0
    %3152 = vmatprep.mubr.f32.mxu0 0.0
    %3153 = vmatmul.mubr.f32.gmra.mrb[0].mxu0 %v3079
    %v3154 = vpop.f32.mrb[0].mxu0
    %v3155 = vadd.f32 0.0, %v3154
    %v3156 = vpop.f32.mrb[0].mxu0
    %3157 = vdwg.mxu0
    %v3159 = vsel %vm547, %v3150, 0
    %v3162 = vsel %vm547, %v3155, 0
    %3164 = vmatprep.subr.mxu0 0.0
    %3165 = vmatpush1.msra.mxu0 %v2094
    %3166 = vmatprep.subr.mxu0 0.0
    %3167 = vmatpush1.msra.mxu0 0.0
    %3168 = vmatprep.subr.mxu0 0.0
    %3169 = vmatpush1.msra.mxu0 0.0
    %3170 = vmatprep.subr.mxu0 0.0
    %3171 = vmatpush1.msra.mxu0 0.0
    %3172 = vmatprep.subr.mxu0 0.0
    %3173 = vmatpush1.msra.mxu0 0.0
    %3174 = vmatprep.subr.mxu0 0.0
    %3175 = vmatpush1.msra.mxu0 0.0
    %3176 = vmatprep.subr.mxu0 0.0
    %3177 = vmatpush1.msra.mxu0 0.0
    %3178 = vmatprep.subr.mxu0 0.0
    %3179 = vmatpush1.msra.mxu0 0.0
    %3180 = vmatprep.subr.mxu0 0.0
    %3181 = vmatpush1.msra.mxu0 0.0
    %3182 = vmatprep.subr.mxu0 0.0
    %3183 = vmatpush1.msra.mxu0 0.0
    %3184 = vmatprep.subr.mxu0 0.0
    %3185 = vmatpush1.msra.mxu0 0.0
    %3186 = vmatprep.subr.mxu0 0.0
    %3187 = vmatpush1.msra.mxu0 0.0
    %3188 = vmatprep.subr.mxu0 0.0
    %3189 = vmatpush1.msra.mxu0 0.0
    %3190 = vmatprep.subr.mxu0 0.0
    %3191 = vmatpush1.msra.mxu0 0.0
    %3192 = vmatprep.subr.mxu0 0.0
    %3193 = vmatpush1.msra.mxu0 0.0
    %3194 = vmatprep.subr.mxu0 0.0
    %3195 = vmatpush1.msra.mxu0 0.0
    %3196 = vmatprep.subr.mxu0 0.0
    %3197 = vmatpush1.msra.mxu0 0.0
    %3198 = vmatprep.subr.mxu0 0.0
    %3199 = vmatpush1.msra.mxu0 0.0
    %3200 = vmatprep.subr.mxu0 0.0
    %3201 = vmatpush1.msra.mxu0 0.0
    %3202 = vmatprep.subr.mxu0 0.0
    %3203 = vmatpush1.msra.mxu0 0.0
    %3204 = vmatprep.subr.mxu0 0.0
    %3205 = vmatpush1.msra.mxu0 0.0
    %3206 = vmatprep.subr.mxu0 0.0
    %3207 = vmatpush1.msra.mxu0 0.0
    %3208 = vmatprep.subr.mxu0 0.0
    %3209 = vmatpush1.msra.mxu0 0.0
    %3210 = vmatprep.subr.mxu0 0.0
    %3211 = vmatpush1.msra.mxu0 0.0
    %3212 = vmatprep.subr.mxu0 0.0
    %3213 = vmatpush1.msra.mxu0 0.0
    %3214 = vmatprep.subr.mxu0 0.0
    %3215 = vmatpush1.msra.mxu0 0.0
    %3216 = vmatprep.subr.mxu0 0.0
    %3217 = vmatpush1.msra.mxu0 0.0
    %3218 = vmatprep.subr.mxu0 0.0
    %3219 = vmatpush1.msra.mxu0 0.0
    %3220 = vmatprep.subr.mxu0 0.0
    %3221 = vmatpush1.msra.mxu0 0.0
    %3222 = vmatprep.subr.mxu0 0.0
    %3223 = vmatpush1.msra.mxu0 0.0
    %3224 = vmatprep.subr.mxu0 0.0
    %3225 = vmatpush1.msra.mxu0 0.0
    %3226 = vmatprep.subr.mxu0 0.0
    %3227 = vmatpush1.msra.mxu0 0.0
    %3228 = vmatprep.mubr.f32.mxu0 0.0
    %3229 = vmatmul.mubr.f32.gmra.mrb[0].mxu0 %v3159
    %v3230 = vpop.f32.mrb[0].mxu0
    %v3231 = vadd.f32 0.0, %v3230
    %v3232 = vpop.f32.mrb[0].mxu0
    %3233 = vmatprep.mubr.f32.mxu0 0.0
    %3234 = vmatmul.mubr.f32.gmra.mrb[0].mxu0 %v3162
    %v3235 = vpop.f32.mrb[0].mxu0
    %v3236 = vadd.f32 0.0, %v3235
    %v3237 = vpop.f32.mrb[0].mxu0
    %3238 = vdwg.mxu0
    %v3239 = vadd.f32 %v2951, %v3231
    %v3240 = vadd.f32 %v2952, %v3236
    %v3241 = vadd.f32 %v1948, %v3239
    %v3242 = vadd.f32 %v1949, %v3240
    %s3243 = scalar_lea.vmem %s11, 1
    %v3244 = vld [vmem:[%s3243] sm:$0x1]
    %v3246 = vlaneseq
    %v3247 = vshrl.u32 %v3246, 7
    %v3248 = vsub.s32 0, %v3247
    %v3249 = vrot.slane %v3244, %v3248
    %v3251 = vadd.f32 %v3241, %v3249
    %v3252 = vadd.f32 %v3242, %v3249
    %s3253 = scalar_lea.vmem %s12, 1
    %v3254 = vld [vmem:[%s3253] sm:$0x1]
    %s3255 = scalar_lea.vmem %s13, 1
    %v3256 = vld [vmem:[%s3255] sm:$0x1]
    %v3257 = vsel %vm400, %v3251, 0.0
    %3258 = vadd.xlane.f32.xlu0 %v3257
    %v3259 = vpop.xlane.xlu0 %3258
    %v3260 = vsel %vm404, %v3252, 0.0
    %3261 = vadd.xlane.f32.xlu0 %v3260
    %v3262 = vpop.xlane.xlu0 %3261
    %v3263 = vmul.f32 %v3259, %v408
    %v3264 = vmul.f32 %v3262, %v408
    %v3265 = vsub.f32 %v3251, %v3263
    %v3266 = vsub.f32 %v3252, %v3264
    %v3267 = vmul.f32 %v3265, %v3265
    %v3268 = vmul.f32 %v3266, %v3266
    %v3269 = vsel %vm400, %v3267, 0.0
    %3270 = vadd.xlane.f32.xlu0 %v3269
    %v3271 = vpop.xlane.xlu0 %3270
    %v3272 = vsel %vm404, %v3268, 0.0
    %3273 = vadd.xlane.f32.xlu0 %v3272
    %v3274 = vpop.xlane.xlu0 %3273
    %v3275 = vmul.f32 %v3271, %v408
    %v3276 = vmul.f32 %v3274, %v408
    %v3277 = vadd.f32 %v3275, 1e-06
    %v3278 = vadd.f32 %v3276, 1e-06
    %v3279 = vrsqrt.pop %v3277
    %v3280 = vrsqrt.pop %v3278
    %v3281 = vmul.f32 %v3265, %v3279
    %v3282 = vmul.f32 %v3266, %v3280
    %v3284 = vlaneseq
    %v3285 = vshrl.u32 %v3284, 7
    %v3286 = vsub.s32 0, %v3285
    %v3287 = vrot.slane %v3254, %v3286
    %v3289 = vmul.f32 %v3281, %v3287
    %v3290 = vmul.f32 %v3282, %v3287
    %v3292 = vlaneseq
    %v3293 = vshrl.u32 %v3292, 7
    %v3294 = vsub.s32 0, %v3293
    %v3295 = vrot.slane %v3256, %v3294
    %v3297 = vadd.f32 %v3289, %v3295
    %v3298 = vadd.f32 %v3290, %v3295
    %s3299 = scalar_lea.vmem %s14, 32
    %v3300 = vld [vmem:[%s3299] sm:$0xff]
    %v3301 = vld [vmem:[%s3299 + $0x8] sm:$0xff]
    %v3302 = vld [vmem:[%s3299 + $0x10] sm:$0xff]
    %v3303 = vld [vmem:[%s3299 + $0x18] sm:$0xff]
    %s3304 = scalar_lea.vmem %s15, 1
    %v3305 = vld [vmem:[%s3304] sm:$0x1]
    %v3307 = vlaneseq
    %v3308 = vshrl.u32 %v3307, 7
    %v3309 = vsub.s32 0, %v3308
    %v3310 = vrot.slane %v3305, %v3309
    %v3313 = vsel %vm400, %v3297, 0
    %v3316 = vsel %vm400, %v3298, 0
    %3318 = vmatprep.subr.mxu0 0.0
    %3319 = vmatpush1.msra.mxu0 %v3300
    %3320 = vmatprep.subr.mxu0 0.0
    %3321 = vmatpush1.msra.mxu0 %v3301
    %3322 = vmatprep.subr.mxu0 0.0
    %3323 = vmatpush1.msra.mxu0 %v3302
    %3324 = vmatprep.subr.mxu0 0.0
    %3325 = vmatpush1.msra.mxu0 %v3303
    %3326 = vmatprep.subr.mxu0 0.0
    %3327 = vmatpush1.msra.mxu0 0.0
    %3328 = vmatprep.subr.mxu0 0.0
    %3329 = vmatpush1.msra.mxu0 0.0
    %3330 = vmatprep.subr.mxu0 0.0
    %3331 = vmatpush1.msra.mxu0 0.0
    %3332 = vmatprep.subr.mxu0 0.0
    %3333 = vmatpush1.msra.mxu0 0.0
    %3334 = vmatprep.subr.mxu0 0.0
    %3335 = vmatpush1.msra.mxu0 0.0
    %3336 = vmatprep.subr.mxu0 0.0
    %3337 = vmatpush1.msra.mxu0 0.0
    %3338 = vmatprep.subr.mxu0 0.0
    %3339 = vmatpush1.msra.mxu0 0.0
    %3340 = vmatprep.subr.mxu0 0.0
    %3341 = vmatpush1.msra.mxu0 0.0
    %3342 = vmatprep.subr.mxu0 0.0
    %3343 = vmatpush1.msra.mxu0 0.0
    %3344 = vmatprep.subr.mxu0 0.0
    %3345 = vmatpush1.msra.mxu0 0.0
    %3346 = vmatprep.subr.mxu0 0.0
    %3347 = vmatpush1.msra.mxu0 0.0
    %3348 = vmatprep.subr.mxu0 0.0
    %3349 = vmatpush1.msra.mxu0 0.0
    %3350 = vmatprep.subr.mxu0 0.0
    %3351 = vmatpush1.msra.mxu0 0.0
    %3352 = vmatprep.subr.mxu0 0.0
    %3353 = vmatpush1.msra.mxu0 0.0
    %3354 = vmatprep.subr.mxu0 0.0
    %3355 = vmatpush1.msra.mxu0 0.0
    %3356 = vmatprep.subr.mxu0 0.0
    %3357 = vmatpush1.msra.mxu0 0.0
    %3358 = vmatprep.subr.mxu0 0.0
    %3359 = vmatpush1.msra.mxu0 0.0
    %3360 = vmatprep.subr.mxu0 0.0
    %3361 = vmatpush1.msra.mxu0 0.0
    %3362 = vmatprep.subr.mxu0 0.0
    %3363 = vmatpush1.msra.mxu0 0.0
    %3364 = vmatprep.subr.mxu0 0.0
    %3365 = vmatpush1.msra.mxu0 0.0
    %3366 = vmatprep.subr.mxu0 0.0
    %3367 = vmatpush1.msra.mxu0 0.0
    %3368 = vmatprep.subr.mxu0 0.0
    %3369 = vmatpush1.msra.mxu0 0.0
    %3370 = vmatprep.subr.mxu0 0.0
    %3371 = vmatpush1.msra.mxu0 0.0
    %3372 = vmatprep.subr.mxu0 0.0
    %3373 = vmatpush1.msra.mxu0 0.0
    %3374 = vmatprep.subr.mxu0 0.0
    %3375 = vmatpush1.msra.mxu0 0.0
    %3376 = vmatprep.subr.mxu0 0.0
    %3377 = vmatpush1.msra.mxu0 0.0
    %3378 = vmatprep.subr.mxu0 0.0
    %3379 = vmatpush1.msra.mxu0 0.0
    %3380 = vmatprep.subr.mxu0 0.0
    %3381 = vmatpush1.msra.mxu0 0.0
    %3382 = vmatprep.mubr.f32.mxu0 0.0
    %3383 = vmatmul.mubr.f32.gmra.mrb[0].mxu0 %v3313
    %v3384 = vpop.f32.mrb[0].mxu0
    %v3385 = vadd.f32 %v3310, %v3384
    %v3386 = vpop.f32.mrb[0].mxu0
    %3387 = vmatprep.mubr.f32.mxu0 0.0
    %3388 = vmatmul.mubr.f32.gmra.mrb[0].mxu0 %v3316
    %v3389 = vpop.f32.mrb[0].mxu0
    %v3390 = vadd.f32 %v3310, %v3389
    %v3391 = vpop.f32.mrb[0].mxu0
    %3392 = vdwg.mxu0
    %v3393 = vmul.f32 %v3385, 0.5
    %v3394 = vmul.f32 %v3390, 0.5
    %v3395 = vmul.f32 %v3385, 0.70710677
    %v3396 = vmul.f32 %v3390, 0.70710677
    %v3397 = verf.f32.pop %v3395
    %v3398 = verf.f32.pop %v3396
    %v3399 = vadd.f32 %v3397, 1.0
    %v3400 = vadd.f32 %v3398, 1.0
    %v3401 = vmul.f32 %v3393, %v3399
    %v3402 = vmul.f32 %v3394, %v3400
    %s3403 = scalar_lea.vmem %s16, 128
    %v3404 = vld [vmem:[%s3403] sm:$0xff]
    %v3405 = vld [vmem:[%s3403 + $0x8] sm:$0xff]
    %v3406 = vld [vmem:[%s3403 + $0x10] sm:$0xff]
    %v3407 = vld [vmem:[%s3403 + $0x18] sm:$0xff]
    %v3408 = vld [vmem:[%s3403 + $0x20] sm:$0xff]
    %v3409 = vld [vmem:[%s3403 + $0x28] sm:$0xff]
    %v3410 = vld [vmem:[%s3403 + $0x30] sm:$0xff]
    %v3411 = vld [vmem:[%s3403 + $0x38] sm:$0xff]
    %v3412 = vld [vmem:[%s3403 + $0x40] sm:$0xff]
    %v3413 = vld [vmem:[%s3403 + $0x48] sm:$0xff]
    %v3414 = vld [vmem:[%s3403 + $0x50] sm:$0xff]
    %v3415 = vld [vmem:[%s3403 + $0x58] sm:$0xff]
    %v3416 = vld [vmem:[%s3403 + $0x60] sm:$0xff]
    %v3417 = vld [vmem:[%s3403 + $0x68] sm:$0xff]
    %v3418 = vld [vmem:[%s3403 + $0x70] sm:$0xff]
    %v3419 = vld [vmem:[%s3403 + $0x78] sm:$0xff]
    %3420 = vmatprep.subr.mxu0 0.0
    %3421 = vmatpush1.msra.mxu0 %v3404
    %3422 = vmatprep.subr.mxu0 0.0
    %3423 = vmatpush1.msra.mxu0 %v3405
    %3424 = vmatprep.subr.mxu0 0.0
    %3425 = vmatpush1.msra.mxu0 %v3406
    %3426 = vmatprep.subr.mxu0 0.0
    %3427 = vmatpush1.msra.mxu0 %v3407
    %3428 = vmatprep.subr.mxu0 0.0
    %3429 = vmatpush1.msra.mxu0 %v3408
    %3430 = vmatprep.subr.mxu0 0.0
    %3431 = vmatpush1.msra.mxu0 %v3409
    %3432 = vmatprep.subr.mxu0 0.0
    %3433 = vmatpush1.msra.mxu0 %v3410
    %3434 = vmatprep.subr.mxu0 0.0
    %3435 = vmatpush1.msra.mxu0 %v3411
    %3436 = vmatprep.subr.mxu0 0.0
    %3437 = vmatpush1.msra.mxu0 %v3412
    %3438 = vmatprep.subr.mxu0 0.0
    %3439 = vmatpush1.msra.mxu0 %v3413
    %3440 = vmatprep.subr.mxu0 0.0
    %3441 = vmatpush1.msra.mxu0 %v3414
    %3442 = vmatprep.subr.mxu0 0.0
    %3443 = vmatpush1.msra.mxu0 %v3415
    %3444 = vmatprep.subr.mxu0 0.0
    %3445 = vmatpush1.msra.mxu0 %v3416
    %3446 = vmatprep.subr.mxu0 0.0
    %3447 = vmatpush1.msra.mxu0 %v3417
    %3448 = vmatprep.subr.mxu0 0.0
    %3449 = vmatpush1.msra.mxu0 %v3418
    %3450 = vmatprep.subr.mxu0 0.0
    %3451 = vmatpush1.msra.mxu0 %v3419
    %3452 = vmatprep.subr.mxu0 0.0
    %3453 = vmatpush1.msra.mxu0 0.0
    %3454 = vmatprep.subr.mxu0 0.0
    %3455 = vmatpush1.msra.mxu0 0.0
    %3456 = vmatprep.subr.mxu0 0.0
    %3457 = vmatpush1.msra.mxu0 0.0
    %3458 = vmatprep.subr.mxu0 0.0
    %3459 = vmatpush1.msra.mxu0 0.0
    %3460 = vmatprep.subr.mxu0 0.0
    %3461 = vmatpush1.msra.mxu0 0.0
    %3462 = vmatprep.subr.mxu0 0.0
    %3463 = vmatpush1.msra.mxu0 0.0
    %3464 = vmatprep.subr.mxu0 0.0
    %3465 = vmatpush1.msra.mxu0 0.0
    %3466 = vmatprep.subr.mxu0 0.0
    %3467 = vmatpush1.msra.mxu0 0.0
    %3468 = vmatprep.subr.mxu0 0.0
    %3469 = vmatpush1.msra.mxu0 0.0
    %3470 = vmatprep.subr.mxu0 0.0
    %3471 = vmatpush1.msra.mxu0 0.0
    %3472 = vmatprep.subr.mxu0 0.0
    %3473 = vmatpush1.msra.mxu0 0.0
    %3474 = vmatprep.subr.mxu0 0.0
    %3475 = vmatpush1.msra.mxu0 0.0
    %3476 = vmatprep.subr.mxu0 0.0
    %3477 = vmatpush1.msra.mxu0 0.0
    %3478 = vmatprep.subr.mxu0 0.0
    %3479 = vmatpush1.msra.mxu0 0.0
    %3480 = vmatprep.subr.mxu0 0.0
    %3481 = vmatpush1.msra.mxu0 0.0
    %3482 = vmatprep.subr.mxu0 0.0
    %3483 = vmatpush1.msra.mxu0 0.0
    %3484 = vmatprep.mubr.f32.mxu0 0.0
    %3485 = vmatmul.mubr.f32.gmra.mrb[0].mxu0 %v3401
    %v3486 = vpop.f32.mrb[0].mxu0
    %v3487 = vadd.f32 0.0, %v3486
    %v3488 = vpop.f32.mrb[0].mxu0
    %3489 = vmatprep.mubr.f32.mxu0 0.0
    %3490 = vmatmul.mubr.f32.gmra.mrb[0].mxu0 %v3402
    %v3491 = vpop.f32.mrb[0].mxu0
    %v3492 = vpop.f32.mrb[0].mxu0
    %3493 = vdwg.mxu0
    %v3494 = vadd.f32 %v3251, %v3487
    %s3495 = scalar_lea.vmem %s17, 1
    %v3496 = vld [vmem:[%s3495] sm:$0x1]
    %v3498 = vlaneseq
    %v3499 = vshrl.u32 %v3498, 7
    %v3500 = vsub.s32 0, %v3499
    %v3501 = vrot.slane %v3496, %v3500
    %v3503 = vadd.f32 %v3494, %v3501
    %v3504 = vld [vmem:[%s18] sm:$0x1]
    %v3505 = vld [vmem:[%s19] sm:$0x1]
    %v3506 = vsel %vm400, %v3503, 0.0
    %3507 = vadd.xlane.f32.xlu0 %v3506
    %v3508 = vpop.xlane.xlu0 %3507
    %v3509 = vmul.f32 %v3508, %v408
    %v3510 = vsub.f32 %v3503, %v3509
    %v3511 = vmul.f32 %v3510, %v3510
    %v3512 = vsel %vm400, %v3511, 0.0
    %3513 = vadd.xlane.f32.xlu0 %v3512
    %v3514 = vpop.xlane.xlu0 %3513
    %v3515 = vmul.f32 %v3514, %v408
    %v3516 = vadd.f32 %v3515, 1e-06
    %v3517 = vrsqrt.pop %v3516
    %v3518 = vmul.f32 %v3510, %v3517
    %v3520 = vlaneseq
    %v3521 = vshrl.u32 %v3520, 7
    %v3522 = vsub.s32 0, %v3521
    %v3523 = vrot.slane %v3504, %v3522
    %v3525 = vmul.f32 %v3518, %v3523
    %v3527 = vlaneseq
    %v3528 = vshrl.u32 %v3527, 7
    %v3529 = vsub.s32 0, %v3528
    %v3530 = vrot.slane %v3505, %v3529
    %v3532 = vadd.f32 %v3525, %v3530
    %v3533 = vld [vmem:[%s20] sm:$0x1]
    %v3534 = vld [vmem:[#allocation3] sm:$0x1]
    %3535 = vst.msk [vmem:[#allocation4] sm:$0x1] %vm382, %v3532
    %v3536 = vmul.f32 %v3532, %v3533
    %v3537 = vsel %vm382, %v3536, 0.0
    %3538 = vadd.xlane.f32.xlu0 %v3537
    %v3539 = vpop.xlane.xlu0 %3538
    %v3540 = vadd.f32 %v3539, %v3534
    %vm3541 = vcmask 0
    %3542 = vst.msk [vmem:[%s23] sm:$0x1] %vm3541, %v3540
    %vm3543 = vcmask 259077
    %3544 = vst.msk [vmem:[#allocation4 - $0x4] sm:$0x20] %vm3543, %v3532
    %v3546 = vlaneseq
    %v3547 = vshrl.u32 %v3546, 7
    %v3548 = vsub.s32 0, %v3547
    %v3549 = vrot.slane %v3533, %v3548
    %v3551 = vmul.f32 %v3532, %v3549
    %v3552 = vsel %vm3543, %v3551, 0.0
    %3553 = vadd.xlane.f32.xlu0 %v3552
    %v3554 = vpop.xlane.xlu0 %3553
    %v3556 = vlaneseq
    %v3557 = vshrl.u32 %v3556, 7
    %v3558 = vsub.s32 0, %v3557
    %v3559 = vrot.slane %v3534, %v3558
    %v3561 = vadd.f32 %v3554, %v3559
    %vm3562 = vcmask 5125
    %3563 = vst.msk [vmem:[%s23 - $0x4] sm:$0x20] %vm3562, %v3561
    // Predicated region
    $region90: #{dino_forward.1} parent=1 // pred_check
      _
    $region91: #{dino_forward.1} parent=1 // pred_check_branch
      %3565 = sbr.rel (0) target = $region93
    $region92: #{dino_forward.1} parent=1 // pred_region
      %s3567 = ssub.s32 32, 32
      %3568 = vsyncadd [#allocation5], %s3567
      %s3570 = sshll.u32 [#allocation4], 4
      %s3571 = int_to_ptr.vmem [resolvable:$true] %s3570
      %3573 = dma.vmem_to_hbm [thread:$0]  %s3571, 32, %s22, [#allocation5]
    $region93: #{dino_forward.1} parent=1 // pred_fallthru
      _
    // Predicated region
    $region94: #{dino_forward.1} parent=1 // pred_check
      _
    $region95: #{dino_forward.1} parent=1 // pred_check_branch
      %3575 = sbr.rel (0) target = $region97
    $region96: #{dino_forward.1} parent=1 // pred_region
      _
    $region97: #{dino_forward.1} parent=1 // pred_fallthru
      _
    // Predicated region
    $region98: #{dino_forward.1} parent=1 // pred_check
      _
    $region99: #{dino_forward.1} parent=1 // pred_check_branch
      %3577 = sbr.rel (0) target = $region101
    $region100: #{dino_forward.1} parent=1 // pred_region
      %3578 = dma.done [#allocation5], 32
    $region101: #{dino_forward.1} parent=1 // pred_fallthru
      _
    // Predicated region
    $region102: #{dino_forward.1} parent=1 // pred_check
      _
    $region103: #{dino_forward.1} parent=1 // pred_check_branch
      %3580 = sbr.rel (0) target = $region105
    $region104: #{dino_forward.1} parent=1 // pred_region
      _
    $region105: #{dino_forward.1} parent=1 // pred_fallthru
      _
    %3581 = vsyncpa [#allocation5], 1

</llo_original>
